<compile_context>
chip_gen: v6e
topology: v6e:2x2x1
jax: 0.10.0
libtpu: 0.0.40
codegen_flags: <defaults>
</compile_context>

<pallas_src>
import jax
import jax.numpy as jnp
from jax import lax
from jax.experimental import pallas as pl
from jax.experimental.pallas import tpu as pltpu


def rnn_model_kernel(tok_ref,      # SMEM  (T*B,)  int32  scalar-prefetched token ids (time-major)
                     whh_ref,      # VMEM  (H, H)  bf16   W_hh^T
                     bout_ref,     # VMEM  (1, Vp) f32    b_out (zero-padded)
                     table_hbm,    # HBM   (V, H)  f32    emb @ W_ih^T + b_ih + b_hh
                     wout_hbm,     # HBM   (H, Vp) bf16   W_out^T (zero-padded)
                     out_ref,      # VMEM  (B, Vp) f32
                     x_scratch,    # VMEM  (T*B, H) f32   gathered per-step input projections
                     wout_vmem,    # VMEM  (H, Vp) bf16   W_out^T landing buffer
                     gsem,         # DMA sems (T*B,)
                     wsem):        # DMA sem  (1,)
    TB, H = x_scratch.shape
    B = out_ref.shape[0]
    T = TB // B

    # ---- issue all DMAs up front (all SMEM token reads happen before any wait) ----
    gathers = []
    for i in range(TB):                                   # T*B tiny row gathers
        v = tok_ref[i]                                    # scalar-unit SMEM read
        cp = pltpu.make_async_copy(table_hbm.at[pl.ds(v, 1), :],
                                   x_scratch.at[pl.ds(i, 1), :],
                                   gsem.at[i])
        cp.start()
        gathers.append(cp)

    # W_out^T fetch overlaps the serial recurrence; waited on just before the final dot.
    wcp = pltpu.make_async_copy(wout_hbm, wout_vmem, wsem.at[0])
    wcp.start()

    for cp in gathers:
        cp.wait()

    # ---- serial recurrence: the only true dependence chain ----
    whh = whh_ref[...]                                    # bf16 (H, H)
    h = jnp.zeros((B, H), jnp.float32)
    for t in range(T):                                    # T static -> full unroll
        x_t = x_scratch[pl.ds(t * B, B), :]               # static, sublane-aligned slice
        hh = jnp.dot(h.astype(jnp.bfloat16), whh,
                     preferred_element_type=jnp.float32)
        h = jnp.tanh(x_t + hh)                            # add/tanh stay f32 (v5e-safe)

    # ---- output projection on the last hidden state (lane-dense, padded V) ----
    wcp.wait()
    out_ref[...] = (jnp.dot(h.astype(jnp.bfloat16), wout_vmem[...],
                            preferred_element_type=jnp.float32)
                    + bout_ref[...])


def rnn_model_forward(tokens, params):
    B, T = tokens.shape
    emb, wih_t, whh_t = params["emb"], params["wih_t"], params["whh_t"]
    bias, wout_t, bout = params["bias"], params["wout_t"], params["bout"]
    V, H = emb.shape

    # Weight preprocessing (off the kernel's serial path):
    #   table[v] = emb[v] @ W_ih^T + b_ih + b_hh     (gathered per token inside the kernel)
    table = (emb @ wih_t + bias).astype(jnp.float32)              # (V, H)
    whh_bf = whh_t.astype(jnp.bfloat16)                           # (H, H) bf16 MXU operand

    # Lane-dense padding of the vocab axis to a multiple of 128 lanes.
    Vp = max(128, ((V + 127) // 128) * 128)
    wout_p = jnp.zeros((H, Vp), jnp.bfloat16).at[:, :V].set(wout_t.astype(jnp.bfloat16))
    bout_p = jnp.zeros((1, Vp), jnp.float32).at[:, :V].set(bout)

    # Time-major ids, flattened for SMEM scalar prefetch; clamp (nn.Embedding would raise).
    tok_tm = jnp.clip(tokens.T.reshape(T * B), 0, V - 1).astype(jnp.int32)

    grid_spec = pltpu.PrefetchScalarGridSpec(
        num_scalar_prefetch=1,
        grid=(1,),
        in_specs=[
            pl.BlockSpec((H, H), lambda i, tok: (0, 0)),    # W_hh^T (small, VMEM resident)
            pl.BlockSpec((1, Vp), lambda i, tok: (0, 0)),   # b_out
            pl.BlockSpec(memory_space=pl.ANY),              # folded table (HBM, gathered)
            pl.BlockSpec(memory_space=pl.ANY),              # W_out^T (HBM, overlapped DMA)
        ],
        out_specs=pl.BlockSpec((B, Vp), lambda i, tok: (0, 0)),
        scratch_shapes=[
            pltpu.VMEM((T * B, H), jnp.float32),            # gathered input projections
            pltpu.VMEM((H, Vp), jnp.bfloat16),              # W_out^T landing buffer
            pltpu.SemaphoreType.DMA((T * B,)),              # per-row gather sems
            pltpu.SemaphoreType.DMA((1,)),                  # W_out DMA sem
        ],
    )

    out_p = pl.pallas_call(
        rnn_model_kernel,
        out_shape=jax.ShapeDtypeStruct((B, Vp), jnp.float32),
        grid_spec=grid_spec,
        compiler_params=pltpu.CompilerParams(
            dimension_semantics=("arbitrary",)),
    )(tok_tm, whh_bf, bout_p, table, wout_p)

    return out_p[:, :V]


def make_params(key, vocab_size, hidden_size):
    # deterministic synthetic init (PyTorch-style: N(0,1) embedding,
    # U(-1/sqrt(H), 1/sqrt(H)) for RNN / Linear weights & biases)
    ks = jax.random.split(key, 7)
    s = 1.0 / jnp.sqrt(hidden_size)
    emb   = jax.random.normal(ks[0], (vocab_size, hidden_size), jnp.float32)
    w_ih  = jax.random.uniform(ks[1], (hidden_size, hidden_size), jnp.float32, -s, s)
    w_hh  = jax.random.uniform(ks[2], (hidden_size, hidden_size), jnp.float32, -s, s)
    b_ih  = jax.random.uniform(ks[3], (hidden_size,), jnp.float32, -s, s)
    b_hh  = jax.random.uniform(ks[4], (hidden_size,), jnp.float32, -s, s)
    w_out = jax.random.uniform(ks[5], (vocab_size, hidden_size), jnp.float32, -s, s)
    b_out = jax.random.uniform(ks[6], (vocab_size,), jnp.float32, -s, s)
    return {
        "emb": emb,
        "wih_t": w_ih.T,                       # (H, H)
        "whh_t": w_hh.T,                       # (H, H)
        "bias": (b_ih + b_hh)[None, :],        # (1, H)
        "wout_t": w_out.T,                     # (H, V)
        "bout": b_out[None, :],                # (1, V)
    }


def reference_forward(tokens, params):
    # pure-JAX f32 reference of the PyTorch forward pass
    x = params["emb"][tokens]                  # (B, T, H)
    B, T, H = x.shape

    def cell(h, x_t):
        h_new = jnp.tanh(x_t @ params["wih_t"] + h @ params["whh_t"] + params["bias"])
        return h_new, None

    h0 = jnp.zeros((B, H), jnp.float32)
    h_last, _ = lax.scan(cell, h0, jnp.swapaxes(x, 0, 1))
    return h_last @ params["wout_t"] + params["bout"]


if __name__ == "__main__":
    B, T = 8, 8                 # batch, sequence length
    vocab_size = 16             # synthetic small vocab (module derives it from text)
    hidden_size = 128

    key = jax.random.PRNGKey(0)
    k_tok, k_par = jax.random.split(key)
    tokens = jax.random.randint(k_tok, (B, T), 0, vocab_size, dtype=jnp.int32)
    params = make_params(k_par, vocab_size, hidden_size)

    out = rnn_model_forward(tokens, params)
    out = jax.block_until_ready(out)

    ref = reference_forward(tokens, params)
    assert out.shape == (B, vocab_size)
    # bf16 MXU operands (W_hh^T, W_out^T, h) with f32 accumulate -> loosen vs the f32 1e-3 check
    assert jnp.allclose(out, ref, atol=3e-2, rtol=3e-2), "mismatch vs reference"
    print("KERNEL_OK")
</pallas_src>

<mosaic_0001>
module attributes {stable_mosaic.version = 11 : i64} {
  func.func @rnn_model_kernel(%arg0: i32, %arg1: memref<64xi32, #tpu.memory_space<smem>>, %arg2: memref<128x128xbf16, #tpu.memory_space<vmem>>, %arg3: memref<1x128xf32, #tpu.memory_space<vmem>>, %arg4: memref<16x128xf32, #tpu.memory_space<any>>, %arg5: memref<128x128xbf16, #tpu.memory_space<any>>, %arg6: memref<8x128xf32, #tpu.memory_space<vmem>>, %arg7: memref<64x128xf32, #tpu.memory_space<vmem>>, %arg8: memref<128x128xbf16, #tpu.memory_space<vmem>>, %arg9: memref<64x!tpu.dma_semaphore, #tpu.memory_space<semaphore_mem>>, %arg10: memref<1x!tpu.dma_semaphore, #tpu.memory_space<semaphore_mem>>) attributes {dimension_semantics = [#tpu.dimension_semantics<arbitrary>], iteration_bounds = array<i64: 1>, scalar_prefetch = 1 : i64, scratch_operands = 4 : i64, tpu.core_type = #tpu.core_type<tc>, window_params = [{pipeline_mode = #tpu.pipeline_mode<synchronous>, transform_indices = @transform_0, window_bounds = array<i64: 128, 128>}, {pipeline_mode = #tpu.pipeline_mode<synchronous>, transform_indices = @transform_1, window_bounds = array<i64: 1, 128>}, {}, {}, {pipeline_mode = #tpu.pipeline_mode<synchronous>, transform_indices = @transform_4, window_bounds = array<i64: 8, 128>}]} {
    %c0 = arith.constant 0 : index
    %0 = memref.load %arg1[%c0] : memref<64xi32, #tpu.memory_space<smem>>
    %c0_i32 = arith.constant 0 : i32
    %c0_i32_0 = arith.constant 0 : i32
    %1 = tpu.memref_slice %arg4[%0, %c0_i32_0] : memref<16x128xf32, #tpu.memory_space<any>> -> memref<1x128xf32, #tpu.memory_space<any>>
    %c0_i32_1 = arith.constant 0 : i32
    %c0_i32_2 = arith.constant 0 : i32
    %2 = tpu.memref_slice %arg7[%c0_i32_1, %c0_i32_2] : memref<64x128xf32, #tpu.memory_space<vmem>> -> memref<1x128xf32, #tpu.memory_space<vmem>>
    %3 = tpu.memref_slice %arg9[%c0_i32] : memref<64x!tpu.dma_semaphore, #tpu.memory_space<semaphore_mem>> -> memref<1x!tpu.dma_semaphore, #tpu.memory_space<semaphore_mem>>
    %4 = tpu.memref_squeeze %3 : memref<1x!tpu.dma_semaphore, #tpu.memory_space<semaphore_mem>> -> memref<!tpu.dma_semaphore, #tpu.memory_space<semaphore_mem>>
    tpu.enqueue_dma source(%1 : memref<1x128xf32, #tpu.memory_space<any>>) target(%2 : memref<1x128xf32, #tpu.memory_space<vmem>>) target_semaphore(%4 : memref<!tpu.dma_semaphore, #tpu.memory_space<semaphore_mem>>)
    %c1 = arith.constant 1 : index
    %5 = memref.load %arg1[%c1] : memref<64xi32, #tpu.memory_space<smem>>
    %c1_i32 = arith.constant 1 : i32
    %c0_i32_3 = arith.constant 0 : i32
    %6 = tpu.memref_slice %arg4[%5, %c0_i32_3] : memref<16x128xf32, #tpu.memory_space<any>> -> memref<1x128xf32, #tpu.memory_space<any>>
    %c1_i32_4 = arith.constant 1 : i32
    %c0_i32_5 = arith.constant 0 : i32
    %7 = tpu.memref_slice %arg7[%c1_i32_4, %c0_i32_5] : memref<64x128xf32, #tpu.memory_space<vmem>> -> memref<1x128xf32, #tpu.memory_space<vmem>>
    %8 = tpu.memref_slice %arg9[%c1_i32] : memref<64x!tpu.dma_semaphore, #tpu.memory_space<semaphore_mem>> -> memref<1x!tpu.dma_semaphore, #tpu.memory_space<semaphore_mem>>
    %9 = tpu.memref_squeeze %8 : memref<1x!tpu.dma_semaphore, #tpu.memory_space<semaphore_mem>> -> memref<!tpu.dma_semaphore, #tpu.memory_space<semaphore_mem>>
    tpu.enqueue_dma source(%6 : memref<1x128xf32, #tpu.memory_space<any>>) target(%7 : memref<1x128xf32, #tpu.memory_space<vmem>>) target_semaphore(%9 : memref<!tpu.dma_semaphore, #tpu.memory_space<semaphore_mem>>)
    %c2 = arith.constant 2 : index
    %10 = memref.load %arg1[%c2] : memref<64xi32, #tpu.memory_space<smem>>
    %c2_i32 = arith.constant 2 : i32
    %c0_i32_6 = arith.constant 0 : i32
    %11 = tpu.memref_slice %arg4[%10, %c0_i32_6] : memref<16x128xf32, #tpu.memory_space<any>> -> memref<1x128xf32, #tpu.memory_space<any>>
    %c2_i32_7 = arith.constant 2 : i32
    %c0_i32_8 = arith.constant 0 : i32
    %12 = tpu.memref_slice %arg7[%c2_i32_7, %c0_i32_8] : memref<64x128xf32, #tpu.memory_space<vmem>> -> memref<1x128xf32, #tpu.memory_space<vmem>>
    %13 = tpu.memref_slice %arg9[%c2_i32] : memref<64x!tpu.dma_semaphore, #tpu.memory_space<semaphore_mem>> -> memref<1x!tpu.dma_semaphore, #tpu.memory_space<semaphore_mem>>
    %14 = tpu.memref_squeeze %13 : memref<1x!tpu.dma_semaphore, #tpu.memory_space<semaphore_mem>> -> memref<!tpu.dma_semaphore, #tpu.memory_space<semaphore_mem>>
    tpu.enqueue_dma source(%11 : memref<1x128xf32, #tpu.memory_space<any>>) target(%12 : memref<1x128xf32, #tpu.memory_space<vmem>>) target_semaphore(%14 : memref<!tpu.dma_semaphore, #tpu.memory_space<semaphore_mem>>)
    %c3 = arith.constant 3 : index
    %15 = memref.load %arg1[%c3] : memref<64xi32, #tpu.memory_space<smem>>
    %c3_i32 = arith.constant 3 : i32
    %c0_i32_9 = arith.constant 0 : i32
    %16 = tpu.memref_slice %arg4[%15, %c0_i32_9] : memref<16x128xf32, #tpu.memory_space<any>> -> memref<1x128xf32, #tpu.memory_space<any>>
    %c3_i32_10 = arith.constant 3 : i32
    %c0_i32_11 = arith.constant 0 : i32
    %17 = tpu.memref_slice %arg7[%c3_i32_10, %c0_i32_11] : memref<64x128xf32, #tpu.memory_space<vmem>> -> memref<1x128xf32, #tpu.memory_space<vmem>>
    %18 = tpu.memref_slice %arg9[%c3_i32] : memref<64x!tpu.dma_semaphore, #tpu.memory_space<semaphore_mem>> -> memref<1x!tpu.dma_semaphore, #tpu.memory_space<semaphore_mem>>
    %19 = tpu.memref_squeeze %18 : memref<1x!tpu.dma_semaphore, #tpu.memory_space<semaphore_mem>> -> memref<!tpu.dma_semaphore, #tpu.memory_space<semaphore_mem>>
    tpu.enqueue_dma source(%16 : memref<1x128xf32, #tpu.memory_space<any>>) target(%17 : memref<1x128xf32, #tpu.memory_space<vmem>>) target_semaphore(%19 : memref<!tpu.dma_semaphore, #tpu.memory_space<semaphore_mem>>)
    %c4 = arith.constant 4 : index
    %20 = memref.load %arg1[%c4] : memref<64xi32, #tpu.memory_space<smem>>
    %c4_i32 = arith.constant 4 : i32
    %c0_i32_12 = arith.constant 0 : i32
    %21 = tpu.memref_slice %arg4[%20, %c0_i32_12] : memref<16x128xf32, #tpu.memory_space<any>> -> memref<1x128xf32, #tpu.memory_space<any>>
    %c4_i32_13 = arith.constant 4 : i32
    %c0_i32_14 = arith.constant 0 : i32
    %22 = tpu.memref_slice %arg7[%c4_i32_13, %c0_i32_14] : memref<64x128xf32, #tpu.memory_space<vmem>> -> memref<1x128xf32, #tpu.memory_space<vmem>>
    %23 = tpu.memref_slice %arg9[%c4_i32] : memref<64x!tpu.dma_semaphore, #tpu.memory_space<semaphore_mem>> -> memref<1x!tpu.dma_semaphore, #tpu.memory_space<semaphore_mem>>
    %24 = tpu.memref_squeeze %23 : memref<1x!tpu.dma_semaphore, #tpu.memory_space<semaphore_mem>> -> memref<!tpu.dma_semaphore, #tpu.memory_space<semaphore_mem>>
    tpu.enqueue_dma source(%21 : memref<1x128xf32, #tpu.memory_space<any>>) target(%22 : memref<1x128xf32, #tpu.memory_space<vmem>>) target_semaphore(%24 : memref<!tpu.dma_semaphore, #tpu.memory_space<semaphore_mem>>)
    %c5 = arith.constant 5 : index
    %25 = memref.load %arg1[%c5] : memref<64xi32, #tpu.memory_space<smem>>
    %c5_i32 = arith.constant 5 : i32
    %c0_i32_15 = arith.constant 0 : i32
    %26 = tpu.memref_slice %arg4[%25, %c0_i32_15] : memref<16x128xf32, #tpu.memory_space<any>> -> memref<1x128xf32, #tpu.memory_space<any>>
    %c5_i32_16 = arith.constant 5 : i32
    %c0_i32_17 = arith.constant 0 : i32
    %27 = tpu.memref_slice %arg7[%c5_i32_16, %c0_i32_17] : memref<64x128xf32, #tpu.memory_space<vmem>> -> memref<1x128xf32, #tpu.memory_space<vmem>>
    %28 = tpu.memref_slice %arg9[%c5_i32] : memref<64x!tpu.dma_semaphore, #tpu.memory_space<semaphore_mem>> -> memref<1x!tpu.dma_semaphore, #tpu.memory_space<semaphore_mem>>
    %29 = tpu.memref_squeeze %28 : memref<1x!tpu.dma_semaphore, #tpu.memory_space<semaphore_mem>> -> memref<!tpu.dma_semaphore, #tpu.memory_space<semaphore_mem>>
    tpu.enqueue_dma source(%26 : memref<1x128xf32, #tpu.memory_space<any>>) target(%27 : memref<1x128xf32, #tpu.memory_space<vmem>>) target_semaphore(%29 : memref<!tpu.dma_semaphore, #tpu.memory_space<semaphore_mem>>)
    %c6 = arith.constant 6 : index
    %30 = memref.load %arg1[%c6] : memref<64xi32, #tpu.memory_space<smem>>
    %c6_i32 = arith.constant 6 : i32
    %c0_i32_18 = arith.constant 0 : i32
    %31 = tpu.memref_slice %arg4[%30, %c0_i32_18] : memref<16x128xf32, #tpu.memory_space<any>> -> memref<1x128xf32, #tpu.memory_space<any>>
    %c6_i32_19 = arith.constant 6 : i32
    %c0_i32_20 = arith.constant 0 : i32
    %32 = tpu.memref_slice %arg7[%c6_i32_19, %c0_i32_20] : memref<64x128xf32, #tpu.memory_space<vmem>> -> memref<1x128xf32, #tpu.memory_space<vmem>>
    %33 = tpu.memref_slice %arg9[%c6_i32] : memref<64x!tpu.dma_semaphore, #tpu.memory_space<semaphore_mem>> -> memref<1x!tpu.dma_semaphore, #tpu.memory_space<semaphore_mem>>
    %34 = tpu.memref_squeeze %33 : memref<1x!tpu.dma_semaphore, #tpu.memory_space<semaphore_mem>> -> memref<!tpu.dma_semaphore, #tpu.memory_space<semaphore_mem>>
    tpu.enqueue_dma source(%31 : memref<1x128xf32, #tpu.memory_space<any>>) target(%32 : memref<1x128xf32, #tpu.memory_space<vmem>>) target_semaphore(%34 : memref<!tpu.dma_semaphore, #tpu.memory_space<semaphore_mem>>)
    %c7 = arith.constant 7 : index
    %35 = memref.load %arg1[%c7] : memref<64xi32, #tpu.memory_space<smem>>
    %c7_i32 = arith.constant 7 : i32
    %c0_i32_21 = arith.constant 0 : i32
    %36 = tpu.memref_slice %arg4[%35, %c0_i32_21] : memref<16x128xf32, #tpu.memory_space<any>> -> memref<1x128xf32, #tpu.memory_space<any>>
    %c7_i32_22 = arith.constant 7 : i32
    %c0_i32_23 = arith.constant 0 : i32
    %37 = tpu.memref_slice %arg7[%c7_i32_22, %c0_i32_23] : memref<64x128xf32, #tpu.memory_space<vmem>> -> memref<1x128xf32, #tpu.memory_space<vmem>>
    %38 = tpu.memref_slice %arg9[%c7_i32] : memref<64x!tpu.dma_semaphore, #tpu.memory_space<semaphore_mem>> -> memref<1x!tpu.dma_semaphore, #tpu.memory_space<semaphore_mem>>
    %39 = tpu.memref_squeeze %38 : memref<1x!tpu.dma_semaphore, #tpu.memory_space<semaphore_mem>> -> memref<!tpu.dma_semaphore, #tpu.memory_space<semaphore_mem>>
    tpu.enqueue_dma source(%36 : memref<1x128xf32, #tpu.memory_space<any>>) target(%37 : memref<1x128xf32, #tpu.memory_space<vmem>>) target_semaphore(%39 : memref<!tpu.dma_semaphore, #tpu.memory_space<semaphore_mem>>)
    %c8 = arith.constant 8 : index
    %40 = memref.load %arg1[%c8] : memref<64xi32, #tpu.memory_space<smem>>
    %c8_i32 = arith.constant 8 : i32
    %c0_i32_24 = arith.constant 0 : i32
    %41 = tpu.memref_slice %arg4[%40, %c0_i32_24] : memref<16x128xf32, #tpu.memory_space<any>> -> memref<1x128xf32, #tpu.memory_space<any>>
    %c8_i32_25 = arith.constant 8 : i32
    %c0_i32_26 = arith.constant 0 : i32
    %42 = tpu.memref_slice %arg7[%c8_i32_25, %c0_i32_26] : memref<64x128xf32, #tpu.memory_space<vmem>> -> memref<1x128xf32, #tpu.memory_space<vmem>>
    %43 = tpu.memref_slice %arg9[%c8_i32] : memref<64x!tpu.dma_semaphore, #tpu.memory_space<semaphore_mem>> -> memref<1x!tpu.dma_semaphore, #tpu.memory_space<semaphore_mem>>
    %44 = tpu.memref_squeeze %43 : memref<1x!tpu.dma_semaphore, #tpu.memory_space<semaphore_mem>> -> memref<!tpu.dma_semaphore, #tpu.memory_space<semaphore_mem>>
    tpu.enqueue_dma source(%41 : memref<1x128xf32, #tpu.memory_space<any>>) target(%42 : memref<1x128xf32, #tpu.memory_space<vmem>>) target_semaphore(%44 : memref<!tpu.dma_semaphore, #tpu.memory_space<semaphore_mem>>)
    %c9 = arith.constant 9 : index
    %45 = memref.load %arg1[%c9] : memref<64xi32, #tpu.memory_space<smem>>
    %c9_i32 = arith.constant 9 : i32
    %c0_i32_27 = arith.constant 0 : i32
    %46 = tpu.memref_slice %arg4[%45, %c0_i32_27] : memref<16x128xf32, #tpu.memory_space<any>> -> memref<1x128xf32, #tpu.memory_space<any>>
    %c9_i32_28 = arith.constant 9 : i32
    %c0_i32_29 = arith.constant 0 : i32
    %47 = tpu.memref_slice %arg7[%c9_i32_28, %c0_i32_29] : memref<64x128xf32, #tpu.memory_space<vmem>> -> memref<1x128xf32, #tpu.memory_space<vmem>>
    %48 = tpu.memref_slice %arg9[%c9_i32] : memref<64x!tpu.dma_semaphore, #tpu.memory_space<semaphore_mem>> -> memref<1x!tpu.dma_semaphore, #tpu.memory_space<semaphore_mem>>
    %49 = tpu.memref_squeeze %48 : memref<1x!tpu.dma_semaphore, #tpu.memory_space<semaphore_mem>> -> memref<!tpu.dma_semaphore, #tpu.memory_space<semaphore_mem>>
    tpu.enqueue_dma source(%46 : memref<1x128xf32, #tpu.memory_space<any>>) target(%47 : memref<1x128xf32, #tpu.memory_space<vmem>>) target_semaphore(%49 : memref<!tpu.dma_semaphore, #tpu.memory_space<semaphore_mem>>)
    %c10 = arith.constant 10 : index
    %50 = memref.load %arg1[%c10] : memref<64xi32, #tpu.memory_space<smem>>
    %c10_i32 = arith.constant 10 : i32
    %c0_i32_30 = arith.constant 0 : i32
    %51 = tpu.memref_slice %arg4[%50, %c0_i32_30] : memref<16x128xf32, #tpu.memory_space<any>> -> memref<1x128xf32, #tpu.memory_space<any>>
    %c10_i32_31 = arith.constant 10 : i32
    %c0_i32_32 = arith.constant 0 : i32
    %52 = tpu.memref_slice %arg7[%c10_i32_31, %c0_i32_32] : memref<64x128xf32, #tpu.memory_space<vmem>> -> memref<1x128xf32, #tpu.memory_space<vmem>>
    %53 = tpu.memref_slice %arg9[%c10_i32] : memref<64x!tpu.dma_semaphore, #tpu.memory_space<semaphore_mem>> -> memref<1x!tpu.dma_semaphore, #tpu.memory_space<semaphore_mem>>
    %54 = tpu.memref_squeeze %53 : memref<1x!tpu.dma_semaphore, #tpu.memory_space<semaphore_mem>> -> memref<!tpu.dma_semaphore, #tpu.memory_space<semaphore_mem>>
    tpu.enqueue_dma source(%51 : memref<1x128xf32, #tpu.memory_space<any>>) target(%52 : memref<1x128xf32, #tpu.memory_space<vmem>>) target_semaphore(%54 : memref<!tpu.dma_semaphore, #tpu.memory_space<semaphore_mem>>)
    %c11 = arith.constant 11 : index
    %55 = memref.load %arg1[%c11] : memref<64xi32, #tpu.memory_space<smem>>
    %c11_i32 = arith.constant 11 : i32
    %c0_i32_33 = arith.constant 0 : i32
    %56 = tpu.memref_slice %arg4[%55, %c0_i32_33] : memref<16x128xf32, #tpu.memory_space<any>> -> memref<1x128xf32, #tpu.memory_space<any>>
    %c11_i32_34 = arith.constant 11 : i32
    %c0_i32_35 = arith.constant 0 : i32
    %57 = tpu.memref_slice %arg7[%c11_i32_34, %c0_i32_35] : memref<64x128xf32, #tpu.memory_space<vmem>> -> memref<1x128xf32, #tpu.memory_space<vmem>>
    %58 = tpu.memref_slice %arg9[%c11_i32] : memref<64x!tpu.dma_semaphore, #tpu.memory_space<semaphore_mem>> -> memref<1x!tpu.dma_semaphore, #tpu.memory_space<semaphore_mem>>
    %59 = tpu.memref_squeeze %58 : memref<1x!tpu.dma_semaphore, #tpu.memory_space<semaphore_mem>> -> memref<!tpu.dma_semaphore, #tpu.memory_space<semaphore_mem>>
    tpu.enqueue_dma source(%56 : memref<1x128xf32, #tpu.memory_space<any>>) target(%57 : memref<1x128xf32, #tpu.memory_space<vmem>>) target_semaphore(%59 : memref<!tpu.dma_semaphore, #tpu.memory_space<semaphore_mem>>)
    %c12 = arith.constant 12 : index
    %60 = memref.load %arg1[%c12] : memref<64xi32, #tpu.memory_space<smem>>
    %c12_i32 = arith.constant 12 : i32
    %c0_i32_36 = arith.constant 0 : i32
    %61 = tpu.memref_slice %arg4[%60, %c0_i32_36] : memref<16x128xf32, #tpu.memory_space<any>> -> memref<1x128xf32, #tpu.memory_space<any>>
    %c12_i32_37 = arith.constant 12 : i32
    %c0_i32_38 = arith.constant 0 : i32
    %62 = tpu.memref_slice %arg7[%c12_i32_37, %c0_i32_38] : memref<64x128xf32, #tpu.memory_space<vmem>> -> memref<1x128xf32, #tpu.memory_space<vmem>>
    %63 = tpu.memref_slice %arg9[%c12_i32] : memref<64x!tpu.dma_semaphore, #tpu.memory_space<semaphore_mem>> -> memref<1x!tpu.dma_semaphore, #tpu.memory_space<semaphore_mem>>
    %64 = tpu.memref_squeeze %63 : memref<1x!tpu.dma_semaphore, #tpu.memory_space<semaphore_mem>> -> memref<!tpu.dma_semaphore, #tpu.memory_space<semaphore_mem>>
    tpu.enqueue_dma source(%61 : memref<1x128xf32, #tpu.memory_space<any>>) target(%62 : memref<1x128xf32, #tpu.memory_space<vmem>>) target_semaphore(%64 : memref<!tpu.dma_semaphore, #tpu.memory_space<semaphore_mem>>)
    %c13 = arith.constant 13 : index
    %65 = memref.load %arg1[%c13] : memref<64xi32, #tpu.memory_space<smem>>
    %c13_i32 = arith.constant 13 : i32
    %c0_i32_39 = arith.constant 0 : i32
    %66 = tpu.memref_slice %arg4[%65, %c0_i32_39] : memref<16x128xf32, #tpu.memory_space<any>> -> memref<1x128xf32, #tpu.memory_space<any>>
    %c13_i32_40 = arith.constant 13 : i32
    %c0_i32_41 = arith.constant 0 : i32
    %67 = tpu.memref_slice %arg7[%c13_i32_40, %c0_i32_41] : memref<64x128xf32, #tpu.memory_space<vmem>> -> memref<1x128xf32, #tpu.memory_space<vmem>>
    %68 = tpu.memref_slice %arg9[%c13_i32] : memref<64x!tpu.dma_semaphore, #tpu.memory_space<semaphore_mem>> -> memref<1x!tpu.dma_semaphore, #tpu.memory_space<semaphore_mem>>
    %69 = tpu.memref_squeeze %68 : memref<1x!tpu.dma_semaphore, #tpu.memory_space<semaphore_mem>> -> memref<!tpu.dma_semaphore, #tpu.memory_space<semaphore_mem>>
    tpu.enqueue_dma source(%66 : memref<1x128xf32, #tpu.memory_space<any>>) target(%67 : memref<1x128xf32, #tpu.memory_space<vmem>>) target_semaphore(%69 : memref<!tpu.dma_semaphore, #tpu.memory_space<semaphore_mem>>)
    %c14 = arith.constant 14 : index
    %70 = memref.load %arg1[%c14] : memref<64xi32, #tpu.memory_space<smem>>
    %c14_i32 = arith.constant 14 : i32
    %c0_i32_42 = arith.constant 0 : i32
    %71 = tpu.memref_slice %arg4[%70, %c0_i32_42] : memref<16x128xf32, #tpu.memory_space<any>> -> memref<1x128xf32, #tpu.memory_space<any>>
    %c14_i32_43 = arith.constant 14 : i32
    %c0_i32_44 = arith.constant 0 : i32
    %72 = tpu.memref_slice %arg7[%c14_i32_43, %c0_i32_44] : memref<64x128xf32, #tpu.memory_space<vmem>> -> memref<1x128xf32, #tpu.memory_space<vmem>>
    %73 = tpu.memref_slice %arg9[%c14_i32] : memref<64x!tpu.dma_semaphore, #tpu.memory_space<semaphore_mem>> -> memref<1x!tpu.dma_semaphore, #tpu.memory_space<semaphore_mem>>
    %74 = tpu.memref_squeeze %73 : memref<1x!tpu.dma_semaphore, #tpu.memory_space<semaphore_mem>> -> memref<!tpu.dma_semaphore, #tpu.memory_space<semaphore_mem>>
    tpu.enqueue_dma source(%71 : memref<1x128xf32, #tpu.memory_space<any>>) target(%72 : memref<1x128xf32, #tpu.memory_space<vmem>>) target_semaphore(%74 : memref<!tpu.dma_semaphore, #tpu.memory_space<semaphore_mem>>)
    %c15 = arith.constant 15 : index
    %75 = memref.load %arg1[%c15] : memref<64xi32, #tpu.memory_space<smem>>
    %c15_i32 = arith.constant 15 : i32
    %c0_i32_45 = arith.constant 0 : i32
    %76 = tpu.memref_slice %arg4[%75, %c0_i32_45] : memref<16x128xf32, #tpu.memory_space<any>> -> memref<1x128xf32, #tpu.memory_space<any>>
    %c15_i32_46 = arith.constant 15 : i32
    %c0_i32_47 = arith.constant 0 : i32
    %77 = tpu.memref_slice %arg7[%c15_i32_46, %c0_i32_47] : memref<64x128xf32, #tpu.memory_space<vmem>> -> memref<1x128xf32, #tpu.memory_space<vmem>>
    %78 = tpu.memref_slice %arg9[%c15_i32] : memref<64x!tpu.dma_semaphore, #tpu.memory_space<semaphore_mem>> -> memref<1x!tpu.dma_semaphore, #tpu.memory_space<semaphore_mem>>
    %79 = tpu.memref_squeeze %78 : memref<1x!tpu.dma_semaphore, #tpu.memory_space<semaphore_mem>> -> memref<!tpu.dma_semaphore, #tpu.memory_space<semaphore_mem>>
    tpu.enqueue_dma source(%76 : memref<1x128xf32, #tpu.memory_space<any>>) target(%77 : memref<1x128xf32, #tpu.memory_space<vmem>>) target_semaphore(%79 : memref<!tpu.dma_semaphore, #tpu.memory_space<semaphore_mem>>)
    %c16 = arith.constant 16 : index
    %80 = memref.load %arg1[%c16] : memref<64xi32, #tpu.memory_space<smem>>
    %c16_i32 = arith.constant 16 : i32
    %c0_i32_48 = arith.constant 0 : i32
    %81 = tpu.memref_slice %arg4[%80, %c0_i32_48] : memref<16x128xf32, #tpu.memory_space<any>> -> memref<1x128xf32, #tpu.memory_space<any>>
    %c16_i32_49 = arith.constant 16 : i32
    %c0_i32_50 = arith.constant 0 : i32
    %82 = tpu.memref_slice %arg7[%c16_i32_49, %c0_i32_50] : memref<64x128xf32, #tpu.memory_space<vmem>> -> memref<1x128xf32, #tpu.memory_space<vmem>>
    %83 = tpu.memref_slice %arg9[%c16_i32] : memref<64x!tpu.dma_semaphore, #tpu.memory_space<semaphore_mem>> -> memref<1x!tpu.dma_semaphore, #tpu.memory_space<semaphore_mem>>
    %84 = tpu.memref_squeeze %83 : memref<1x!tpu.dma_semaphore, #tpu.memory_space<semaphore_mem>> -> memref<!tpu.dma_semaphore, #tpu.memory_space<semaphore_mem>>
    tpu.enqueue_dma source(%81 : memref<1x128xf32, #tpu.memory_space<any>>) target(%82 : memref<1x128xf32, #tpu.memory_space<vmem>>) target_semaphore(%84 : memref<!tpu.dma_semaphore, #tpu.memory_space<semaphore_mem>>)
    %c17 = arith.constant 17 : index
    %85 = memref.load %arg1[%c17] : memref<64xi32, #tpu.memory_space<smem>>
    %c17_i32 = arith.constant 17 : i32
    %c0_i32_51 = arith.constant 0 : i32
    %86 = tpu.memref_slice %arg4[%85, %c0_i32_51] : memref<16x128xf32, #tpu.memory_space<any>> -> memref<1x128xf32, #tpu.memory_space<any>>
    %c17_i32_52 = arith.constant 17 : i32
    %c0_i32_53 = arith.constant 0 : i32
    %87 = tpu.memref_slice %arg7[%c17_i32_52, %c0_i32_53] : memref<64x128xf32, #tpu.memory_space<vmem>> -> memref<1x128xf32, #tpu.memory_space<vmem>>
    %88 = tpu.memref_slice %arg9[%c17_i32] : memref<64x!tpu.dma_semaphore, #tpu.memory_space<semaphore_mem>> -> memref<1x!tpu.dma_semaphore, #tpu.memory_space<semaphore_mem>>
    %89 = tpu.memref_squeeze %88 : memref<1x!tpu.dma_semaphore, #tpu.memory_space<semaphore_mem>> -> memref<!tpu.dma_semaphore, #tpu.memory_space<semaphore_mem>>
    tpu.enqueue_dma source(%86 : memref<1x128xf32, #tpu.memory_space<any>>) target(%87 : memref<1x128xf32, #tpu.memory_space<vmem>>) target_semaphore(%89 : memref<!tpu.dma_semaphore, #tpu.memory_space<semaphore_mem>>)
    %c18 = arith.constant 18 : index
    %90 = memref.load %arg1[%c18] : memref<64xi32, #tpu.memory_space<smem>>
    %c18_i32 = arith.constant 18 : i32
    %c0_i32_54 = arith.constant 0 : i32
    %91 = tpu.memref_slice %arg4[%90, %c0_i32_54] : memref<16x128xf32, #tpu.memory_space<any>> -> memref<1x128xf32, #tpu.memory_space<any>>
    %c18_i32_55 = arith.constant 18 : i32
    %c0_i32_56 = arith.constant 0 : i32
    %92 = tpu.memref_slice %arg7[%c18_i32_55, %c0_i32_56] : memref<64x128xf32, #tpu.memory_space<vmem>> -> memref<1x128xf32, #tpu.memory_space<vmem>>
    %93 = tpu.memref_slice %arg9[%c18_i32] : memref<64x!tpu.dma_semaphore, #tpu.memory_space<semaphore_mem>> -> memref<1x!tpu.dma_semaphore, #tpu.memory_space<semaphore_mem>>
    %94 = tpu.memref_squeeze %93 : memref<1x!tpu.dma_semaphore, #tpu.memory_space<semaphore_mem>> -> memref<!tpu.dma_semaphore, #tpu.memory_space<semaphore_mem>>
    tpu.enqueue_dma source(%91 : memref<1x128xf32, #tpu.memory_space<any>>) target(%92 : memref<1x128xf32, #tpu.memory_space<vmem>>) target_semaphore(%94 : memref<!tpu.dma_semaphore, #tpu.memory_space<semaphore_mem>>)
    %c19 = arith.constant 19 : index
    %95 = memref.load %arg1[%c19] : memref<64xi32, #tpu.memory_space<smem>>
    %c19_i32 = arith.constant 19 : i32
    %c0_i32_57 = arith.constant 0 : i32
    %96 = tpu.memref_slice %arg4[%95, %c0_i32_57] : memref<16x128xf32, #tpu.memory_space<any>> -> memref<1x128xf32, #tpu.memory_space<any>>
    %c19_i32_58 = arith.constant 19 : i32
    %c0_i32_59 = arith.constant 0 : i32
    %97 = tpu.memref_slice %arg7[%c19_i32_58, %c0_i32_59] : memref<64x128xf32, #tpu.memory_space<vmem>> -> memref<1x128xf32, #tpu.memory_space<vmem>>
    %98 = tpu.memref_slice %arg9[%c19_i32] : memref<64x!tpu.dma_semaphore, #tpu.memory_space<semaphore_mem>> -> memref<1x!tpu.dma_semaphore, #tpu.memory_space<semaphore_mem>>
    %99 = tpu.memref_squeeze %98 : memref<1x!tpu.dma_semaphore, #tpu.memory_space<semaphore_mem>> -> memref<!tpu.dma_semaphore, #tpu.memory_space<semaphore_mem>>
    tpu.enqueue_dma source(%96 : memref<1x128xf32, #tpu.memory_space<any>>) target(%97 : memref<1x128xf32, #tpu.memory_space<vmem>>) target_semaphore(%99 : memref<!tpu.dma_semaphore, #tpu.memory_space<semaphore_mem>>)
    %c20 = arith.constant 20 : index
    %100 = memref.load %arg1[%c20] : memref<64xi32, #tpu.memory_space<smem>>
    %c20_i32 = arith.constant 20 : i32
    %c0_i32_60 = arith.constant 0 : i32
    %101 = tpu.memref_slice %arg4[%100, %c0_i32_60] : memref<16x128xf32, #tpu.memory_space<any>> -> memref<1x128xf32, #tpu.memory_space<any>>
    %c20_i32_61 = arith.constant 20 : i32
    %c0_i32_62 = arith.constant 0 : i32
    %102 = tpu.memref_slice %arg7[%c20_i32_61, %c0_i32_62] : memref<64x128xf32, #tpu.memory_space<vmem>> -> memref<1x128xf32, #tpu.memory_space<vmem>>
    %103 = tpu.memref_slice %arg9[%c20_i32] : memref<64x!tpu.dma_semaphore, #tpu.memory_space<semaphore_mem>> -> memref<1x!tpu.dma_semaphore, #tpu.memory_space<semaphore_mem>>
    %104 = tpu.memref_squeeze %103 : memref<1x!tpu.dma_semaphore, #tpu.memory_space<semaphore_mem>> -> memref<!tpu.dma_semaphore, #tpu.memory_space<semaphore_mem>>
    tpu.enqueue_dma source(%101 : memref<1x128xf32, #tpu.memory_space<any>>) target(%102 : memref<1x128xf32, #tpu.memory_space<vmem>>) target_semaphore(%104 : memref<!tpu.dma_semaphore, #tpu.memory_space<semaphore_mem>>)
    %c21 = arith.constant 21 : index
    %105 = memref.load %arg1[%c21] : memref<64xi32, #tpu.memory_space<smem>>
    %c21_i32 = arith.constant 21 : i32
    %c0_i32_63 = arith.constant 0 : i32
    %106 = tpu.memref_slice %arg4[%105, %c0_i32_63] : memref<16x128xf32, #tpu.memory_space<any>> -> memref<1x128xf32, #tpu.memory_space<any>>
    %c21_i32_64 = arith.constant 21 : i32
    %c0_i32_65 = arith.constant 0 : i32
    %107 = tpu.memref_slice %arg7[%c21_i32_64, %c0_i32_65] : memref<64x128xf32, #tpu.memory_space<vmem>> -> memref<1x128xf32, #tpu.memory_space<vmem>>
    %108 = tpu.memref_slice %arg9[%c21_i32] : memref<64x!tpu.dma_semaphore, #tpu.memory_space<semaphore_mem>> -> memref<1x!tpu.dma_semaphore, #tpu.memory_space<semaphore_mem>>
    %109 = tpu.memref_squeeze %108 : memref<1x!tpu.dma_semaphore, #tpu.memory_space<semaphore_mem>> -> memref<!tpu.dma_semaphore, #tpu.memory_space<semaphore_mem>>
    tpu.enqueue_dma source(%106 : memref<1x128xf32, #tpu.memory_space<any>>) target(%107 : memref<1x128xf32, #tpu.memory_space<vmem>>) target_semaphore(%109 : memref<!tpu.dma_semaphore, #tpu.memory_space<semaphore_mem>>)
    %c22 = arith.constant 22 : index
    %110 = memref.load %arg1[%c22] : memref<64xi32, #tpu.memory_space<smem>>
    %c22_i32 = arith.constant 22 : i32
    %c0_i32_66 = arith.constant 0 : i32
    %111 = tpu.memref_slice %arg4[%110, %c0_i32_66] : memref<16x128xf32, #tpu.memory_space<any>> -> memref<1x128xf32, #tpu.memory_space<any>>
    %c22_i32_67 = arith.constant 22 : i32
    %c0_i32_68 = arith.constant 0 : i32
    %112 = tpu.memref_slice %arg7[%c22_i32_67, %c0_i32_68] : memref<64x128xf32, #tpu.memory_space<vmem>> -> memref<1x128xf32, #tpu.memory_space<vmem>>
    %113 = tpu.memref_slice %arg9[%c22_i32] : memref<64x!tpu.dma_semaphore, #tpu.memory_space<semaphore_mem>> -> memref<1x!tpu.dma_semaphore, #tpu.memory_space<semaphore_mem>>
    %114 = tpu.memref_squeeze %113 : memref<1x!tpu.dma_semaphore, #tpu.memory_space<semaphore_mem>> -> memref<!tpu.dma_semaphore, #tpu.memory_space<semaphore_mem>>
    tpu.enqueue_dma source(%111 : memref<1x128xf32, #tpu.memory_space<any>>) target(%112 : memref<1x128xf32, #tpu.memory_space<vmem>>) target_semaphore(%114 : memref<!tpu.dma_semaphore, #tpu.memory_space<semaphore_mem>>)
    %c23 = arith.constant 23 : index
    %115 = memref.load %arg1[%c23] : memref<64xi32, #tpu.memory_space<smem>>
    %c23_i32 = arith.constant 23 : i32
    %c0_i32_69 = arith.constant 0 : i32
    %116 = tpu.memref_slice %arg4[%115, %c0_i32_69] : memref<16x128xf32, #tpu.memory_space<any>> -> memref<1x128xf32, #tpu.memory_space<any>>
    %c23_i32_70 = arith.constant 23 : i32
    %c0_i32_71 = arith.constant 0 : i32
    %117 = tpu.memref_slice %arg7[%c23_i32_70, %c0_i32_71] : memref<64x128xf32, #tpu.memory_space<vmem>> -> memref<1x128xf32, #tpu.memory_space<vmem>>
    %118 = tpu.memref_slice %arg9[%c23_i32] : memref<64x!tpu.dma_semaphore, #tpu.memory_space<semaphore_mem>> -> memref<1x!tpu.dma_semaphore, #tpu.memory_space<semaphore_mem>>
    %119 = tpu.memref_squeeze %118 : memref<1x!tpu.dma_semaphore, #tpu.memory_space<semaphore_mem>> -> memref<!tpu.dma_semaphore, #tpu.memory_space<semaphore_mem>>
    tpu.enqueue_dma source(%116 : memref<1x128xf32, #tpu.memory_space<any>>) target(%117 : memref<1x128xf32, #tpu.memory_space<vmem>>) target_semaphore(%119 : memref<!tpu.dma_semaphore, #tpu.memory_space<semaphore_mem>>)
    %c24 = arith.constant 24 : index
    %120 = memref.load %arg1[%c24] : memref<64xi32, #tpu.memory_space<smem>>
    %c24_i32 = arith.constant 24 : i32
    %c0_i32_72 = arith.constant 0 : i32
    %121 = tpu.memref_slice %arg4[%120, %c0_i32_72] : memref<16x128xf32, #tpu.memory_space<any>> -> memref<1x128xf32, #tpu.memory_space<any>>
    %c24_i32_73 = arith.constant 24 : i32
    %c0_i32_74 = arith.constant 0 : i32
    %122 = tpu.memref_slice %arg7[%c24_i32_73, %c0_i32_74] : memref<64x128xf32, #tpu.memory_space<vmem>> -> memref<1x128xf32, #tpu.memory_space<vmem>>
    %123 = tpu.memref_slice %arg9[%c24_i32] : memref<64x!tpu.dma_semaphore, #tpu.memory_space<semaphore_mem>> -> memref<1x!tpu.dma_semaphore, #tpu.memory_space<semaphore_mem>>
    %124 = tpu.memref_squeeze %123 : memref<1x!tpu.dma_semaphore, #tpu.memory_space<semaphore_mem>> -> memref<!tpu.dma_semaphore, #tpu.memory_space<semaphore_mem>>
    tpu.enqueue_dma source(%121 : memref<1x128xf32, #tpu.memory_space<any>>) target(%122 : memref<1x128xf32, #tpu.memory_space<vmem>>) target_semaphore(%124 : memref<!tpu.dma_semaphore, #tpu.memory_space<semaphore_mem>>)
    %c25 = arith.constant 25 : index
    %125 = memref.load %arg1[%c25] : memref<64xi32, #tpu.memory_space<smem>>
    %c25_i32 = arith.constant 25 : i32
    %c0_i32_75 = arith.constant 0 : i32
    %126 = tpu.memref_slice %arg4[%125, %c0_i32_75] : memref<16x128xf32, #tpu.memory_space<any>> -> memref<1x128xf32, #tpu.memory_space<any>>
    %c25_i32_76 = arith.constant 25 : i32
    %c0_i32_77 = arith.constant 0 : i32
    %127 = tpu.memref_slice %arg7[%c25_i32_76, %c0_i32_77] : memref<64x128xf32, #tpu.memory_space<vmem>> -> memref<1x128xf32, #tpu.memory_space<vmem>>
    %128 = tpu.memref_slice %arg9[%c25_i32] : memref<64x!tpu.dma_semaphore, #tpu.memory_space<semaphore_mem>> -> memref<1x!tpu.dma_semaphore, #tpu.memory_space<semaphore_mem>>
    %129 = tpu.memref_squeeze %128 : memref<1x!tpu.dma_semaphore, #tpu.memory_space<semaphore_mem>> -> memref<!tpu.dma_semaphore, #tpu.memory_space<semaphore_mem>>
    tpu.enqueue_dma source(%126 : memref<1x128xf32, #tpu.memory_space<any>>) target(%127 : memref<1x128xf32, #tpu.memory_space<vmem>>) target_semaphore(%129 : memref<!tpu.dma_semaphore, #tpu.memory_space<semaphore_mem>>)
    %c26 = arith.constant 26 : index
    %130 = memref.load %arg1[%c26] : memref<64xi32, #tpu.memory_space<smem>>
    %c26_i32 = arith.constant 26 : i32
    %c0_i32_78 = arith.constant 0 : i32
    %131 = tpu.memref_slice %arg4[%130, %c0_i32_78] : memref<16x128xf32, #tpu.memory_space<any>> -> memref<1x128xf32, #tpu.memory_space<any>>
    %c26_i32_79 = arith.constant 26 : i32
    %c0_i32_80 = arith.constant 0 : i32
    %132 = tpu.memref_slice %arg7[%c26_i32_79, %c0_i32_80] : memref<64x128xf32, #tpu.memory_space<vmem>> -> memref<1x128xf32, #tpu.memory_space<vmem>>
    %133 = tpu.memref_slice %arg9[%c26_i32] : memref<64x!tpu.dma_semaphore, #tpu.memory_space<semaphore_mem>> -> memref<1x!tpu.dma_semaphore, #tpu.memory_space<semaphore_mem>>
    %134 = tpu.memref_squeeze %133 : memref<1x!tpu.dma_semaphore, #tpu.memory_space<semaphore_mem>> -> memref<!tpu.dma_semaphore, #tpu.memory_space<semaphore_mem>>
    tpu.enqueue_dma source(%131 : memref<1x128xf32, #tpu.memory_space<any>>) target(%132 : memref<1x128xf32, #tpu.memory_space<vmem>>) target_semaphore(%134 : memref<!tpu.dma_semaphore, #tpu.memory_space<semaphore_mem>>)
    %c27 = arith.constant 27 : index
    %135 = memref.load %arg1[%c27] : memref<64xi32, #tpu.memory_space<smem>>
    %c27_i32 = arith.constant 27 : i32
    %c0_i32_81 = arith.constant 0 : i32
    %136 = tpu.memref_slice %arg4[%135, %c0_i32_81] : memref<16x128xf32, #tpu.memory_space<any>> -> memref<1x128xf32, #tpu.memory_space<any>>
    %c27_i32_82 = arith.constant 27 : i32
    %c0_i32_83 = arith.constant 0 : i32
    %137 = tpu.memref_slice %arg7[%c27_i32_82, %c0_i32_83] : memref<64x128xf32, #tpu.memory_space<vmem>> -> memref<1x128xf32, #tpu.memory_space<vmem>>
    %138 = tpu.memref_slice %arg9[%c27_i32] : memref<64x!tpu.dma_semaphore, #tpu.memory_space<semaphore_mem>> -> memref<1x!tpu.dma_semaphore, #tpu.memory_space<semaphore_mem>>
    %139 = tpu.memref_squeeze %138 : memref<1x!tpu.dma_semaphore, #tpu.memory_space<semaphore_mem>> -> memref<!tpu.dma_semaphore, #tpu.memory_space<semaphore_mem>>
    tpu.enqueue_dma source(%136 : memref<1x128xf32, #tpu.memory_space<any>>) target(%137 : memref<1x128xf32, #tpu.memory_space<vmem>>) target_semaphore(%139 : memref<!tpu.dma_semaphore, #tpu.memory_space<semaphore_mem>>)
    %c28 = arith.constant 28 : index
    %140 = memref.load %arg1[%c28] : memref<64xi32, #tpu.memory_space<smem>>
    %c28_i32 = arith.constant 28 : i32
    %c0_i32_84 = arith.constant 0 : i32
    %141 = tpu.memref_slice %arg4[%140, %c0_i32_84] : memref<16x128xf32, #tpu.memory_space<any>> -> memref<1x128xf32, #tpu.memory_space<any>>
    %c28_i32_85 = arith.constant 28 : i32
    %c0_i32_86 = arith.constant 0 : i32
    %142 = tpu.memref_slice %arg7[%c28_i32_85, %c0_i32_86] : memref<64x128xf32, #tpu.memory_space<vmem>> -> memref<1x128xf32, #tpu.memory_space<vmem>>
    %143 = tpu.memref_slice %arg9[%c28_i32] : memref<64x!tpu.dma_semaphore, #tpu.memory_space<semaphore_mem>> -> memref<1x!tpu.dma_semaphore, #tpu.memory_space<semaphore_mem>>
    %144 = tpu.memref_squeeze %143 : memref<1x!tpu.dma_semaphore, #tpu.memory_space<semaphore_mem>> -> memref<!tpu.dma_semaphore, #tpu.memory_space<semaphore_mem>>
    tpu.enqueue_dma source(%141 : memref<1x128xf32, #tpu.memory_space<any>>) target(%142 : memref<1x128xf32, #tpu.memory_space<vmem>>) target_semaphore(%144 : memref<!tpu.dma_semaphore, #tpu.memory_space<semaphore_mem>>)
    %c29 = arith.constant 29 : index
    %145 = memref.load %arg1[%c29] : memref<64xi32, #tpu.memory_space<smem>>
    %c29_i32 = arith.constant 29 : i32
    %c0_i32_87 = arith.constant 0 : i32
    %146 = tpu.memref_slice %arg4[%145, %c0_i32_87] : memref<16x128xf32, #tpu.memory_space<any>> -> memref<1x128xf32, #tpu.memory_space<any>>
    %c29_i32_88 = arith.constant 29 : i32
    %c0_i32_89 = arith.constant 0 : i32
    %147 = tpu.memref_slice %arg7[%c29_i32_88, %c0_i32_89] : memref<64x128xf32, #tpu.memory_space<vmem>> -> memref<1x128xf32, #tpu.memory_space<vmem>>
    %148 = tpu.memref_slice %arg9[%c29_i32] : memref<64x!tpu.dma_semaphore, #tpu.memory_space<semaphore_mem>> -> memref<1x!tpu.dma_semaphore, #tpu.memory_space<semaphore_mem>>
    %149 = tpu.memref_squeeze %148 : memref<1x!tpu.dma_semaphore, #tpu.memory_space<semaphore_mem>> -> memref<!tpu.dma_semaphore, #tpu.memory_space<semaphore_mem>>
    tpu.enqueue_dma source(%146 : memref<1x128xf32, #tpu.memory_space<any>>) target(%147 : memref<1x128xf32, #tpu.memory_space<vmem>>) target_semaphore(%149 : memref<!tpu.dma_semaphore, #tpu.memory_space<semaphore_mem>>)
    %c30 = arith.constant 30 : index
    %150 = memref.load %arg1[%c30] : memref<64xi32, #tpu.memory_space<smem>>
    %c30_i32 = arith.constant 30 : i32
    %c0_i32_90 = arith.constant 0 : i32
    %151 = tpu.memref_slice %arg4[%150, %c0_i32_90] : memref<16x128xf32, #tpu.memory_space<any>> -> memref<1x128xf32, #tpu.memory_space<any>>
    %c30_i32_91 = arith.constant 30 : i32
    %c0_i32_92 = arith.constant 0 : i32
    %152 = tpu.memref_slice %arg7[%c30_i32_91, %c0_i32_92] : memref<64x128xf32, #tpu.memory_space<vmem>> -> memref<1x128xf32, #tpu.memory_space<vmem>>
    %153 = tpu.memref_slice %arg9[%c30_i32] : memref<64x!tpu.dma_semaphore, #tpu.memory_space<semaphore_mem>> -> memref<1x!tpu.dma_semaphore, #tpu.memory_space<semaphore_mem>>
    %154 = tpu.memref_squeeze %153 : memref<1x!tpu.dma_semaphore, #tpu.memory_space<semaphore_mem>> -> memref<!tpu.dma_semaphore, #tpu.memory_space<semaphore_mem>>
    tpu.enqueue_dma source(%151 : memref<1x128xf32, #tpu.memory_space<any>>) target(%152 : memref<1x128xf32, #tpu.memory_space<vmem>>) target_semaphore(%154 : memref<!tpu.dma_semaphore, #tpu.memory_space<semaphore_mem>>)
    %c31 = arith.constant 31 : index
    %155 = memref.load %arg1[%c31] : memref<64xi32, #tpu.memory_space<smem>>
    %c31_i32 = arith.constant 31 : i32
    %c0_i32_93 = arith.constant 0 : i32
    %156 = tpu.memref_slice %arg4[%155, %c0_i32_93] : memref<16x128xf32, #tpu.memory_space<any>> -> memref<1x128xf32, #tpu.memory_space<any>>
    %c31_i32_94 = arith.constant 31 : i32
    %c0_i32_95 = arith.constant 0 : i32
    %157 = tpu.memref_slice %arg7[%c31_i32_94, %c0_i32_95] : memref<64x128xf32, #tpu.memory_space<vmem>> -> memref<1x128xf32, #tpu.memory_space<vmem>>
    %158 = tpu.memref_slice %arg9[%c31_i32] : memref<64x!tpu.dma_semaphore, #tpu.memory_space<semaphore_mem>> -> memref<1x!tpu.dma_semaphore, #tpu.memory_space<semaphore_mem>>
    %159 = tpu.memref_squeeze %158 : memref<1x!tpu.dma_semaphore, #tpu.memory_space<semaphore_mem>> -> memref<!tpu.dma_semaphore, #tpu.memory_space<semaphore_mem>>
    tpu.enqueue_dma source(%156 : memref<1x128xf32, #tpu.memory_space<any>>) target(%157 : memref<1x128xf32, #tpu.memory_space<vmem>>) target_semaphore(%159 : memref<!tpu.dma_semaphore, #tpu.memory_space<semaphore_mem>>)
    %c32 = arith.constant 32 : index
    %160 = memref.load %arg1[%c32] : memref<64xi32, #tpu.memory_space<smem>>
    %c32_i32 = arith.constant 32 : i32
    %c0_i32_96 = arith.constant 0 : i32
    %161 = tpu.memref_slice %arg4[%160, %c0_i32_96] : memref<16x128xf32, #tpu.memory_space<any>> -> memref<1x128xf32, #tpu.memory_space<any>>
    %c32_i32_97 = arith.constant 32 : i32
    %c0_i32_98 = arith.constant 0 : i32
    %162 = tpu.memref_slice %arg7[%c32_i32_97, %c0_i32_98] : memref<64x128xf32, #tpu.memory_space<vmem>> -> memref<1x128xf32, #tpu.memory_space<vmem>>
    %163 = tpu.memref_slice %arg9[%c32_i32] : memref<64x!tpu.dma_semaphore, #tpu.memory_space<semaphore_mem>> -> memref<1x!tpu.dma_semaphore, #tpu.memory_space<semaphore_mem>>
    %164 = tpu.memref_squeeze %163 : memref<1x!tpu.dma_semaphore, #tpu.memory_space<semaphore_mem>> -> memref<!tpu.dma_semaphore, #tpu.memory_space<semaphore_mem>>
    tpu.enqueue_dma source(%161 : memref<1x128xf32, #tpu.memory_space<any>>) target(%162 : memref<1x128xf32, #tpu.memory_space<vmem>>) target_semaphore(%164 : memref<!tpu.dma_semaphore, #tpu.memory_space<semaphore_mem>>)
    %c33 = arith.constant 33 : index
    %165 = memref.load %arg1[%c33] : memref<64xi32, #tpu.memory_space<smem>>
    %c33_i32 = arith.constant 33 : i32
    %c0_i32_99 = arith.constant 0 : i32
    %166 = tpu.memref_slice %arg4[%165, %c0_i32_99] : memref<16x128xf32, #tpu.memory_space<any>> -> memref<1x128xf32, #tpu.memory_space<any>>
    %c33_i32_100 = arith.constant 33 : i32
    %c0_i32_101 = arith.constant 0 : i32
    %167 = tpu.memref_slice %arg7[%c33_i32_100, %c0_i32_101] : memref<64x128xf32, #tpu.memory_space<vmem>> -> memref<1x128xf32, #tpu.memory_space<vmem>>
    %168 = tpu.memref_slice %arg9[%c33_i32] : memref<64x!tpu.dma_semaphore, #tpu.memory_space<semaphore_mem>> -> memref<1x!tpu.dma_semaphore, #tpu.memory_space<semaphore_mem>>
    %169 = tpu.memref_squeeze %168 : memref<1x!tpu.dma_semaphore, #tpu.memory_space<semaphore_mem>> -> memref<!tpu.dma_semaphore, #tpu.memory_space<semaphore_mem>>
    tpu.enqueue_dma source(%166 : memref<1x128xf32, #tpu.memory_space<any>>) target(%167 : memref<1x128xf32, #tpu.memory_space<vmem>>) target_semaphore(%169 : memref<!tpu.dma_semaphore, #tpu.memory_space<semaphore_mem>>)
    %c34 = arith.constant 34 : index
    %170 = memref.load %arg1[%c34] : memref<64xi32, #tpu.memory_space<smem>>
    %c34_i32 = arith.constant 34 : i32
    %c0_i32_102 = arith.constant 0 : i32
    %171 = tpu.memref_slice %arg4[%170, %c0_i32_102] : memref<16x128xf32, #tpu.memory_space<any>> -> memref<1x128xf32, #tpu.memory_space<any>>
    %c34_i32_103 = arith.constant 34 : i32
    %c0_i32_104 = arith.constant 0 : i32
    %172 = tpu.memref_slice %arg7[%c34_i32_103, %c0_i32_104] : memref<64x128xf32, #tpu.memory_space<vmem>> -> memref<1x128xf32, #tpu.memory_space<vmem>>
    %173 = tpu.memref_slice %arg9[%c34_i32] : memref<64x!tpu.dma_semaphore, #tpu.memory_space<semaphore_mem>> -> memref<1x!tpu.dma_semaphore, #tpu.memory_space<semaphore_mem>>
    %174 = tpu.memref_squeeze %173 : memref<1x!tpu.dma_semaphore, #tpu.memory_space<semaphore_mem>> -> memref<!tpu.dma_semaphore, #tpu.memory_space<semaphore_mem>>
    tpu.enqueue_dma source(%171 : memref<1x128xf32, #tpu.memory_space<any>>) target(%172 : memref<1x128xf32, #tpu.memory_space<vmem>>) target_semaphore(%174 : memref<!tpu.dma_semaphore, #tpu.memory_space<semaphore_mem>>)
    %c35 = arith.constant 35 : index
    %175 = memref.load %arg1[%c35] : memref<64xi32, #tpu.memory_space<smem>>
    %c35_i32 = arith.constant 35 : i32
    %c0_i32_105 = arith.constant 0 : i32
    %176 = tpu.memref_slice %arg4[%175, %c0_i32_105] : memref<16x128xf32, #tpu.memory_space<any>> -> memref<1x128xf32, #tpu.memory_space<any>>
    %c35_i32_106 = arith.constant 35 : i32
    %c0_i32_107 = arith.constant 0 : i32
    %177 = tpu.memref_slice %arg7[%c35_i32_106, %c0_i32_107] : memref<64x128xf32, #tpu.memory_space<vmem>> -> memref<1x128xf32, #tpu.memory_space<vmem>>
    %178 = tpu.memref_slice %arg9[%c35_i32] : memref<64x!tpu.dma_semaphore, #tpu.memory_space<semaphore_mem>> -> memref<1x!tpu.dma_semaphore, #tpu.memory_space<semaphore_mem>>
    %179 = tpu.memref_squeeze %178 : memref<1x!tpu.dma_semaphore, #tpu.memory_space<semaphore_mem>> -> memref<!tpu.dma_semaphore, #tpu.memory_space<semaphore_mem>>
    tpu.enqueue_dma source(%176 : memref<1x128xf32, #tpu.memory_space<any>>) target(%177 : memref<1x128xf32, #tpu.memory_space<vmem>>) target_semaphore(%179 : memref<!tpu.dma_semaphore, #tpu.memory_space<semaphore_mem>>)
    %c36 = arith.constant 36 : index
    %180 = memref.load %arg1[%c36] : memref<64xi32, #tpu.memory_space<smem>>
    %c36_i32 = arith.constant 36 : i32
    %c0_i32_108 = arith.constant 0 : i32
    %181 = tpu.memref_slice %arg4[%180, %c0_i32_108] : memref<16x128xf32, #tpu.memory_space<any>> -> memref<1x128xf32, #tpu.memory_space<any>>
    %c36_i32_109 = arith.constant 36 : i32
    %c0_i32_110 = arith.constant 0 : i32
    %182 = tpu.memref_slice %arg7[%c36_i32_109, %c0_i32_110] : memref<64x128xf32, #tpu.memory_space<vmem>> -> memref<1x128xf32, #tpu.memory_space<vmem>>
    %183 = tpu.memref_slice %arg9[%c36_i32] : memref<64x!tpu.dma_semaphore, #tpu.memory_space<semaphore_mem>> -> memref<1x!tpu.dma_semaphore, #tpu.memory_space<semaphore_mem>>
    %184 = tpu.memref_squeeze %183 : memref<1x!tpu.dma_semaphore, #tpu.memory_space<semaphore_mem>> -> memref<!tpu.dma_semaphore, #tpu.memory_space<semaphore_mem>>
    tpu.enqueue_dma source(%181 : memref<1x128xf32, #tpu.memory_space<any>>) target(%182 : memref<1x128xf32, #tpu.memory_space<vmem>>) target_semaphore(%184 : memref<!tpu.dma_semaphore, #tpu.memory_space<semaphore_mem>>)
    %c37 = arith.constant 37 : index
    %185 = memref.load %arg1[%c37] : memref<64xi32, #tpu.memory_space<smem>>
    %c37_i32 = arith.constant 37 : i32
    %c0_i32_111 = arith.constant 0 : i32
    %186 = tpu.memref_slice %arg4[%185, %c0_i32_111] : memref<16x128xf32, #tpu.memory_space<any>> -> memref<1x128xf32, #tpu.memory_space<any>>
    %c37_i32_112 = arith.constant 37 : i32
    %c0_i32_113 = arith.constant 0 : i32
    %187 = tpu.memref_slice %arg7[%c37_i32_112, %c0_i32_113] : memref<64x128xf32, #tpu.memory_space<vmem>> -> memref<1x128xf32, #tpu.memory_space<vmem>>
    %188 = tpu.memref_slice %arg9[%c37_i32] : memref<64x!tpu.dma_semaphore, #tpu.memory_space<semaphore_mem>> -> memref<1x!tpu.dma_semaphore, #tpu.memory_space<semaphore_mem>>
    %189 = tpu.memref_squeeze %188 : memref<1x!tpu.dma_semaphore, #tpu.memory_space<semaphore_mem>> -> memref<!tpu.dma_semaphore, #tpu.memory_space<semaphore_mem>>
    tpu.enqueue_dma source(%186 : memref<1x128xf32, #tpu.memory_space<any>>) target(%187 : memref<1x128xf32, #tpu.memory_space<vmem>>) target_semaphore(%189 : memref<!tpu.dma_semaphore, #tpu.memory_space<semaphore_mem>>)
    %c38 = arith.constant 38 : index
    %190 = memref.load %arg1[%c38] : memref<64xi32, #tpu.memory_space<smem>>
    %c38_i32 = arith.constant 38 : i32
    %c0_i32_114 = arith.constant 0 : i32
    %191 = tpu.memref_slice %arg4[%190, %c0_i32_114] : memref<16x128xf32, #tpu.memory_space<any>> -> memref<1x128xf32, #tpu.memory_space<any>>
    %c38_i32_115 = arith.constant 38 : i32
    %c0_i32_116 = arith.constant 0 : i32
    %192 = tpu.memref_slice %arg7[%c38_i32_115, %c0_i32_116] : memref<64x128xf32, #tpu.memory_space<vmem>> -> memref<1x128xf32, #tpu.memory_space<vmem>>
    %193 = tpu.memref_slice %arg9[%c38_i32] : memref<64x!tpu.dma_semaphore, #tpu.memory_space<semaphore_mem>> -> memref<1x!tpu.dma_semaphore, #tpu.memory_space<semaphore_mem>>
    %194 = tpu.memref_squeeze %193 : memref<1x!tpu.dma_semaphore, #tpu.memory_space<semaphore_mem>> -> memref<!tpu.dma_semaphore, #tpu.memory_space<semaphore_mem>>
    tpu.enqueue_dma source(%191 : memref<1x128xf32, #tpu.memory_space<any>>) target(%192 : memref<1x128xf32, #tpu.memory_space<vmem>>) target_semaphore(%194 : memref<!tpu.dma_semaphore, #tpu.memory_space<semaphore_mem>>)
    %c39 = arith.constant 39 : index
    %195 = memref.load %arg1[%c39] : memref<64xi32, #tpu.memory_space<smem>>
    %c39_i32 = arith.constant 39 : i32
    %c0_i32_117 = arith.constant 0 : i32
    %196 = tpu.memref_slice %arg4[%195, %c0_i32_117] : memref<16x128xf32, #tpu.memory_space<any>> -> memref<1x128xf32, #tpu.memory_space<any>>
    %c39_i32_118 = arith.constant 39 : i32
    %c0_i32_119 = arith.constant 0 : i32
    %197 = tpu.memref_slice %arg7[%c39_i32_118, %c0_i32_119] : memref<64x128xf32, #tpu.memory_space<vmem>> -> memref<1x128xf32, #tpu.memory_space<vmem>>
    %198 = tpu.memref_slice %arg9[%c39_i32] : memref<64x!tpu.dma_semaphore, #tpu.memory_space<semaphore_mem>> -> memref<1x!tpu.dma_semaphore, #tpu.memory_space<semaphore_mem>>
    %199 = tpu.memref_squeeze %198 : memref<1x!tpu.dma_semaphore, #tpu.memory_space<semaphore_mem>> -> memref<!tpu.dma_semaphore, #tpu.memory_space<semaphore_mem>>
    tpu.enqueue_dma source(%196 : memref<1x128xf32, #tpu.memory_space<any>>) target(%197 : memref<1x128xf32, #tpu.memory_space<vmem>>) target_semaphore(%199 : memref<!tpu.dma_semaphore, #tpu.memory_space<semaphore_mem>>)
    %c40 = arith.constant 40 : index
    %200 = memref.load %arg1[%c40] : memref<64xi32, #tpu.memory_space<smem>>
    %c40_i32 = arith.constant 40 : i32
    %c0_i32_120 = arith.constant 0 : i32
    %201 = tpu.memref_slice %arg4[%200, %c0_i32_120] : memref<16x128xf32, #tpu.memory_space<any>> -> memref<1x128xf32, #tpu.memory_space<any>>
    %c40_i32_121 = arith.constant 40 : i32
    %c0_i32_122 = arith.constant 0 : i32
    %202 = tpu.memref_slice %arg7[%c40_i32_121, %c0_i32_122] : memref<64x128xf32, #tpu.memory_space<vmem>> -> memref<1x128xf32, #tpu.memory_space<vmem>>
    %203 = tpu.memref_slice %arg9[%c40_i32] : memref<64x!tpu.dma_semaphore, #tpu.memory_space<semaphore_mem>> -> memref<1x!tpu.dma_semaphore, #tpu.memory_space<semaphore_mem>>
    %204 = tpu.memref_squeeze %203 : memref<1x!tpu.dma_semaphore, #tpu.memory_space<semaphore_mem>> -> memref<!tpu.dma_semaphore, #tpu.memory_space<semaphore_mem>>
    tpu.enqueue_dma source(%201 : memref<1x128xf32, #tpu.memory_space<any>>) target(%202 : memref<1x128xf32, #tpu.memory_space<vmem>>) target_semaphore(%204 : memref<!tpu.dma_semaphore, #tpu.memory_space<semaphore_mem>>)
    %c41 = arith.constant 41 : index
    %205 = memref.load %arg1[%c41] : memref<64xi32, #tpu.memory_space<smem>>
    %c41_i32 = arith.constant 41 : i32
    %c0_i32_123 = arith.constant 0 : i32
    %206 = tpu.memref_slice %arg4[%205, %c0_i32_123] : memref<16x128xf32, #tpu.memory_space<any>> -> memref<1x128xf32, #tpu.memory_space<any>>
    %c41_i32_124 = arith.constant 41 : i32
    %c0_i32_125 = arith.constant 0 : i32
    %207 = tpu.memref_slice %arg7[%c41_i32_124, %c0_i32_125] : memref<64x128xf32, #tpu.memory_space<vmem>> -> memref<1x128xf32, #tpu.memory_space<vmem>>
    %208 = tpu.memref_slice %arg9[%c41_i32] : memref<64x!tpu.dma_semaphore, #tpu.memory_space<semaphore_mem>> -> memref<1x!tpu.dma_semaphore, #tpu.memory_space<semaphore_mem>>
    %209 = tpu.memref_squeeze %208 : memref<1x!tpu.dma_semaphore, #tpu.memory_space<semaphore_mem>> -> memref<!tpu.dma_semaphore, #tpu.memory_space<semaphore_mem>>
    tpu.enqueue_dma source(%206 : memref<1x128xf32, #tpu.memory_space<any>>) target(%207 : memref<1x128xf32, #tpu.memory_space<vmem>>) target_semaphore(%209 : memref<!tpu.dma_semaphore, #tpu.memory_space<semaphore_mem>>)
    %c42 = arith.constant 42 : index
    %210 = memref.load %arg1[%c42] : memref<64xi32, #tpu.memory_space<smem>>
    %c42_i32 = arith.constant 42 : i32
    %c0_i32_126 = arith.constant 0 : i32
    %211 = tpu.memref_slice %arg4[%210, %c0_i32_126] : memref<16x128xf32, #tpu.memory_space<any>> -> memref<1x128xf32, #tpu.memory_space<any>>
    %c42_i32_127 = arith.constant 42 : i32
    %c0_i32_128 = arith.constant 0 : i32
    %212 = tpu.memref_slice %arg7[%c42_i32_127, %c0_i32_128] : memref<64x128xf32, #tpu.memory_space<vmem>> -> memref<1x128xf32, #tpu.memory_space<vmem>>
    %213 = tpu.memref_slice %arg9[%c42_i32] : memref<64x!tpu.dma_semaphore, #tpu.memory_space<semaphore_mem>> -> memref<1x!tpu.dma_semaphore, #tpu.memory_space<semaphore_mem>>
    %214 = tpu.memref_squeeze %213 : memref<1x!tpu.dma_semaphore, #tpu.memory_space<semaphore_mem>> -> memref<!tpu.dma_semaphore, #tpu.memory_space<semaphore_mem>>
    tpu.enqueue_dma source(%211 : memref<1x128xf32, #tpu.memory_space<any>>) target(%212 : memref<1x128xf32, #tpu.memory_space<vmem>>) target_semaphore(%214 : memref<!tpu.dma_semaphore, #tpu.memory_space<semaphore_mem>>)
    %c43 = arith.constant 43 : index
    %215 = memref.load %arg1[%c43] : memref<64xi32, #tpu.memory_space<smem>>
    %c43_i32 = arith.constant 43 : i32
    %c0_i32_129 = arith.constant 0 : i32
    %216 = tpu.memref_slice %arg4[%215, %c0_i32_129] : memref<16x128xf32, #tpu.memory_space<any>> -> memref<1x128xf32, #tpu.memory_space<any>>
    %c43_i32_130 = arith.constant 43 : i32
    %c0_i32_131 = arith.constant 0 : i32
    %217 = tpu.memref_slice %arg7[%c43_i32_130, %c0_i32_131] : memref<64x128xf32, #tpu.memory_space<vmem>> -> memref<1x128xf32, #tpu.memory_space<vmem>>
    %218 = tpu.memref_slice %arg9[%c43_i32] : memref<64x!tpu.dma_semaphore, #tpu.memory_space<semaphore_mem>> -> memref<1x!tpu.dma_semaphore, #tpu.memory_space<semaphore_mem>>
    %219 = tpu.memref_squeeze %218 : memref<1x!tpu.dma_semaphore, #tpu.memory_space<semaphore_mem>> -> memref<!tpu.dma_semaphore, #tpu.memory_space<semaphore_mem>>
    tpu.enqueue_dma source(%216 : memref<1x128xf32, #tpu.memory_space<any>>) target(%217 : memref<1x128xf32, #tpu.memory_space<vmem>>) target_semaphore(%219 : memref<!tpu.dma_semaphore, #tpu.memory_space<semaphore_mem>>)
    %c44 = arith.constant 44 : index
    %220 = memref.load %arg1[%c44] : memref<64xi32, #tpu.memory_space<smem>>
    %c44_i32 = arith.constant 44 : i32
    %c0_i32_132 = arith.constant 0 : i32
    %221 = tpu.memref_slice %arg4[%220, %c0_i32_132] : memref<16x128xf32, #tpu.memory_space<any>> -> memref<1x128xf32, #tpu.memory_space<any>>
    %c44_i32_133 = arith.constant 44 : i32
    %c0_i32_134 = arith.constant 0 : i32
    %222 = tpu.memref_slice %arg7[%c44_i32_133, %c0_i32_134] : memref<64x128xf32, #tpu.memory_space<vmem>> -> memref<1x128xf32, #tpu.memory_space<vmem>>
    %223 = tpu.memref_slice %arg9[%c44_i32] : memref<64x!tpu.dma_semaphore, #tpu.memory_space<semaphore_mem>> -> memref<1x!tpu.dma_semaphore, #tpu.memory_space<semaphore_mem>>
    %224 = tpu.memref_squeeze %223 : memref<1x!tpu.dma_semaphore, #tpu.memory_space<semaphore_mem>> -> memref<!tpu.dma_semaphore, #tpu.memory_space<semaphore_mem>>
    tpu.enqueue_dma source(%221 : memref<1x128xf32, #tpu.memory_space<any>>) target(%222 : memref<1x128xf32, #tpu.memory_space<vmem>>) target_semaphore(%224 : memref<!tpu.dma_semaphore, #tpu.memory_space<semaphore_mem>>)
    %c45 = arith.constant 45 : index
    %225 = memref.load %arg1[%c45] : memref<64xi32, #tpu.memory_space<smem>>
    %c45_i32 = arith.constant 45 : i32
    %c0_i32_135 = arith.constant 0 : i32
    %226 = tpu.memref_slice %arg4[%225, %c0_i32_135] : memref<16x128xf32, #tpu.memory_space<any>> -> memref<1x128xf32, #tpu.memory_space<any>>
    %c45_i32_136 = arith.constant 45 : i32
    %c0_i32_137 = arith.constant 0 : i32
    %227 = tpu.memref_slice %arg7[%c45_i32_136, %c0_i32_137] : memref<64x128xf32, #tpu.memory_space<vmem>> -> memref<1x128xf32, #tpu.memory_space<vmem>>
    %228 = tpu.memref_slice %arg9[%c45_i32] : memref<64x!tpu.dma_semaphore, #tpu.memory_space<semaphore_mem>> -> memref<1x!tpu.dma_semaphore, #tpu.memory_space<semaphore_mem>>
    %229 = tpu.memref_squeeze %228 : memref<1x!tpu.dma_semaphore, #tpu.memory_space<semaphore_mem>> -> memref<!tpu.dma_semaphore, #tpu.memory_space<semaphore_mem>>
    tpu.enqueue_dma source(%226 : memref<1x128xf32, #tpu.memory_space<any>>) target(%227 : memref<1x128xf32, #tpu.memory_space<vmem>>) target_semaphore(%229 : memref<!tpu.dma_semaphore, #tpu.memory_space<semaphore_mem>>)
    %c46 = arith.constant 46 : index
    %230 = memref.load %arg1[%c46] : memref<64xi32, #tpu.memory_space<smem>>
    %c46_i32 = arith.constant 46 : i32
    %c0_i32_138 = arith.constant 0 : i32
    %231 = tpu.memref_slice %arg4[%230, %c0_i32_138] : memref<16x128xf32, #tpu.memory_space<any>> -> memref<1x128xf32, #tpu.memory_space<any>>
    %c46_i32_139 = arith.constant 46 : i32
    %c0_i32_140 = arith.constant 0 : i32
    %232 = tpu.memref_slice %arg7[%c46_i32_139, %c0_i32_140] : memref<64x128xf32, #tpu.memory_space<vmem>> -> memref<1x128xf32, #tpu.memory_space<vmem>>
    %233 = tpu.memref_slice %arg9[%c46_i32] : memref<64x!tpu.dma_semaphore, #tpu.memory_space<semaphore_mem>> -> memref<1x!tpu.dma_semaphore, #tpu.memory_space<semaphore_mem>>
    %234 = tpu.memref_squeeze %233 : memref<1x!tpu.dma_semaphore, #tpu.memory_space<semaphore_mem>> -> memref<!tpu.dma_semaphore, #tpu.memory_space<semaphore_mem>>
    tpu.enqueue_dma source(%231 : memref<1x128xf32, #tpu.memory_space<any>>) target(%232 : memref<1x128xf32, #tpu.memory_space<vmem>>) target_semaphore(%234 : memref<!tpu.dma_semaphore, #tpu.memory_space<semaphore_mem>>)
    %c47 = arith.constant 47 : index
    %235 = memref.load %arg1[%c47] : memref<64xi32, #tpu.memory_space<smem>>
    %c47_i32 = arith.constant 47 : i32
    %c0_i32_141 = arith.constant 0 : i32
    %236 = tpu.memref_slice %arg4[%235, %c0_i32_141] : memref<16x128xf32, #tpu.memory_space<any>> -> memref<1x128xf32, #tpu.memory_space<any>>
    %c47_i32_142 = arith.constant 47 : i32
    %c0_i32_143 = arith.constant 0 : i32
    %237 = tpu.memref_slice %arg7[%c47_i32_142, %c0_i32_143] : memref<64x128xf32, #tpu.memory_space<vmem>> -> memref<1x128xf32, #tpu.memory_space<vmem>>
    %238 = tpu.memref_slice %arg9[%c47_i32] : memref<64x!tpu.dma_semaphore, #tpu.memory_space<semaphore_mem>> -> memref<1x!tpu.dma_semaphore, #tpu.memory_space<semaphore_mem>>
    %239 = tpu.memref_squeeze %238 : memref<1x!tpu.dma_semaphore, #tpu.memory_space<semaphore_mem>> -> memref<!tpu.dma_semaphore, #tpu.memory_space<semaphore_mem>>
    tpu.enqueue_dma source(%236 : memref<1x128xf32, #tpu.memory_space<any>>) target(%237 : memref<1x128xf32, #tpu.memory_space<vmem>>) target_semaphore(%239 : memref<!tpu.dma_semaphore, #tpu.memory_space<semaphore_mem>>)
    %c48 = arith.constant 48 : index
    %240 = memref.load %arg1[%c48] : memref<64xi32, #tpu.memory_space<smem>>
    %c48_i32 = arith.constant 48 : i32
    %c0_i32_144 = arith.constant 0 : i32
    %241 = tpu.memref_slice %arg4[%240, %c0_i32_144] : memref<16x128xf32, #tpu.memory_space<any>> -> memref<1x128xf32, #tpu.memory_space<any>>
    %c48_i32_145 = arith.constant 48 : i32
    %c0_i32_146 = arith.constant 0 : i32
    %242 = tpu.memref_slice %arg7[%c48_i32_145, %c0_i32_146] : memref<64x128xf32, #tpu.memory_space<vmem>> -> memref<1x128xf32, #tpu.memory_space<vmem>>
    %243 = tpu.memref_slice %arg9[%c48_i32] : memref<64x!tpu.dma_semaphore, #tpu.memory_space<semaphore_mem>> -> memref<1x!tpu.dma_semaphore, #tpu.memory_space<semaphore_mem>>
    %244 = tpu.memref_squeeze %243 : memref<1x!tpu.dma_semaphore, #tpu.memory_space<semaphore_mem>> -> memref<!tpu.dma_semaphore, #tpu.memory_space<semaphore_mem>>
    tpu.enqueue_dma source(%241 : memref<1x128xf32, #tpu.memory_space<any>>) target(%242 : memref<1x128xf32, #tpu.memory_space<vmem>>) target_semaphore(%244 : memref<!tpu.dma_semaphore, #tpu.memory_space<semaphore_mem>>)
    %c49 = arith.constant 49 : index
    %245 = memref.load %arg1[%c49] : memref<64xi32, #tpu.memory_space<smem>>
    %c49_i32 = arith.constant 49 : i32
    %c0_i32_147 = arith.constant 0 : i32
    %246 = tpu.memref_slice %arg4[%245, %c0_i32_147] : memref<16x128xf32, #tpu.memory_space<any>> -> memref<1x128xf32, #tpu.memory_space<any>>
    %c49_i32_148 = arith.constant 49 : i32
    %c0_i32_149 = arith.constant 0 : i32
    %247 = tpu.memref_slice %arg7[%c49_i32_148, %c0_i32_149] : memref<64x128xf32, #tpu.memory_space<vmem>> -> memref<1x128xf32, #tpu.memory_space<vmem>>
    %248 = tpu.memref_slice %arg9[%c49_i32] : memref<64x!tpu.dma_semaphore, #tpu.memory_space<semaphore_mem>> -> memref<1x!tpu.dma_semaphore, #tpu.memory_space<semaphore_mem>>
    %249 = tpu.memref_squeeze %248 : memref<1x!tpu.dma_semaphore, #tpu.memory_space<semaphore_mem>> -> memref<!tpu.dma_semaphore, #tpu.memory_space<semaphore_mem>>
    tpu.enqueue_dma source(%246 : memref<1x128xf32, #tpu.memory_space<any>>) target(%247 : memref<1x128xf32, #tpu.memory_space<vmem>>) target_semaphore(%249 : memref<!tpu.dma_semaphore, #tpu.memory_space<semaphore_mem>>)
    %c50 = arith.constant 50 : index
    %250 = memref.load %arg1[%c50] : memref<64xi32, #tpu.memory_space<smem>>
    %c50_i32 = arith.constant 50 : i32
    %c0_i32_150 = arith.constant 0 : i32
    %251 = tpu.memref_slice %arg4[%250, %c0_i32_150] : memref<16x128xf32, #tpu.memory_space<any>> -> memref<1x128xf32, #tpu.memory_space<any>>
    %c50_i32_151 = arith.constant 50 : i32
    %c0_i32_152 = arith.constant 0 : i32
    %252 = tpu.memref_slice %arg7[%c50_i32_151, %c0_i32_152] : memref<64x128xf32, #tpu.memory_space<vmem>> -> memref<1x128xf32, #tpu.memory_space<vmem>>
    %253 = tpu.memref_slice %arg9[%c50_i32] : memref<64x!tpu.dma_semaphore, #tpu.memory_space<semaphore_mem>> -> memref<1x!tpu.dma_semaphore, #tpu.memory_space<semaphore_mem>>
    %254 = tpu.memref_squeeze %253 : memref<1x!tpu.dma_semaphore, #tpu.memory_space<semaphore_mem>> -> memref<!tpu.dma_semaphore, #tpu.memory_space<semaphore_mem>>
    tpu.enqueue_dma source(%251 : memref<1x128xf32, #tpu.memory_space<any>>) target(%252 : memref<1x128xf32, #tpu.memory_space<vmem>>) target_semaphore(%254 : memref<!tpu.dma_semaphore, #tpu.memory_space<semaphore_mem>>)
    %c51 = arith.constant 51 : index
    %255 = memref.load %arg1[%c51] : memref<64xi32, #tpu.memory_space<smem>>
    %c51_i32 = arith.constant 51 : i32
    %c0_i32_153 = arith.constant 0 : i32
    %256 = tpu.memref_slice %arg4[%255, %c0_i32_153] : memref<16x128xf32, #tpu.memory_space<any>> -> memref<1x128xf32, #tpu.memory_space<any>>
    %c51_i32_154 = arith.constant 51 : i32
    %c0_i32_155 = arith.constant 0 : i32
    %257 = tpu.memref_slice %arg7[%c51_i32_154, %c0_i32_155] : memref<64x128xf32, #tpu.memory_space<vmem>> -> memref<1x128xf32, #tpu.memory_space<vmem>>
    %258 = tpu.memref_slice %arg9[%c51_i32] : memref<64x!tpu.dma_semaphore, #tpu.memory_space<semaphore_mem>> -> memref<1x!tpu.dma_semaphore, #tpu.memory_space<semaphore_mem>>
    %259 = tpu.memref_squeeze %258 : memref<1x!tpu.dma_semaphore, #tpu.memory_space<semaphore_mem>> -> memref<!tpu.dma_semaphore, #tpu.memory_space<semaphore_mem>>
    tpu.enqueue_dma source(%256 : memref<1x128xf32, #tpu.memory_space<any>>) target(%257 : memref<1x128xf32, #tpu.memory_space<vmem>>) target_semaphore(%259 : memref<!tpu.dma_semaphore, #tpu.memory_space<semaphore_mem>>)
    %c52 = arith.constant 52 : index
    %260 = memref.load %arg1[%c52] : memref<64xi32, #tpu.memory_space<smem>>
    %c52_i32 = arith.constant 52 : i32
    %c0_i32_156 = arith.constant 0 : i32
    %261 = tpu.memref_slice %arg4[%260, %c0_i32_156] : memref<16x128xf32, #tpu.memory_space<any>> -> memref<1x128xf32, #tpu.memory_space<any>>
    %c52_i32_157 = arith.constant 52 : i32
    %c0_i32_158 = arith.constant 0 : i32
    %262 = tpu.memref_slice %arg7[%c52_i32_157, %c0_i32_158] : memref<64x128xf32, #tpu.memory_space<vmem>> -> memref<1x128xf32, #tpu.memory_space<vmem>>
    %263 = tpu.memref_slice %arg9[%c52_i32] : memref<64x!tpu.dma_semaphore, #tpu.memory_space<semaphore_mem>> -> memref<1x!tpu.dma_semaphore, #tpu.memory_space<semaphore_mem>>
    %264 = tpu.memref_squeeze %263 : memref<1x!tpu.dma_semaphore, #tpu.memory_space<semaphore_mem>> -> memref<!tpu.dma_semaphore, #tpu.memory_space<semaphore_mem>>
    tpu.enqueue_dma source(%261 : memref<1x128xf32, #tpu.memory_space<any>>) target(%262 : memref<1x128xf32, #tpu.memory_space<vmem>>) target_semaphore(%264 : memref<!tpu.dma_semaphore, #tpu.memory_space<semaphore_mem>>)
    %c53 = arith.constant 53 : index
    %265 = memref.load %arg1[%c53] : memref<64xi32, #tpu.memory_space<smem>>
    %c53_i32 = arith.constant 53 : i32
    %c0_i32_159 = arith.constant 0 : i32
    %266 = tpu.memref_slice %arg4[%265, %c0_i32_159] : memref<16x128xf32, #tpu.memory_space<any>> -> memref<1x128xf32, #tpu.memory_space<any>>
    %c53_i32_160 = arith.constant 53 : i32
    %c0_i32_161 = arith.constant 0 : i32
    %267 = tpu.memref_slice %arg7[%c53_i32_160, %c0_i32_161] : memref<64x128xf32, #tpu.memory_space<vmem>> -> memref<1x128xf32, #tpu.memory_space<vmem>>
    %268 = tpu.memref_slice %arg9[%c53_i32] : memref<64x!tpu.dma_semaphore, #tpu.memory_space<semaphore_mem>> -> memref<1x!tpu.dma_semaphore, #tpu.memory_space<semaphore_mem>>
    %269 = tpu.memref_squeeze %268 : memref<1x!tpu.dma_semaphore, #tpu.memory_space<semaphore_mem>> -> memref<!tpu.dma_semaphore, #tpu.memory_space<semaphore_mem>>
    tpu.enqueue_dma source(%266 : memref<1x128xf32, #tpu.memory_space<any>>) target(%267 : memref<1x128xf32, #tpu.memory_space<vmem>>) target_semaphore(%269 : memref<!tpu.dma_semaphore, #tpu.memory_space<semaphore_mem>>)
    %c54 = arith.constant 54 : index
    %270 = memref.load %arg1[%c54] : memref<64xi32, #tpu.memory_space<smem>>
    %c54_i32 = arith.constant 54 : i32
    %c0_i32_162 = arith.constant 0 : i32
    %271 = tpu.memref_slice %arg4[%270, %c0_i32_162] : memref<16x128xf32, #tpu.memory_space<any>> -> memref<1x128xf32, #tpu.memory_space<any>>
    %c54_i32_163 = arith.constant 54 : i32
    %c0_i32_164 = arith.constant 0 : i32
    %272 = tpu.memref_slice %arg7[%c54_i32_163, %c0_i32_164] : memref<64x128xf32, #tpu.memory_space<vmem>> -> memref<1x128xf32, #tpu.memory_space<vmem>>
    %273 = tpu.memref_slice %arg9[%c54_i32] : memref<64x!tpu.dma_semaphore, #tpu.memory_space<semaphore_mem>> -> memref<1x!tpu.dma_semaphore, #tpu.memory_space<semaphore_mem>>
    %274 = tpu.memref_squeeze %273 : memref<1x!tpu.dma_semaphore, #tpu.memory_space<semaphore_mem>> -> memref<!tpu.dma_semaphore, #tpu.memory_space<semaphore_mem>>
    tpu.enqueue_dma source(%271 : memref<1x128xf32, #tpu.memory_space<any>>) target(%272 : memref<1x128xf32, #tpu.memory_space<vmem>>) target_semaphore(%274 : memref<!tpu.dma_semaphore, #tpu.memory_space<semaphore_mem>>)
    %c55 = arith.constant 55 : index
    %275 = memref.load %arg1[%c55] : memref<64xi32, #tpu.memory_space<smem>>
    %c55_i32 = arith.constant 55 : i32
    %c0_i32_165 = arith.constant 0 : i32
    %276 = tpu.memref_slice %arg4[%275, %c0_i32_165] : memref<16x128xf32, #tpu.memory_space<any>> -> memref<1x128xf32, #tpu.memory_space<any>>
    %c55_i32_166 = arith.constant 55 : i32
    %c0_i32_167 = arith.constant 0 : i32
    %277 = tpu.memref_slice %arg7[%c55_i32_166, %c0_i32_167] : memref<64x128xf32, #tpu.memory_space<vmem>> -> memref<1x128xf32, #tpu.memory_space<vmem>>
    %278 = tpu.memref_slice %arg9[%c55_i32] : memref<64x!tpu.dma_semaphore, #tpu.memory_space<semaphore_mem>> -> memref<1x!tpu.dma_semaphore, #tpu.memory_space<semaphore_mem>>
    %279 = tpu.memref_squeeze %278 : memref<1x!tpu.dma_semaphore, #tpu.memory_space<semaphore_mem>> -> memref<!tpu.dma_semaphore, #tpu.memory_space<semaphore_mem>>
    tpu.enqueue_dma source(%276 : memref<1x128xf32, #tpu.memory_space<any>>) target(%277 : memref<1x128xf32, #tpu.memory_space<vmem>>) target_semaphore(%279 : memref<!tpu.dma_semaphore, #tpu.memory_space<semaphore_mem>>)
    %c56 = arith.constant 56 : index
    %280 = memref.load %arg1[%c56] : memref<64xi32, #tpu.memory_space<smem>>
    %c56_i32 = arith.constant 56 : i32
    %c0_i32_168 = arith.constant 0 : i32
    %281 = tpu.memref_slice %arg4[%280, %c0_i32_168] : memref<16x128xf32, #tpu.memory_space<any>> -> memref<1x128xf32, #tpu.memory_space<any>>
    %c56_i32_169 = arith.constant 56 : i32
    %c0_i32_170 = arith.constant 0 : i32
    %282 = tpu.memref_slice %arg7[%c56_i32_169, %c0_i32_170] : memref<64x128xf32, #tpu.memory_space<vmem>> -> memref<1x128xf32, #tpu.memory_space<vmem>>
    %283 = tpu.memref_slice %arg9[%c56_i32] : memref<64x!tpu.dma_semaphore, #tpu.memory_space<semaphore_mem>> -> memref<1x!tpu.dma_semaphore, #tpu.memory_space<semaphore_mem>>
    %284 = tpu.memref_squeeze %283 : memref<1x!tpu.dma_semaphore, #tpu.memory_space<semaphore_mem>> -> memref<!tpu.dma_semaphore, #tpu.memory_space<semaphore_mem>>
    tpu.enqueue_dma source(%281 : memref<1x128xf32, #tpu.memory_space<any>>) target(%282 : memref<1x128xf32, #tpu.memory_space<vmem>>) target_semaphore(%284 : memref<!tpu.dma_semaphore, #tpu.memory_space<semaphore_mem>>)
    %c57 = arith.constant 57 : index
    %285 = memref.load %arg1[%c57] : memref<64xi32, #tpu.memory_space<smem>>
    %c57_i32 = arith.constant 57 : i32
    %c0_i32_171 = arith.constant 0 : i32
    %286 = tpu.memref_slice %arg4[%285, %c0_i32_171] : memref<16x128xf32, #tpu.memory_space<any>> -> memref<1x128xf32, #tpu.memory_space<any>>
    %c57_i32_172 = arith.constant 57 : i32
    %c0_i32_173 = arith.constant 0 : i32
    %287 = tpu.memref_slice %arg7[%c57_i32_172, %c0_i32_173] : memref<64x128xf32, #tpu.memory_space<vmem>> -> memref<1x128xf32, #tpu.memory_space<vmem>>
    %288 = tpu.memref_slice %arg9[%c57_i32] : memref<64x!tpu.dma_semaphore, #tpu.memory_space<semaphore_mem>> -> memref<1x!tpu.dma_semaphore, #tpu.memory_space<semaphore_mem>>
    %289 = tpu.memref_squeeze %288 : memref<1x!tpu.dma_semaphore, #tpu.memory_space<semaphore_mem>> -> memref<!tpu.dma_semaphore, #tpu.memory_space<semaphore_mem>>
    tpu.enqueue_dma source(%286 : memref<1x128xf32, #tpu.memory_space<any>>) target(%287 : memref<1x128xf32, #tpu.memory_space<vmem>>) target_semaphore(%289 : memref<!tpu.dma_semaphore, #tpu.memory_space<semaphore_mem>>)
    %c58 = arith.constant 58 : index
    %290 = memref.load %arg1[%c58] : memref<64xi32, #tpu.memory_space<smem>>
    %c58_i32 = arith.constant 58 : i32
    %c0_i32_174 = arith.constant 0 : i32
    %291 = tpu.memref_slice %arg4[%290, %c0_i32_174] : memref<16x128xf32, #tpu.memory_space<any>> -> memref<1x128xf32, #tpu.memory_space<any>>
    %c58_i32_175 = arith.constant 58 : i32
    %c0_i32_176 = arith.constant 0 : i32
    %292 = tpu.memref_slice %arg7[%c58_i32_175, %c0_i32_176] : memref<64x128xf32, #tpu.memory_space<vmem>> -> memref<1x128xf32, #tpu.memory_space<vmem>>
    %293 = tpu.memref_slice %arg9[%c58_i32] : memref<64x!tpu.dma_semaphore, #tpu.memory_space<semaphore_mem>> -> memref<1x!tpu.dma_semaphore, #tpu.memory_space<semaphore_mem>>
    %294 = tpu.memref_squeeze %293 : memref<1x!tpu.dma_semaphore, #tpu.memory_space<semaphore_mem>> -> memref<!tpu.dma_semaphore, #tpu.memory_space<semaphore_mem>>
    tpu.enqueue_dma source(%291 : memref<1x128xf32, #tpu.memory_space<any>>) target(%292 : memref<1x128xf32, #tpu.memory_space<vmem>>) target_semaphore(%294 : memref<!tpu.dma_semaphore, #tpu.memory_space<semaphore_mem>>)
    %c59 = arith.constant 59 : index
    %295 = memref.load %arg1[%c59] : memref<64xi32, #tpu.memory_space<smem>>
    %c59_i32 = arith.constant 59 : i32
    %c0_i32_177 = arith.constant 0 : i32
    %296 = tpu.memref_slice %arg4[%295, %c0_i32_177] : memref<16x128xf32, #tpu.memory_space<any>> -> memref<1x128xf32, #tpu.memory_space<any>>
    %c59_i32_178 = arith.constant 59 : i32
    %c0_i32_179 = arith.constant 0 : i32
    %297 = tpu.memref_slice %arg7[%c59_i32_178, %c0_i32_179] : memref<64x128xf32, #tpu.memory_space<vmem>> -> memref<1x128xf32, #tpu.memory_space<vmem>>
    %298 = tpu.memref_slice %arg9[%c59_i32] : memref<64x!tpu.dma_semaphore, #tpu.memory_space<semaphore_mem>> -> memref<1x!tpu.dma_semaphore, #tpu.memory_space<semaphore_mem>>
    %299 = tpu.memref_squeeze %298 : memref<1x!tpu.dma_semaphore, #tpu.memory_space<semaphore_mem>> -> memref<!tpu.dma_semaphore, #tpu.memory_space<semaphore_mem>>
    tpu.enqueue_dma source(%296 : memref<1x128xf32, #tpu.memory_space<any>>) target(%297 : memref<1x128xf32, #tpu.memory_space<vmem>>) target_semaphore(%299 : memref<!tpu.dma_semaphore, #tpu.memory_space<semaphore_mem>>)
    %c60 = arith.constant 60 : index
    %300 = memref.load %arg1[%c60] : memref<64xi32, #tpu.memory_space<smem>>
    %c60_i32 = arith.constant 60 : i32
    %c0_i32_180 = arith.constant 0 : i32
    %301 = tpu.memref_slice %arg4[%300, %c0_i32_180] : memref<16x128xf32, #tpu.memory_space<any>> -> memref<1x128xf32, #tpu.memory_space<any>>
    %c60_i32_181 = arith.constant 60 : i32
    %c0_i32_182 = arith.constant 0 : i32
    %302 = tpu.memref_slice %arg7[%c60_i32_181, %c0_i32_182] : memref<64x128xf32, #tpu.memory_space<vmem>> -> memref<1x128xf32, #tpu.memory_space<vmem>>
    %303 = tpu.memref_slice %arg9[%c60_i32] : memref<64x!tpu.dma_semaphore, #tpu.memory_space<semaphore_mem>> -> memref<1x!tpu.dma_semaphore, #tpu.memory_space<semaphore_mem>>
    %304 = tpu.memref_squeeze %303 : memref<1x!tpu.dma_semaphore, #tpu.memory_space<semaphore_mem>> -> memref<!tpu.dma_semaphore, #tpu.memory_space<semaphore_mem>>
    tpu.enqueue_dma source(%301 : memref<1x128xf32, #tpu.memory_space<any>>) target(%302 : memref<1x128xf32, #tpu.memory_space<vmem>>) target_semaphore(%304 : memref<!tpu.dma_semaphore, #tpu.memory_space<semaphore_mem>>)
    %c61 = arith.constant 61 : index
    %305 = memref.load %arg1[%c61] : memref<64xi32, #tpu.memory_space<smem>>
    %c61_i32 = arith.constant 61 : i32
    %c0_i32_183 = arith.constant 0 : i32
    %306 = tpu.memref_slice %arg4[%305, %c0_i32_183] : memref<16x128xf32, #tpu.memory_space<any>> -> memref<1x128xf32, #tpu.memory_space<any>>
    %c61_i32_184 = arith.constant 61 : i32
    %c0_i32_185 = arith.constant 0 : i32
    %307 = tpu.memref_slice %arg7[%c61_i32_184, %c0_i32_185] : memref<64x128xf32, #tpu.memory_space<vmem>> -> memref<1x128xf32, #tpu.memory_space<vmem>>
    %308 = tpu.memref_slice %arg9[%c61_i32] : memref<64x!tpu.dma_semaphore, #tpu.memory_space<semaphore_mem>> -> memref<1x!tpu.dma_semaphore, #tpu.memory_space<semaphore_mem>>
    %309 = tpu.memref_squeeze %308 : memref<1x!tpu.dma_semaphore, #tpu.memory_space<semaphore_mem>> -> memref<!tpu.dma_semaphore, #tpu.memory_space<semaphore_mem>>
    tpu.enqueue_dma source(%306 : memref<1x128xf32, #tpu.memory_space<any>>) target(%307 : memref<1x128xf32, #tpu.memory_space<vmem>>) target_semaphore(%309 : memref<!tpu.dma_semaphore, #tpu.memory_space<semaphore_mem>>)
    %c62 = arith.constant 62 : index
    %310 = memref.load %arg1[%c62] : memref<64xi32, #tpu.memory_space<smem>>
    %c62_i32 = arith.constant 62 : i32
    %c0_i32_186 = arith.constant 0 : i32
    %311 = tpu.memref_slice %arg4[%310, %c0_i32_186] : memref<16x128xf32, #tpu.memory_space<any>> -> memref<1x128xf32, #tpu.memory_space<any>>
    %c62_i32_187 = arith.constant 62 : i32
    %c0_i32_188 = arith.constant 0 : i32
    %312 = tpu.memref_slice %arg7[%c62_i32_187, %c0_i32_188] : memref<64x128xf32, #tpu.memory_space<vmem>> -> memref<1x128xf32, #tpu.memory_space<vmem>>
    %313 = tpu.memref_slice %arg9[%c62_i32] : memref<64x!tpu.dma_semaphore, #tpu.memory_space<semaphore_mem>> -> memref<1x!tpu.dma_semaphore, #tpu.memory_space<semaphore_mem>>
    %314 = tpu.memref_squeeze %313 : memref<1x!tpu.dma_semaphore, #tpu.memory_space<semaphore_mem>> -> memref<!tpu.dma_semaphore, #tpu.memory_space<semaphore_mem>>
    tpu.enqueue_dma source(%311 : memref<1x128xf32, #tpu.memory_space<any>>) target(%312 : memref<1x128xf32, #tpu.memory_space<vmem>>) target_semaphore(%314 : memref<!tpu.dma_semaphore, #tpu.memory_space<semaphore_mem>>)
    %c63 = arith.constant 63 : index
    %315 = memref.load %arg1[%c63] : memref<64xi32, #tpu.memory_space<smem>>
    %c63_i32 = arith.constant 63 : i32
    %c0_i32_189 = arith.constant 0 : i32
    %316 = tpu.memref_slice %arg4[%315, %c0_i32_189] : memref<16x128xf32, #tpu.memory_space<any>> -> memref<1x128xf32, #tpu.memory_space<any>>
    %c63_i32_190 = arith.constant 63 : i32
    %c0_i32_191 = arith.constant 0 : i32
    %317 = tpu.memref_slice %arg7[%c63_i32_190, %c0_i32_191] : memref<64x128xf32, #tpu.memory_space<vmem>> -> memref<1x128xf32, #tpu.memory_space<vmem>>
    %318 = tpu.memref_slice %arg9[%c63_i32] : memref<64x!tpu.dma_semaphore, #tpu.memory_space<semaphore_mem>> -> memref<1x!tpu.dma_semaphore, #tpu.memory_space<semaphore_mem>>
    %319 = tpu.memref_squeeze %318 : memref<1x!tpu.dma_semaphore, #tpu.memory_space<semaphore_mem>> -> memref<!tpu.dma_semaphore, #tpu.memory_space<semaphore_mem>>
    tpu.enqueue_dma source(%316 : memref<1x128xf32, #tpu.memory_space<any>>) target(%317 : memref<1x128xf32, #tpu.memory_space<vmem>>) target_semaphore(%319 : memref<!tpu.dma_semaphore, #tpu.memory_space<semaphore_mem>>)
    %c0_i32_192 = arith.constant 0 : i32
    %320 = tpu.memref_slice %arg10[%c0_i32_192] : memref<1x!tpu.dma_semaphore, #tpu.memory_space<semaphore_mem>> -> memref<1x!tpu.dma_semaphore, #tpu.memory_space<semaphore_mem>>
    %321 = tpu.memref_squeeze %320 : memref<1x!tpu.dma_semaphore, #tpu.memory_space<semaphore_mem>> -> memref<!tpu.dma_semaphore, #tpu.memory_space<semaphore_mem>>
    tpu.enqueue_dma source(%arg5 : memref<128x128xbf16, #tpu.memory_space<any>>) target(%arg8 : memref<128x128xbf16, #tpu.memory_space<vmem>>) target_semaphore(%321 : memref<!tpu.dma_semaphore, #tpu.memory_space<semaphore_mem>>)
    %c0_i32_193 = arith.constant 0 : i32
    %c0_i32_194 = arith.constant 0 : i32
    %322 = tpu.memref_slice %arg4[%0, %c0_i32_194] : memref<16x128xf32, #tpu.memory_space<any>> -> memref<1x128xf32, #tpu.memory_space<any>>
    %c0_i32_195 = arith.constant 0 : i32
    %c0_i32_196 = arith.constant 0 : i32
    %323 = tpu.memref_slice %arg7[%c0_i32_195, %c0_i32_196] : memref<64x128xf32, #tpu.memory_space<vmem>> -> memref<1x128xf32, #tpu.memory_space<vmem>>
    %324 = tpu.memref_slice %arg9[%c0_i32_193] : memref<64x!tpu.dma_semaphore, #tpu.memory_space<semaphore_mem>> -> memref<1x!tpu.dma_semaphore, #tpu.memory_space<semaphore_mem>>
    %325 = tpu.memref_squeeze %324 : memref<1x!tpu.dma_semaphore, #tpu.memory_space<semaphore_mem>> -> memref<!tpu.dma_semaphore, #tpu.memory_space<semaphore_mem>>
    tpu.wait_dma2 semaphore(%325 : memref<!tpu.dma_semaphore, #tpu.memory_space<semaphore_mem>>) src(%322 : memref<1x128xf32, #tpu.memory_space<any>>) dst(%323 : memref<1x128xf32, #tpu.memory_space<vmem>>)
    %c1_i32_197 = arith.constant 1 : i32
    %c0_i32_198 = arith.constant 0 : i32
    %326 = tpu.memref_slice %arg4[%5, %c0_i32_198] : memref<16x128xf32, #tpu.memory_space<any>> -> memref<1x128xf32, #tpu.memory_space<any>>
    %c1_i32_199 = arith.constant 1 : i32
    %c0_i32_200 = arith.constant 0 : i32
    %327 = tpu.memref_slice %arg7[%c1_i32_199, %c0_i32_200] : memref<64x128xf32, #tpu.memory_space<vmem>> -> memref<1x128xf32, #tpu.memory_space<vmem>>
    %328 = tpu.memref_slice %arg9[%c1_i32_197] : memref<64x!tpu.dma_semaphore, #tpu.memory_space<semaphore_mem>> -> memref<1x!tpu.dma_semaphore, #tpu.memory_space<semaphore_mem>>
    %329 = tpu.memref_squeeze %328 : memref<1x!tpu.dma_semaphore, #tpu.memory_space<semaphore_mem>> -> memref<!tpu.dma_semaphore, #tpu.memory_space<semaphore_mem>>
    tpu.wait_dma2 semaphore(%329 : memref<!tpu.dma_semaphore, #tpu.memory_space<semaphore_mem>>) src(%326 : memref<1x128xf32, #tpu.memory_space<any>>) dst(%327 : memref<1x128xf32, #tpu.memory_space<vmem>>)
    %c2_i32_201 = arith.constant 2 : i32
    %c0_i32_202 = arith.constant 0 : i32
    %330 = tpu.memref_slice %arg4[%10, %c0_i32_202] : memref<16x128xf32, #tpu.memory_space<any>> -> memref<1x128xf32, #tpu.memory_space<any>>
    %c2_i32_203 = arith.constant 2 : i32
    %c0_i32_204 = arith.constant 0 : i32
    %331 = tpu.memref_slice %arg7[%c2_i32_203, %c0_i32_204] : memref<64x128xf32, #tpu.memory_space<vmem>> -> memref<1x128xf32, #tpu.memory_space<vmem>>
    %332 = tpu.memref_slice %arg9[%c2_i32_201] : memref<64x!tpu.dma_semaphore, #tpu.memory_space<semaphore_mem>> -> memref<1x!tpu.dma_semaphore, #tpu.memory_space<semaphore_mem>>
    %333 = tpu.memref_squeeze %332 : memref<1x!tpu.dma_semaphore, #tpu.memory_space<semaphore_mem>> -> memref<!tpu.dma_semaphore, #tpu.memory_space<semaphore_mem>>
    tpu.wait_dma2 semaphore(%333 : memref<!tpu.dma_semaphore, #tpu.memory_space<semaphore_mem>>) src(%330 : memref<1x128xf32, #tpu.memory_space<any>>) dst(%331 : memref<1x128xf32, #tpu.memory_space<vmem>>)
    %c3_i32_205 = arith.constant 3 : i32
    %c0_i32_206 = arith.constant 0 : i32
    %334 = tpu.memref_slice %arg4[%15, %c0_i32_206] : memref<16x128xf32, #tpu.memory_space<any>> -> memref<1x128xf32, #tpu.memory_space<any>>
    %c3_i32_207 = arith.constant 3 : i32
    %c0_i32_208 = arith.constant 0 : i32
    %335 = tpu.memref_slice %arg7[%c3_i32_207, %c0_i32_208] : memref<64x128xf32, #tpu.memory_space<vmem>> -> memref<1x128xf32, #tpu.memory_space<vmem>>
    %336 = tpu.memref_slice %arg9[%c3_i32_205] : memref<64x!tpu.dma_semaphore, #tpu.memory_space<semaphore_mem>> -> memref<1x!tpu.dma_semaphore, #tpu.memory_space<semaphore_mem>>
    %337 = tpu.memref_squeeze %336 : memref<1x!tpu.dma_semaphore, #tpu.memory_space<semaphore_mem>> -> memref<!tpu.dma_semaphore, #tpu.memory_space<semaphore_mem>>
    tpu.wait_dma2 semaphore(%337 : memref<!tpu.dma_semaphore, #tpu.memory_space<semaphore_mem>>) src(%334 : memref<1x128xf32, #tpu.memory_space<any>>) dst(%335 : memref<1x128xf32, #tpu.memory_space<vmem>>)
    %c4_i32_209 = arith.constant 4 : i32
    %c0_i32_210 = arith.constant 0 : i32
    %338 = tpu.memref_slice %arg4[%20, %c0_i32_210] : memref<16x128xf32, #tpu.memory_space<any>> -> memref<1x128xf32, #tpu.memory_space<any>>
    %c4_i32_211 = arith.constant 4 : i32
    %c0_i32_212 = arith.constant 0 : i32
    %339 = tpu.memref_slice %arg7[%c4_i32_211, %c0_i32_212] : memref<64x128xf32, #tpu.memory_space<vmem>> -> memref<1x128xf32, #tpu.memory_space<vmem>>
    %340 = tpu.memref_slice %arg9[%c4_i32_209] : memref<64x!tpu.dma_semaphore, #tpu.memory_space<semaphore_mem>> -> memref<1x!tpu.dma_semaphore, #tpu.memory_space<semaphore_mem>>
    %341 = tpu.memref_squeeze %340 : memref<1x!tpu.dma_semaphore, #tpu.memory_space<semaphore_mem>> -> memref<!tpu.dma_semaphore, #tpu.memory_space<semaphore_mem>>
    tpu.wait_dma2 semaphore(%341 : memref<!tpu.dma_semaphore, #tpu.memory_space<semaphore_mem>>) src(%338 : memref<1x128xf32, #tpu.memory_space<any>>) dst(%339 : memref<1x128xf32, #tpu.memory_space<vmem>>)
    %c5_i32_213 = arith.constant 5 : i32
    %c0_i32_214 = arith.constant 0 : i32
    %342 = tpu.memref_slice %arg4[%25, %c0_i32_214] : memref<16x128xf32, #tpu.memory_space<any>> -> memref<1x128xf32, #tpu.memory_space<any>>
    %c5_i32_215 = arith.constant 5 : i32
    %c0_i32_216 = arith.constant 0 : i32
    %343 = tpu.memref_slice %arg7[%c5_i32_215, %c0_i32_216] : memref<64x128xf32, #tpu.memory_space<vmem>> -> memref<1x128xf32, #tpu.memory_space<vmem>>
    %344 = tpu.memref_slice %arg9[%c5_i32_213] : memref<64x!tpu.dma_semaphore, #tpu.memory_space<semaphore_mem>> -> memref<1x!tpu.dma_semaphore, #tpu.memory_space<semaphore_mem>>
    %345 = tpu.memref_squeeze %344 : memref<1x!tpu.dma_semaphore, #tpu.memory_space<semaphore_mem>> -> memref<!tpu.dma_semaphore, #tpu.memory_space<semaphore_mem>>
    tpu.wait_dma2 semaphore(%345 : memref<!tpu.dma_semaphore, #tpu.memory_space<semaphore_mem>>) src(%342 : memref<1x128xf32, #tpu.memory_space<any>>) dst(%343 : memref<1x128xf32, #tpu.memory_space<vmem>>)
    %c6_i32_217 = arith.constant 6 : i32
    %c0_i32_218 = arith.constant 0 : i32
    %346 = tpu.memref_slice %arg4[%30, %c0_i32_218] : memref<16x128xf32, #tpu.memory_space<any>> -> memref<1x128xf32, #tpu.memory_space<any>>
    %c6_i32_219 = arith.constant 6 : i32
    %c0_i32_220 = arith.constant 0 : i32
    %347 = tpu.memref_slice %arg7[%c6_i32_219, %c0_i32_220] : memref<64x128xf32, #tpu.memory_space<vmem>> -> memref<1x128xf32, #tpu.memory_space<vmem>>
    %348 = tpu.memref_slice %arg9[%c6_i32_217] : memref<64x!tpu.dma_semaphore, #tpu.memory_space<semaphore_mem>> -> memref<1x!tpu.dma_semaphore, #tpu.memory_space<semaphore_mem>>
    %349 = tpu.memref_squeeze %348 : memref<1x!tpu.dma_semaphore, #tpu.memory_space<semaphore_mem>> -> memref<!tpu.dma_semaphore, #tpu.memory_space<semaphore_mem>>
    tpu.wait_dma2 semaphore(%349 : memref<!tpu.dma_semaphore, #tpu.memory_space<semaphore_mem>>) src(%346 : memref<1x128xf32, #tpu.memory_space<any>>) dst(%347 : memref<1x128xf32, #tpu.memory_space<vmem>>)
    %c7_i32_221 = arith.constant 7 : i32
    %c0_i32_222 = arith.constant 0 : i32
    %350 = tpu.memref_slice %arg4[%35, %c0_i32_222] : memref<16x128xf32, #tpu.memory_space<any>> -> memref<1x128xf32, #tpu.memory_space<any>>
    %c7_i32_223 = arith.constant 7 : i32
    %c0_i32_224 = arith.constant 0 : i32
    %351 = tpu.memref_slice %arg7[%c7_i32_223, %c0_i32_224] : memref<64x128xf32, #tpu.memory_space<vmem>> -> memref<1x128xf32, #tpu.memory_space<vmem>>
    %352 = tpu.memref_slice %arg9[%c7_i32_221] : memref<64x!tpu.dma_semaphore, #tpu.memory_space<semaphore_mem>> -> memref<1x!tpu.dma_semaphore, #tpu.memory_space<semaphore_mem>>
    %353 = tpu.memref_squeeze %352 : memref<1x!tpu.dma_semaphore, #tpu.memory_space<semaphore_mem>> -> memref<!tpu.dma_semaphore, #tpu.memory_space<semaphore_mem>>
    tpu.wait_dma2 semaphore(%353 : memref<!tpu.dma_semaphore, #tpu.memory_space<semaphore_mem>>) src(%350 : memref<1x128xf32, #tpu.memory_space<any>>) dst(%351 : memref<1x128xf32, #tpu.memory_space<vmem>>)
    %c8_i32_225 = arith.constant 8 : i32
    %c0_i32_226 = arith.constant 0 : i32
    %354 = tpu.memref_slice %arg4[%40, %c0_i32_226] : memref<16x128xf32, #tpu.memory_space<any>> -> memref<1x128xf32, #tpu.memory_space<any>>
    %c8_i32_227 = arith.constant 8 : i32
    %c0_i32_228 = arith.constant 0 : i32
    %355 = tpu.memref_slice %arg7[%c8_i32_227, %c0_i32_228] : memref<64x128xf32, #tpu.memory_space<vmem>> -> memref<1x128xf32, #tpu.memory_space<vmem>>
    %356 = tpu.memref_slice %arg9[%c8_i32_225] : memref<64x!tpu.dma_semaphore, #tpu.memory_space<semaphore_mem>> -> memref<1x!tpu.dma_semaphore, #tpu.memory_space<semaphore_mem>>
    %357 = tpu.memref_squeeze %356 : memref<1x!tpu.dma_semaphore, #tpu.memory_space<semaphore_mem>> -> memref<!tpu.dma_semaphore, #tpu.memory_space<semaphore_mem>>
    tpu.wait_dma2 semaphore(%357 : memref<!tpu.dma_semaphore, #tpu.memory_space<semaphore_mem>>) src(%354 : memref<1x128xf32, #tpu.memory_space<any>>) dst(%355 : memref<1x128xf32, #tpu.memory_space<vmem>>)
    %c9_i32_229 = arith.constant 9 : i32
    %c0_i32_230 = arith.constant 0 : i32
    %358 = tpu.memref_slice %arg4[%45, %c0_i32_230] : memref<16x128xf32, #tpu.memory_space<any>> -> memref<1x128xf32, #tpu.memory_space<any>>
    %c9_i32_231 = arith.constant 9 : i32
    %c0_i32_232 = arith.constant 0 : i32
    %359 = tpu.memref_slice %arg7[%c9_i32_231, %c0_i32_232] : memref<64x128xf32, #tpu.memory_space<vmem>> -> memref<1x128xf32, #tpu.memory_space<vmem>>
    %360 = tpu.memref_slice %arg9[%c9_i32_229] : memref<64x!tpu.dma_semaphore, #tpu.memory_space<semaphore_mem>> -> memref<1x!tpu.dma_semaphore, #tpu.memory_space<semaphore_mem>>
    %361 = tpu.memref_squeeze %360 : memref<1x!tpu.dma_semaphore, #tpu.memory_space<semaphore_mem>> -> memref<!tpu.dma_semaphore, #tpu.memory_space<semaphore_mem>>
    tpu.wait_dma2 semaphore(%361 : memref<!tpu.dma_semaphore, #tpu.memory_space<semaphore_mem>>) src(%358 : memref<1x128xf32, #tpu.memory_space<any>>) dst(%359 : memref<1x128xf32, #tpu.memory_space<vmem>>)
    %c10_i32_233 = arith.constant 10 : i32
    %c0_i32_234 = arith.constant 0 : i32
    %362 = tpu.memref_slice %arg4[%50, %c0_i32_234] : memref<16x128xf32, #tpu.memory_space<any>> -> memref<1x128xf32, #tpu.memory_space<any>>
    %c10_i32_235 = arith.constant 10 : i32
    %c0_i32_236 = arith.constant 0 : i32
    %363 = tpu.memref_slice %arg7[%c10_i32_235, %c0_i32_236] : memref<64x128xf32, #tpu.memory_space<vmem>> -> memref<1x128xf32, #tpu.memory_space<vmem>>
    %364 = tpu.memref_slice %arg9[%c10_i32_233] : memref<64x!tpu.dma_semaphore, #tpu.memory_space<semaphore_mem>> -> memref<1x!tpu.dma_semaphore, #tpu.memory_space<semaphore_mem>>
    %365 = tpu.memref_squeeze %364 : memref<1x!tpu.dma_semaphore, #tpu.memory_space<semaphore_mem>> -> memref<!tpu.dma_semaphore, #tpu.memory_space<semaphore_mem>>
    tpu.wait_dma2 semaphore(%365 : memref<!tpu.dma_semaphore, #tpu.memory_space<semaphore_mem>>) src(%362 : memref<1x128xf32, #tpu.memory_space<any>>) dst(%363 : memref<1x128xf32, #tpu.memory_space<vmem>>)
    %c11_i32_237 = arith.constant 11 : i32
    %c0_i32_238 = arith.constant 0 : i32
    %366 = tpu.memref_slice %arg4[%55, %c0_i32_238] : memref<16x128xf32, #tpu.memory_space<any>> -> memref<1x128xf32, #tpu.memory_space<any>>
    %c11_i32_239 = arith.constant 11 : i32
    %c0_i32_240 = arith.constant 0 : i32
    %367 = tpu.memref_slice %arg7[%c11_i32_239, %c0_i32_240] : memref<64x128xf32, #tpu.memory_space<vmem>> -> memref<1x128xf32, #tpu.memory_space<vmem>>
    %368 = tpu.memref_slice %arg9[%c11_i32_237] : memref<64x!tpu.dma_semaphore, #tpu.memory_space<semaphore_mem>> -> memref<1x!tpu.dma_semaphore, #tpu.memory_space<semaphore_mem>>
    %369 = tpu.memref_squeeze %368 : memref<1x!tpu.dma_semaphore, #tpu.memory_space<semaphore_mem>> -> memref<!tpu.dma_semaphore, #tpu.memory_space<semaphore_mem>>
    tpu.wait_dma2 semaphore(%369 : memref<!tpu.dma_semaphore, #tpu.memory_space<semaphore_mem>>) src(%366 : memref<1x128xf32, #tpu.memory_space<any>>) dst(%367 : memref<1x128xf32, #tpu.memory_space<vmem>>)
    %c12_i32_241 = arith.constant 12 : i32
    %c0_i32_242 = arith.constant 0 : i32
    %370 = tpu.memref_slice %arg4[%60, %c0_i32_242] : memref<16x128xf32, #tpu.memory_space<any>> -> memref<1x128xf32, #tpu.memory_space<any>>
    %c12_i32_243 = arith.constant 12 : i32
    %c0_i32_244 = arith.constant 0 : i32
    %371 = tpu.memref_slice %arg7[%c12_i32_243, %c0_i32_244] : memref<64x128xf32, #tpu.memory_space<vmem>> -> memref<1x128xf32, #tpu.memory_space<vmem>>
    %372 = tpu.memref_slice %arg9[%c12_i32_241] : memref<64x!tpu.dma_semaphore, #tpu.memory_space<semaphore_mem>> -> memref<1x!tpu.dma_semaphore, #tpu.memory_space<semaphore_mem>>
    %373 = tpu.memref_squeeze %372 : memref<1x!tpu.dma_semaphore, #tpu.memory_space<semaphore_mem>> -> memref<!tpu.dma_semaphore, #tpu.memory_space<semaphore_mem>>
    tpu.wait_dma2 semaphore(%373 : memref<!tpu.dma_semaphore, #tpu.memory_space<semaphore_mem>>) src(%370 : memref<1x128xf32, #tpu.memory_space<any>>) dst(%371 : memref<1x128xf32, #tpu.memory_space<vmem>>)
    %c13_i32_245 = arith.constant 13 : i32
    %c0_i32_246 = arith.constant 0 : i32
    %374 = tpu.memref_slice %arg4[%65, %c0_i32_246] : memref<16x128xf32, #tpu.memory_space<any>> -> memref<1x128xf32, #tpu.memory_space<any>>
    %c13_i32_247 = arith.constant 13 : i32
    %c0_i32_248 = arith.constant 0 : i32
    %375 = tpu.memref_slice %arg7[%c13_i32_247, %c0_i32_248] : memref<64x128xf32, #tpu.memory_space<vmem>> -> memref<1x128xf32, #tpu.memory_space<vmem>>
    %376 = tpu.memref_slice %arg9[%c13_i32_245] : memref<64x!tpu.dma_semaphore, #tpu.memory_space<semaphore_mem>> -> memref<1x!tpu.dma_semaphore, #tpu.memory_space<semaphore_mem>>
    %377 = tpu.memref_squeeze %376 : memref<1x!tpu.dma_semaphore, #tpu.memory_space<semaphore_mem>> -> memref<!tpu.dma_semaphore, #tpu.memory_space<semaphore_mem>>
    tpu.wait_dma2 semaphore(%377 : memref<!tpu.dma_semaphore, #tpu.memory_space<semaphore_mem>>) src(%374 : memref<1x128xf32, #tpu.memory_space<any>>) dst(%375 : memref<1x128xf32, #tpu.memory_space<vmem>>)
    %c14_i32_249 = arith.constant 14 : i32
    %c0_i32_250 = arith.constant 0 : i32
    %378 = tpu.memref_slice %arg4[%70, %c0_i32_250] : memref<16x128xf32, #tpu.memory_space<any>> -> memref<1x128xf32, #tpu.memory_space<any>>
    %c14_i32_251 = arith.constant 14 : i32
    %c0_i32_252 = arith.constant 0 : i32
    %379 = tpu.memref_slice %arg7[%c14_i32_251, %c0_i32_252] : memref<64x128xf32, #tpu.memory_space<vmem>> -> memref<1x128xf32, #tpu.memory_space<vmem>>
    %380 = tpu.memref_slice %arg9[%c14_i32_249] : memref<64x!tpu.dma_semaphore, #tpu.memory_space<semaphore_mem>> -> memref<1x!tpu.dma_semaphore, #tpu.memory_space<semaphore_mem>>
    %381 = tpu.memref_squeeze %380 : memref<1x!tpu.dma_semaphore, #tpu.memory_space<semaphore_mem>> -> memref<!tpu.dma_semaphore, #tpu.memory_space<semaphore_mem>>
    tpu.wait_dma2 semaphore(%381 : memref<!tpu.dma_semaphore, #tpu.memory_space<semaphore_mem>>) src(%378 : memref<1x128xf32, #tpu.memory_space<any>>) dst(%379 : memref<1x128xf32, #tpu.memory_space<vmem>>)
    %c15_i32_253 = arith.constant 15 : i32
    %c0_i32_254 = arith.constant 0 : i32
    %382 = tpu.memref_slice %arg4[%75, %c0_i32_254] : memref<16x128xf32, #tpu.memory_space<any>> -> memref<1x128xf32, #tpu.memory_space<any>>
    %c15_i32_255 = arith.constant 15 : i32
    %c0_i32_256 = arith.constant 0 : i32
    %383 = tpu.memref_slice %arg7[%c15_i32_255, %c0_i32_256] : memref<64x128xf32, #tpu.memory_space<vmem>> -> memref<1x128xf32, #tpu.memory_space<vmem>>
    %384 = tpu.memref_slice %arg9[%c15_i32_253] : memref<64x!tpu.dma_semaphore, #tpu.memory_space<semaphore_mem>> -> memref<1x!tpu.dma_semaphore, #tpu.memory_space<semaphore_mem>>
    %385 = tpu.memref_squeeze %384 : memref<1x!tpu.dma_semaphore, #tpu.memory_space<semaphore_mem>> -> memref<!tpu.dma_semaphore, #tpu.memory_space<semaphore_mem>>
    tpu.wait_dma2 semaphore(%385 : memref<!tpu.dma_semaphore, #tpu.memory_space<semaphore_mem>>) src(%382 : memref<1x128xf32, #tpu.memory_space<any>>) dst(%383 : memref<1x128xf32, #tpu.memory_space<vmem>>)
    %c16_i32_257 = arith.constant 16 : i32
    %c0_i32_258 = arith.constant 0 : i32
    %386 = tpu.memref_slice %arg4[%80, %c0_i32_258] : memref<16x128xf32, #tpu.memory_space<any>> -> memref<1x128xf32, #tpu.memory_space<any>>
    %c16_i32_259 = arith.constant 16 : i32
    %c0_i32_260 = arith.constant 0 : i32
    %387 = tpu.memref_slice %arg7[%c16_i32_259, %c0_i32_260] : memref<64x128xf32, #tpu.memory_space<vmem>> -> memref<1x128xf32, #tpu.memory_space<vmem>>
    %388 = tpu.memref_slice %arg9[%c16_i32_257] : memref<64x!tpu.dma_semaphore, #tpu.memory_space<semaphore_mem>> -> memref<1x!tpu.dma_semaphore, #tpu.memory_space<semaphore_mem>>
    %389 = tpu.memref_squeeze %388 : memref<1x!tpu.dma_semaphore, #tpu.memory_space<semaphore_mem>> -> memref<!tpu.dma_semaphore, #tpu.memory_space<semaphore_mem>>
    tpu.wait_dma2 semaphore(%389 : memref<!tpu.dma_semaphore, #tpu.memory_space<semaphore_mem>>) src(%386 : memref<1x128xf32, #tpu.memory_space<any>>) dst(%387 : memref<1x128xf32, #tpu.memory_space<vmem>>)
    %c17_i32_261 = arith.constant 17 : i32
    %c0_i32_262 = arith.constant 0 : i32
    %390 = tpu.memref_slice %arg4[%85, %c0_i32_262] : memref<16x128xf32, #tpu.memory_space<any>> -> memref<1x128xf32, #tpu.memory_space<any>>
    %c17_i32_263 = arith.constant 17 : i32
    %c0_i32_264 = arith.constant 0 : i32
    %391 = tpu.memref_slice %arg7[%c17_i32_263, %c0_i32_264] : memref<64x128xf32, #tpu.memory_space<vmem>> -> memref<1x128xf32, #tpu.memory_space<vmem>>
    %392 = tpu.memref_slice %arg9[%c17_i32_261] : memref<64x!tpu.dma_semaphore, #tpu.memory_space<semaphore_mem>> -> memref<1x!tpu.dma_semaphore, #tpu.memory_space<semaphore_mem>>
    %393 = tpu.memref_squeeze %392 : memref<1x!tpu.dma_semaphore, #tpu.memory_space<semaphore_mem>> -> memref<!tpu.dma_semaphore, #tpu.memory_space<semaphore_mem>>
    tpu.wait_dma2 semaphore(%393 : memref<!tpu.dma_semaphore, #tpu.memory_space<semaphore_mem>>) src(%390 : memref<1x128xf32, #tpu.memory_space<any>>) dst(%391 : memref<1x128xf32, #tpu.memory_space<vmem>>)
    %c18_i32_265 = arith.constant 18 : i32
    %c0_i32_266 = arith.constant 0 : i32
    %394 = tpu.memref_slice %arg4[%90, %c0_i32_266] : memref<16x128xf32, #tpu.memory_space<any>> -> memref<1x128xf32, #tpu.memory_space<any>>
    %c18_i32_267 = arith.constant 18 : i32
    %c0_i32_268 = arith.constant 0 : i32
    %395 = tpu.memref_slice %arg7[%c18_i32_267, %c0_i32_268] : memref<64x128xf32, #tpu.memory_space<vmem>> -> memref<1x128xf32, #tpu.memory_space<vmem>>
    %396 = tpu.memref_slice %arg9[%c18_i32_265] : memref<64x!tpu.dma_semaphore, #tpu.memory_space<semaphore_mem>> -> memref<1x!tpu.dma_semaphore, #tpu.memory_space<semaphore_mem>>
    %397 = tpu.memref_squeeze %396 : memref<1x!tpu.dma_semaphore, #tpu.memory_space<semaphore_mem>> -> memref<!tpu.dma_semaphore, #tpu.memory_space<semaphore_mem>>
    tpu.wait_dma2 semaphore(%397 : memref<!tpu.dma_semaphore, #tpu.memory_space<semaphore_mem>>) src(%394 : memref<1x128xf32, #tpu.memory_space<any>>) dst(%395 : memref<1x128xf32, #tpu.memory_space<vmem>>)
    %c19_i32_269 = arith.constant 19 : i32
    %c0_i32_270 = arith.constant 0 : i32
    %398 = tpu.memref_slice %arg4[%95, %c0_i32_270] : memref<16x128xf32, #tpu.memory_space<any>> -> memref<1x128xf32, #tpu.memory_space<any>>
    %c19_i32_271 = arith.constant 19 : i32
    %c0_i32_272 = arith.constant 0 : i32
    %399 = tpu.memref_slice %arg7[%c19_i32_271, %c0_i32_272] : memref<64x128xf32, #tpu.memory_space<vmem>> -> memref<1x128xf32, #tpu.memory_space<vmem>>
    %400 = tpu.memref_slice %arg9[%c19_i32_269] : memref<64x!tpu.dma_semaphore, #tpu.memory_space<semaphore_mem>> -> memref<1x!tpu.dma_semaphore, #tpu.memory_space<semaphore_mem>>
    %401 = tpu.memref_squeeze %400 : memref<1x!tpu.dma_semaphore, #tpu.memory_space<semaphore_mem>> -> memref<!tpu.dma_semaphore, #tpu.memory_space<semaphore_mem>>
    tpu.wait_dma2 semaphore(%401 : memref<!tpu.dma_semaphore, #tpu.memory_space<semaphore_mem>>) src(%398 : memref<1x128xf32, #tpu.memory_space<any>>) dst(%399 : memref<1x128xf32, #tpu.memory_space<vmem>>)
    %c20_i32_273 = arith.constant 20 : i32
    %c0_i32_274 = arith.constant 0 : i32
    %402 = tpu.memref_slice %arg4[%100, %c0_i32_274] : memref<16x128xf32, #tpu.memory_space<any>> -> memref<1x128xf32, #tpu.memory_space<any>>
    %c20_i32_275 = arith.constant 20 : i32
    %c0_i32_276 = arith.constant 0 : i32
    %403 = tpu.memref_slice %arg7[%c20_i32_275, %c0_i32_276] : memref<64x128xf32, #tpu.memory_space<vmem>> -> memref<1x128xf32, #tpu.memory_space<vmem>>
    %404 = tpu.memref_slice %arg9[%c20_i32_273] : memref<64x!tpu.dma_semaphore, #tpu.memory_space<semaphore_mem>> -> memref<1x!tpu.dma_semaphore, #tpu.memory_space<semaphore_mem>>
    %405 = tpu.memref_squeeze %404 : memref<1x!tpu.dma_semaphore, #tpu.memory_space<semaphore_mem>> -> memref<!tpu.dma_semaphore, #tpu.memory_space<semaphore_mem>>
    tpu.wait_dma2 semaphore(%405 : memref<!tpu.dma_semaphore, #tpu.memory_space<semaphore_mem>>) src(%402 : memref<1x128xf32, #tpu.memory_space<any>>) dst(%403 : memref<1x128xf32, #tpu.memory_space<vmem>>)
    %c21_i32_277 = arith.constant 21 : i32
    %c0_i32_278 = arith.constant 0 : i32
    %406 = tpu.memref_slice %arg4[%105, %c0_i32_278] : memref<16x128xf32, #tpu.memory_space<any>> -> memref<1x128xf32, #tpu.memory_space<any>>
    %c21_i32_279 = arith.constant 21 : i32
    %c0_i32_280 = arith.constant 0 : i32
    %407 = tpu.memref_slice %arg7[%c21_i32_279, %c0_i32_280] : memref<64x128xf32, #tpu.memory_space<vmem>> -> memref<1x128xf32, #tpu.memory_space<vmem>>
    %408 = tpu.memref_slice %arg9[%c21_i32_277] : memref<64x!tpu.dma_semaphore, #tpu.memory_space<semaphore_mem>> -> memref<1x!tpu.dma_semaphore, #tpu.memory_space<semaphore_mem>>
    %409 = tpu.memref_squeeze %408 : memref<1x!tpu.dma_semaphore, #tpu.memory_space<semaphore_mem>> -> memref<!tpu.dma_semaphore, #tpu.memory_space<semaphore_mem>>
    tpu.wait_dma2 semaphore(%409 : memref<!tpu.dma_semaphore, #tpu.memory_space<semaphore_mem>>) src(%406 : memref<1x128xf32, #tpu.memory_space<any>>) dst(%407 : memref<1x128xf32, #tpu.memory_space<vmem>>)
    %c22_i32_281 = arith.constant 22 : i32
    %c0_i32_282 = arith.constant 0 : i32
    %410 = tpu.memref_slice %arg4[%110, %c0_i32_282] : memref<16x128xf32, #tpu.memory_space<any>> -> memref<1x128xf32, #tpu.memory_space<any>>
    %c22_i32_283 = arith.constant 22 : i32
    %c0_i32_284 = arith.constant 0 : i32
    %411 = tpu.memref_slice %arg7[%c22_i32_283, %c0_i32_284] : memref<64x128xf32, #tpu.memory_space<vmem>> -> memref<1x128xf32, #tpu.memory_space<vmem>>
    %412 = tpu.memref_slice %arg9[%c22_i32_281] : memref<64x!tpu.dma_semaphore, #tpu.memory_space<semaphore_mem>> -> memref<1x!tpu.dma_semaphore, #tpu.memory_space<semaphore_mem>>
    %413 = tpu.memref_squeeze %412 : memref<1x!tpu.dma_semaphore, #tpu.memory_space<semaphore_mem>> -> memref<!tpu.dma_semaphore, #tpu.memory_space<semaphore_mem>>
    tpu.wait_dma2 semaphore(%413 : memref<!tpu.dma_semaphore, #tpu.memory_space<semaphore_mem>>) src(%410 : memref<1x128xf32, #tpu.memory_space<any>>) dst(%411 : memref<1x128xf32, #tpu.memory_space<vmem>>)
    %c23_i32_285 = arith.constant 23 : i32
    %c0_i32_286 = arith.constant 0 : i32
    %414 = tpu.memref_slice %arg4[%115, %c0_i32_286] : memref<16x128xf32, #tpu.memory_space<any>> -> memref<1x128xf32, #tpu.memory_space<any>>
    %c23_i32_287 = arith.constant 23 : i32
    %c0_i32_288 = arith.constant 0 : i32
    %415 = tpu.memref_slice %arg7[%c23_i32_287, %c0_i32_288] : memref<64x128xf32, #tpu.memory_space<vmem>> -> memref<1x128xf32, #tpu.memory_space<vmem>>
    %416 = tpu.memref_slice %arg9[%c23_i32_285] : memref<64x!tpu.dma_semaphore, #tpu.memory_space<semaphore_mem>> -> memref<1x!tpu.dma_semaphore, #tpu.memory_space<semaphore_mem>>
    %417 = tpu.memref_squeeze %416 : memref<1x!tpu.dma_semaphore, #tpu.memory_space<semaphore_mem>> -> memref<!tpu.dma_semaphore, #tpu.memory_space<semaphore_mem>>
    tpu.wait_dma2 semaphore(%417 : memref<!tpu.dma_semaphore, #tpu.memory_space<semaphore_mem>>) src(%414 : memref<1x128xf32, #tpu.memory_space<any>>) dst(%415 : memref<1x128xf32, #tpu.memory_space<vmem>>)
    %c24_i32_289 = arith.constant 24 : i32
    %c0_i32_290 = arith.constant 0 : i32
    %418 = tpu.memref_slice %arg4[%120, %c0_i32_290] : memref<16x128xf32, #tpu.memory_space<any>> -> memref<1x128xf32, #tpu.memory_space<any>>
    %c24_i32_291 = arith.constant 24 : i32
    %c0_i32_292 = arith.constant 0 : i32
    %419 = tpu.memref_slice %arg7[%c24_i32_291, %c0_i32_292] : memref<64x128xf32, #tpu.memory_space<vmem>> -> memref<1x128xf32, #tpu.memory_space<vmem>>
    %420 = tpu.memref_slice %arg9[%c24_i32_289] : memref<64x!tpu.dma_semaphore, #tpu.memory_space<semaphore_mem>> -> memref<1x!tpu.dma_semaphore, #tpu.memory_space<semaphore_mem>>
    %421 = tpu.memref_squeeze %420 : memref<1x!tpu.dma_semaphore, #tpu.memory_space<semaphore_mem>> -> memref<!tpu.dma_semaphore, #tpu.memory_space<semaphore_mem>>
    tpu.wait_dma2 semaphore(%421 : memref<!tpu.dma_semaphore, #tpu.memory_space<semaphore_mem>>) src(%418 : memref<1x128xf32, #tpu.memory_space<any>>) dst(%419 : memref<1x128xf32, #tpu.memory_space<vmem>>)
    %c25_i32_293 = arith.constant 25 : i32
    %c0_i32_294 = arith.constant 0 : i32
    %422 = tpu.memref_slice %arg4[%125, %c0_i32_294] : memref<16x128xf32, #tpu.memory_space<any>> -> memref<1x128xf32, #tpu.memory_space<any>>
    %c25_i32_295 = arith.constant 25 : i32
    %c0_i32_296 = arith.constant 0 : i32
    %423 = tpu.memref_slice %arg7[%c25_i32_295, %c0_i32_296] : memref<64x128xf32, #tpu.memory_space<vmem>> -> memref<1x128xf32, #tpu.memory_space<vmem>>
    %424 = tpu.memref_slice %arg9[%c25_i32_293] : memref<64x!tpu.dma_semaphore, #tpu.memory_space<semaphore_mem>> -> memref<1x!tpu.dma_semaphore, #tpu.memory_space<semaphore_mem>>
    %425 = tpu.memref_squeeze %424 : memref<1x!tpu.dma_semaphore, #tpu.memory_space<semaphore_mem>> -> memref<!tpu.dma_semaphore, #tpu.memory_space<semaphore_mem>>
    tpu.wait_dma2 semaphore(%425 : memref<!tpu.dma_semaphore, #tpu.memory_space<semaphore_mem>>) src(%422 : memref<1x128xf32, #tpu.memory_space<any>>) dst(%423 : memref<1x128xf32, #tpu.memory_space<vmem>>)
    %c26_i32_297 = arith.constant 26 : i32
    %c0_i32_298 = arith.constant 0 : i32
    %426 = tpu.memref_slice %arg4[%130, %c0_i32_298] : memref<16x128xf32, #tpu.memory_space<any>> -> memref<1x128xf32, #tpu.memory_space<any>>
    %c26_i32_299 = arith.constant 26 : i32
    %c0_i32_300 = arith.constant 0 : i32
    %427 = tpu.memref_slice %arg7[%c26_i32_299, %c0_i32_300] : memref<64x128xf32, #tpu.memory_space<vmem>> -> memref<1x128xf32, #tpu.memory_space<vmem>>
    %428 = tpu.memref_slice %arg9[%c26_i32_297] : memref<64x!tpu.dma_semaphore, #tpu.memory_space<semaphore_mem>> -> memref<1x!tpu.dma_semaphore, #tpu.memory_space<semaphore_mem>>
    %429 = tpu.memref_squeeze %428 : memref<1x!tpu.dma_semaphore, #tpu.memory_space<semaphore_mem>> -> memref<!tpu.dma_semaphore, #tpu.memory_space<semaphore_mem>>
    tpu.wait_dma2 semaphore(%429 : memref<!tpu.dma_semaphore, #tpu.memory_space<semaphore_mem>>) src(%426 : memref<1x128xf32, #tpu.memory_space<any>>) dst(%427 : memref<1x128xf32, #tpu.memory_space<vmem>>)
    %c27_i32_301 = arith.constant 27 : i32
    %c0_i32_302 = arith.constant 0 : i32
    %430 = tpu.memref_slice %arg4[%135, %c0_i32_302] : memref<16x128xf32, #tpu.memory_space<any>> -> memref<1x128xf32, #tpu.memory_space<any>>
    %c27_i32_303 = arith.constant 27 : i32
    %c0_i32_304 = arith.constant 0 : i32
    %431 = tpu.memref_slice %arg7[%c27_i32_303, %c0_i32_304] : memref<64x128xf32, #tpu.memory_space<vmem>> -> memref<1x128xf32, #tpu.memory_space<vmem>>
    %432 = tpu.memref_slice %arg9[%c27_i32_301] : memref<64x!tpu.dma_semaphore, #tpu.memory_space<semaphore_mem>> -> memref<1x!tpu.dma_semaphore, #tpu.memory_space<semaphore_mem>>
    %433 = tpu.memref_squeeze %432 : memref<1x!tpu.dma_semaphore, #tpu.memory_space<semaphore_mem>> -> memref<!tpu.dma_semaphore, #tpu.memory_space<semaphore_mem>>
    tpu.wait_dma2 semaphore(%433 : memref<!tpu.dma_semaphore, #tpu.memory_space<semaphore_mem>>) src(%430 : memref<1x128xf32, #tpu.memory_space<any>>) dst(%431 : memref<1x128xf32, #tpu.memory_space<vmem>>)
    %c28_i32_305 = arith.constant 28 : i32
    %c0_i32_306 = arith.constant 0 : i32
    %434 = tpu.memref_slice %arg4[%140, %c0_i32_306] : memref<16x128xf32, #tpu.memory_space<any>> -> memref<1x128xf32, #tpu.memory_space<any>>
    %c28_i32_307 = arith.constant 28 : i32
    %c0_i32_308 = arith.constant 0 : i32
    %435 = tpu.memref_slice %arg7[%c28_i32_307, %c0_i32_308] : memref<64x128xf32, #tpu.memory_space<vmem>> -> memref<1x128xf32, #tpu.memory_space<vmem>>
    %436 = tpu.memref_slice %arg9[%c28_i32_305] : memref<64x!tpu.dma_semaphore, #tpu.memory_space<semaphore_mem>> -> memref<1x!tpu.dma_semaphore, #tpu.memory_space<semaphore_mem>>
    %437 = tpu.memref_squeeze %436 : memref<1x!tpu.dma_semaphore, #tpu.memory_space<semaphore_mem>> -> memref<!tpu.dma_semaphore, #tpu.memory_space<semaphore_mem>>
    tpu.wait_dma2 semaphore(%437 : memref<!tpu.dma_semaphore, #tpu.memory_space<semaphore_mem>>) src(%434 : memref<1x128xf32, #tpu.memory_space<any>>) dst(%435 : memref<1x128xf32, #tpu.memory_space<vmem>>)
    %c29_i32_309 = arith.constant 29 : i32
    %c0_i32_310 = arith.constant 0 : i32
    %438 = tpu.memref_slice %arg4[%145, %c0_i32_310] : memref<16x128xf32, #tpu.memory_space<any>> -> memref<1x128xf32, #tpu.memory_space<any>>
    %c29_i32_311 = arith.constant 29 : i32
    %c0_i32_312 = arith.constant 0 : i32
    %439 = tpu.memref_slice %arg7[%c29_i32_311, %c0_i32_312] : memref<64x128xf32, #tpu.memory_space<vmem>> -> memref<1x128xf32, #tpu.memory_space<vmem>>
    %440 = tpu.memref_slice %arg9[%c29_i32_309] : memref<64x!tpu.dma_semaphore, #tpu.memory_space<semaphore_mem>> -> memref<1x!tpu.dma_semaphore, #tpu.memory_space<semaphore_mem>>
    %441 = tpu.memref_squeeze %440 : memref<1x!tpu.dma_semaphore, #tpu.memory_space<semaphore_mem>> -> memref<!tpu.dma_semaphore, #tpu.memory_space<semaphore_mem>>
    tpu.wait_dma2 semaphore(%441 : memref<!tpu.dma_semaphore, #tpu.memory_space<semaphore_mem>>) src(%438 : memref<1x128xf32, #tpu.memory_space<any>>) dst(%439 : memref<1x128xf32, #tpu.memory_space<vmem>>)
    %c30_i32_313 = arith.constant 30 : i32
    %c0_i32_314 = arith.constant 0 : i32
    %442 = tpu.memref_slice %arg4[%150, %c0_i32_314] : memref<16x128xf32, #tpu.memory_space<any>> -> memref<1x128xf32, #tpu.memory_space<any>>
    %c30_i32_315 = arith.constant 30 : i32
    %c0_i32_316 = arith.constant 0 : i32
    %443 = tpu.memref_slice %arg7[%c30_i32_315, %c0_i32_316] : memref<64x128xf32, #tpu.memory_space<vmem>> -> memref<1x128xf32, #tpu.memory_space<vmem>>
    %444 = tpu.memref_slice %arg9[%c30_i32_313] : memref<64x!tpu.dma_semaphore, #tpu.memory_space<semaphore_mem>> -> memref<1x!tpu.dma_semaphore, #tpu.memory_space<semaphore_mem>>
    %445 = tpu.memref_squeeze %444 : memref<1x!tpu.dma_semaphore, #tpu.memory_space<semaphore_mem>> -> memref<!tpu.dma_semaphore, #tpu.memory_space<semaphore_mem>>
    tpu.wait_dma2 semaphore(%445 : memref<!tpu.dma_semaphore, #tpu.memory_space<semaphore_mem>>) src(%442 : memref<1x128xf32, #tpu.memory_space<any>>) dst(%443 : memref<1x128xf32, #tpu.memory_space<vmem>>)
    %c31_i32_317 = arith.constant 31 : i32
    %c0_i32_318 = arith.constant 0 : i32
    %446 = tpu.memref_slice %arg4[%155, %c0_i32_318] : memref<16x128xf32, #tpu.memory_space<any>> -> memref<1x128xf32, #tpu.memory_space<any>>
    %c31_i32_319 = arith.constant 31 : i32
    %c0_i32_320 = arith.constant 0 : i32
    %447 = tpu.memref_slice %arg7[%c31_i32_319, %c0_i32_320] : memref<64x128xf32, #tpu.memory_space<vmem>> -> memref<1x128xf32, #tpu.memory_space<vmem>>
    %448 = tpu.memref_slice %arg9[%c31_i32_317] : memref<64x!tpu.dma_semaphore, #tpu.memory_space<semaphore_mem>> -> memref<1x!tpu.dma_semaphore, #tpu.memory_space<semaphore_mem>>
    %449 = tpu.memref_squeeze %448 : memref<1x!tpu.dma_semaphore, #tpu.memory_space<semaphore_mem>> -> memref<!tpu.dma_semaphore, #tpu.memory_space<semaphore_mem>>
    tpu.wait_dma2 semaphore(%449 : memref<!tpu.dma_semaphore, #tpu.memory_space<semaphore_mem>>) src(%446 : memref<1x128xf32, #tpu.memory_space<any>>) dst(%447 : memref<1x128xf32, #tpu.memory_space<vmem>>)
    %c32_i32_321 = arith.constant 32 : i32
    %c0_i32_322 = arith.constant 0 : i32
    %450 = tpu.memref_slice %arg4[%160, %c0_i32_322] : memref<16x128xf32, #tpu.memory_space<any>> -> memref<1x128xf32, #tpu.memory_space<any>>
    %c32_i32_323 = arith.constant 32 : i32
    %c0_i32_324 = arith.constant 0 : i32
    %451 = tpu.memref_slice %arg7[%c32_i32_323, %c0_i32_324] : memref<64x128xf32, #tpu.memory_space<vmem>> -> memref<1x128xf32, #tpu.memory_space<vmem>>
    %452 = tpu.memref_slice %arg9[%c32_i32_321] : memref<64x!tpu.dma_semaphore, #tpu.memory_space<semaphore_mem>> -> memref<1x!tpu.dma_semaphore, #tpu.memory_space<semaphore_mem>>
    %453 = tpu.memref_squeeze %452 : memref<1x!tpu.dma_semaphore, #tpu.memory_space<semaphore_mem>> -> memref<!tpu.dma_semaphore, #tpu.memory_space<semaphore_mem>>
    tpu.wait_dma2 semaphore(%453 : memref<!tpu.dma_semaphore, #tpu.memory_space<semaphore_mem>>) src(%450 : memref<1x128xf32, #tpu.memory_space<any>>) dst(%451 : memref<1x128xf32, #tpu.memory_space<vmem>>)
    %c33_i32_325 = arith.constant 33 : i32
    %c0_i32_326 = arith.constant 0 : i32
    %454 = tpu.memref_slice %arg4[%165, %c0_i32_326] : memref<16x128xf32, #tpu.memory_space<any>> -> memref<1x128xf32, #tpu.memory_space<any>>
    %c33_i32_327 = arith.constant 33 : i32
    %c0_i32_328 = arith.constant 0 : i32
    %455 = tpu.memref_slice %arg7[%c33_i32_327, %c0_i32_328] : memref<64x128xf32, #tpu.memory_space<vmem>> -> memref<1x128xf32, #tpu.memory_space<vmem>>
    %456 = tpu.memref_slice %arg9[%c33_i32_325] : memref<64x!tpu.dma_semaphore, #tpu.memory_space<semaphore_mem>> -> memref<1x!tpu.dma_semaphore, #tpu.memory_space<semaphore_mem>>
    %457 = tpu.memref_squeeze %456 : memref<1x!tpu.dma_semaphore, #tpu.memory_space<semaphore_mem>> -> memref<!tpu.dma_semaphore, #tpu.memory_space<semaphore_mem>>
    tpu.wait_dma2 semaphore(%457 : memref<!tpu.dma_semaphore, #tpu.memory_space<semaphore_mem>>) src(%454 : memref<1x128xf32, #tpu.memory_space<any>>) dst(%455 : memref<1x128xf32, #tpu.memory_space<vmem>>)
    %c34_i32_329 = arith.constant 34 : i32
    %c0_i32_330 = arith.constant 0 : i32
    %458 = tpu.memref_slice %arg4[%170, %c0_i32_330] : memref<16x128xf32, #tpu.memory_space<any>> -> memref<1x128xf32, #tpu.memory_space<any>>
    %c34_i32_331 = arith.constant 34 : i32
    %c0_i32_332 = arith.constant 0 : i32
    %459 = tpu.memref_slice %arg7[%c34_i32_331, %c0_i32_332] : memref<64x128xf32, #tpu.memory_space<vmem>> -> memref<1x128xf32, #tpu.memory_space<vmem>>
    %460 = tpu.memref_slice %arg9[%c34_i32_329] : memref<64x!tpu.dma_semaphore, #tpu.memory_space<semaphore_mem>> -> memref<1x!tpu.dma_semaphore, #tpu.memory_space<semaphore_mem>>
    %461 = tpu.memref_squeeze %460 : memref<1x!tpu.dma_semaphore, #tpu.memory_space<semaphore_mem>> -> memref<!tpu.dma_semaphore, #tpu.memory_space<semaphore_mem>>
    tpu.wait_dma2 semaphore(%461 : memref<!tpu.dma_semaphore, #tpu.memory_space<semaphore_mem>>) src(%458 : memref<1x128xf32, #tpu.memory_space<any>>) dst(%459 : memref<1x128xf32, #tpu.memory_space<vmem>>)
    %c35_i32_333 = arith.constant 35 : i32
    %c0_i32_334 = arith.constant 0 : i32
    %462 = tpu.memref_slice %arg4[%175, %c0_i32_334] : memref<16x128xf32, #tpu.memory_space<any>> -> memref<1x128xf32, #tpu.memory_space<any>>
    %c35_i32_335 = arith.constant 35 : i32
    %c0_i32_336 = arith.constant 0 : i32
    %463 = tpu.memref_slice %arg7[%c35_i32_335, %c0_i32_336] : memref<64x128xf32, #tpu.memory_space<vmem>> -> memref<1x128xf32, #tpu.memory_space<vmem>>
    %464 = tpu.memref_slice %arg9[%c35_i32_333] : memref<64x!tpu.dma_semaphore, #tpu.memory_space<semaphore_mem>> -> memref<1x!tpu.dma_semaphore, #tpu.memory_space<semaphore_mem>>
    %465 = tpu.memref_squeeze %464 : memref<1x!tpu.dma_semaphore, #tpu.memory_space<semaphore_mem>> -> memref<!tpu.dma_semaphore, #tpu.memory_space<semaphore_mem>>
    tpu.wait_dma2 semaphore(%465 : memref<!tpu.dma_semaphore, #tpu.memory_space<semaphore_mem>>) src(%462 : memref<1x128xf32, #tpu.memory_space<any>>) dst(%463 : memref<1x128xf32, #tpu.memory_space<vmem>>)
    %c36_i32_337 = arith.constant 36 : i32
    %c0_i32_338 = arith.constant 0 : i32
    %466 = tpu.memref_slice %arg4[%180, %c0_i32_338] : memref<16x128xf32, #tpu.memory_space<any>> -> memref<1x128xf32, #tpu.memory_space<any>>
    %c36_i32_339 = arith.constant 36 : i32
    %c0_i32_340 = arith.constant 0 : i32
    %467 = tpu.memref_slice %arg7[%c36_i32_339, %c0_i32_340] : memref<64x128xf32, #tpu.memory_space<vmem>> -> memref<1x128xf32, #tpu.memory_space<vmem>>
    %468 = tpu.memref_slice %arg9[%c36_i32_337] : memref<64x!tpu.dma_semaphore, #tpu.memory_space<semaphore_mem>> -> memref<1x!tpu.dma_semaphore, #tpu.memory_space<semaphore_mem>>
    %469 = tpu.memref_squeeze %468 : memref<1x!tpu.dma_semaphore, #tpu.memory_space<semaphore_mem>> -> memref<!tpu.dma_semaphore, #tpu.memory_space<semaphore_mem>>
    tpu.wait_dma2 semaphore(%469 : memref<!tpu.dma_semaphore, #tpu.memory_space<semaphore_mem>>) src(%466 : memref<1x128xf32, #tpu.memory_space<any>>) dst(%467 : memref<1x128xf32, #tpu.memory_space<vmem>>)
    %c37_i32_341 = arith.constant 37 : i32
    %c0_i32_342 = arith.constant 0 : i32
    %470 = tpu.memref_slice %arg4[%185, %c0_i32_342] : memref<16x128xf32, #tpu.memory_space<any>> -> memref<1x128xf32, #tpu.memory_space<any>>
    %c37_i32_343 = arith.constant 37 : i32
    %c0_i32_344 = arith.constant 0 : i32
    %471 = tpu.memref_slice %arg7[%c37_i32_343, %c0_i32_344] : memref<64x128xf32, #tpu.memory_space<vmem>> -> memref<1x128xf32, #tpu.memory_space<vmem>>
    %472 = tpu.memref_slice %arg9[%c37_i32_341] : memref<64x!tpu.dma_semaphore, #tpu.memory_space<semaphore_mem>> -> memref<1x!tpu.dma_semaphore, #tpu.memory_space<semaphore_mem>>
    %473 = tpu.memref_squeeze %472 : memref<1x!tpu.dma_semaphore, #tpu.memory_space<semaphore_mem>> -> memref<!tpu.dma_semaphore, #tpu.memory_space<semaphore_mem>>
    tpu.wait_dma2 semaphore(%473 : memref<!tpu.dma_semaphore, #tpu.memory_space<semaphore_mem>>) src(%470 : memref<1x128xf32, #tpu.memory_space<any>>) dst(%471 : memref<1x128xf32, #tpu.memory_space<vmem>>)
    %c38_i32_345 = arith.constant 38 : i32
    %c0_i32_346 = arith.constant 0 : i32
    %474 = tpu.memref_slice %arg4[%190, %c0_i32_346] : memref<16x128xf32, #tpu.memory_space<any>> -> memref<1x128xf32, #tpu.memory_space<any>>
    %c38_i32_347 = arith.constant 38 : i32
    %c0_i32_348 = arith.constant 0 : i32
    %475 = tpu.memref_slice %arg7[%c38_i32_347, %c0_i32_348] : memref<64x128xf32, #tpu.memory_space<vmem>> -> memref<1x128xf32, #tpu.memory_space<vmem>>
    %476 = tpu.memref_slice %arg9[%c38_i32_345] : memref<64x!tpu.dma_semaphore, #tpu.memory_space<semaphore_mem>> -> memref<1x!tpu.dma_semaphore, #tpu.memory_space<semaphore_mem>>
    %477 = tpu.memref_squeeze %476 : memref<1x!tpu.dma_semaphore, #tpu.memory_space<semaphore_mem>> -> memref<!tpu.dma_semaphore, #tpu.memory_space<semaphore_mem>>
    tpu.wait_dma2 semaphore(%477 : memref<!tpu.dma_semaphore, #tpu.memory_space<semaphore_mem>>) src(%474 : memref<1x128xf32, #tpu.memory_space<any>>) dst(%475 : memref<1x128xf32, #tpu.memory_space<vmem>>)
    %c39_i32_349 = arith.constant 39 : i32
    %c0_i32_350 = arith.constant 0 : i32
    %478 = tpu.memref_slice %arg4[%195, %c0_i32_350] : memref<16x128xf32, #tpu.memory_space<any>> -> memref<1x128xf32, #tpu.memory_space<any>>
    %c39_i32_351 = arith.constant 39 : i32
    %c0_i32_352 = arith.constant 0 : i32
    %479 = tpu.memref_slice %arg7[%c39_i32_351, %c0_i32_352] : memref<64x128xf32, #tpu.memory_space<vmem>> -> memref<1x128xf32, #tpu.memory_space<vmem>>
    %480 = tpu.memref_slice %arg9[%c39_i32_349] : memref<64x!tpu.dma_semaphore, #tpu.memory_space<semaphore_mem>> -> memref<1x!tpu.dma_semaphore, #tpu.memory_space<semaphore_mem>>
    %481 = tpu.memref_squeeze %480 : memref<1x!tpu.dma_semaphore, #tpu.memory_space<semaphore_mem>> -> memref<!tpu.dma_semaphore, #tpu.memory_space<semaphore_mem>>
    tpu.wait_dma2 semaphore(%481 : memref<!tpu.dma_semaphore, #tpu.memory_space<semaphore_mem>>) src(%478 : memref<1x128xf32, #tpu.memory_space<any>>) dst(%479 : memref<1x128xf32, #tpu.memory_space<vmem>>)
    %c40_i32_353 = arith.constant 40 : i32
    %c0_i32_354 = arith.constant 0 : i32
    %482 = tpu.memref_slice %arg4[%200, %c0_i32_354] : memref<16x128xf32, #tpu.memory_space<any>> -> memref<1x128xf32, #tpu.memory_space<any>>
    %c40_i32_355 = arith.constant 40 : i32
    %c0_i32_356 = arith.constant 0 : i32
    %483 = tpu.memref_slice %arg7[%c40_i32_355, %c0_i32_356] : memref<64x128xf32, #tpu.memory_space<vmem>> -> memref<1x128xf32, #tpu.memory_space<vmem>>
    %484 = tpu.memref_slice %arg9[%c40_i32_353] : memref<64x!tpu.dma_semaphore, #tpu.memory_space<semaphore_mem>> -> memref<1x!tpu.dma_semaphore, #tpu.memory_space<semaphore_mem>>
    %485 = tpu.memref_squeeze %484 : memref<1x!tpu.dma_semaphore, #tpu.memory_space<semaphore_mem>> -> memref<!tpu.dma_semaphore, #tpu.memory_space<semaphore_mem>>
    tpu.wait_dma2 semaphore(%485 : memref<!tpu.dma_semaphore, #tpu.memory_space<semaphore_mem>>) src(%482 : memref<1x128xf32, #tpu.memory_space<any>>) dst(%483 : memref<1x128xf32, #tpu.memory_space<vmem>>)
    %c41_i32_357 = arith.constant 41 : i32
    %c0_i32_358 = arith.constant 0 : i32
    %486 = tpu.memref_slice %arg4[%205, %c0_i32_358] : memref<16x128xf32, #tpu.memory_space<any>> -> memref<1x128xf32, #tpu.memory_space<any>>
    %c41_i32_359 = arith.constant 41 : i32
    %c0_i32_360 = arith.constant 0 : i32
    %487 = tpu.memref_slice %arg7[%c41_i32_359, %c0_i32_360] : memref<64x128xf32, #tpu.memory_space<vmem>> -> memref<1x128xf32, #tpu.memory_space<vmem>>
    %488 = tpu.memref_slice %arg9[%c41_i32_357] : memref<64x!tpu.dma_semaphore, #tpu.memory_space<semaphore_mem>> -> memref<1x!tpu.dma_semaphore, #tpu.memory_space<semaphore_mem>>
    %489 = tpu.memref_squeeze %488 : memref<1x!tpu.dma_semaphore, #tpu.memory_space<semaphore_mem>> -> memref<!tpu.dma_semaphore, #tpu.memory_space<semaphore_mem>>
    tpu.wait_dma2 semaphore(%489 : memref<!tpu.dma_semaphore, #tpu.memory_space<semaphore_mem>>) src(%486 : memref<1x128xf32, #tpu.memory_space<any>>) dst(%487 : memref<1x128xf32, #tpu.memory_space<vmem>>)
    %c42_i32_361 = arith.constant 42 : i32
    %c0_i32_362 = arith.constant 0 : i32
    %490 = tpu.memref_slice %arg4[%210, %c0_i32_362] : memref<16x128xf32, #tpu.memory_space<any>> -> memref<1x128xf32, #tpu.memory_space<any>>
    %c42_i32_363 = arith.constant 42 : i32
    %c0_i32_364 = arith.constant 0 : i32
    %491 = tpu.memref_slice %arg7[%c42_i32_363, %c0_i32_364] : memref<64x128xf32, #tpu.memory_space<vmem>> -> memref<1x128xf32, #tpu.memory_space<vmem>>
    %492 = tpu.memref_slice %arg9[%c42_i32_361] : memref<64x!tpu.dma_semaphore, #tpu.memory_space<semaphore_mem>> -> memref<1x!tpu.dma_semaphore, #tpu.memory_space<semaphore_mem>>
    %493 = tpu.memref_squeeze %492 : memref<1x!tpu.dma_semaphore, #tpu.memory_space<semaphore_mem>> -> memref<!tpu.dma_semaphore, #tpu.memory_space<semaphore_mem>>
    tpu.wait_dma2 semaphore(%493 : memref<!tpu.dma_semaphore, #tpu.memory_space<semaphore_mem>>) src(%490 : memref<1x128xf32, #tpu.memory_space<any>>) dst(%491 : memref<1x128xf32, #tpu.memory_space<vmem>>)
    %c43_i32_365 = arith.constant 43 : i32
    %c0_i32_366 = arith.constant 0 : i32
    %494 = tpu.memref_slice %arg4[%215, %c0_i32_366] : memref<16x128xf32, #tpu.memory_space<any>> -> memref<1x128xf32, #tpu.memory_space<any>>
    %c43_i32_367 = arith.constant 43 : i32
    %c0_i32_368 = arith.constant 0 : i32
    %495 = tpu.memref_slice %arg7[%c43_i32_367, %c0_i32_368] : memref<64x128xf32, #tpu.memory_space<vmem>> -> memref<1x128xf32, #tpu.memory_space<vmem>>
    %496 = tpu.memref_slice %arg9[%c43_i32_365] : memref<64x!tpu.dma_semaphore, #tpu.memory_space<semaphore_mem>> -> memref<1x!tpu.dma_semaphore, #tpu.memory_space<semaphore_mem>>
    %497 = tpu.memref_squeeze %496 : memref<1x!tpu.dma_semaphore, #tpu.memory_space<semaphore_mem>> -> memref<!tpu.dma_semaphore, #tpu.memory_space<semaphore_mem>>
    tpu.wait_dma2 semaphore(%497 : memref<!tpu.dma_semaphore, #tpu.memory_space<semaphore_mem>>) src(%494 : memref<1x128xf32, #tpu.memory_space<any>>) dst(%495 : memref<1x128xf32, #tpu.memory_space<vmem>>)
    %c44_i32_369 = arith.constant 44 : i32
    %c0_i32_370 = arith.constant 0 : i32
    %498 = tpu.memref_slice %arg4[%220, %c0_i32_370] : memref<16x128xf32, #tpu.memory_space<any>> -> memref<1x128xf32, #tpu.memory_space<any>>
    %c44_i32_371 = arith.constant 44 : i32
    %c0_i32_372 = arith.constant 0 : i32
    %499 = tpu.memref_slice %arg7[%c44_i32_371, %c0_i32_372] : memref<64x128xf32, #tpu.memory_space<vmem>> -> memref<1x128xf32, #tpu.memory_space<vmem>>
    %500 = tpu.memref_slice %arg9[%c44_i32_369] : memref<64x!tpu.dma_semaphore, #tpu.memory_space<semaphore_mem>> -> memref<1x!tpu.dma_semaphore, #tpu.memory_space<semaphore_mem>>
    %501 = tpu.memref_squeeze %500 : memref<1x!tpu.dma_semaphore, #tpu.memory_space<semaphore_mem>> -> memref<!tpu.dma_semaphore, #tpu.memory_space<semaphore_mem>>
    tpu.wait_dma2 semaphore(%501 : memref<!tpu.dma_semaphore, #tpu.memory_space<semaphore_mem>>) src(%498 : memref<1x128xf32, #tpu.memory_space<any>>) dst(%499 : memref<1x128xf32, #tpu.memory_space<vmem>>)
    %c45_i32_373 = arith.constant 45 : i32
    %c0_i32_374 = arith.constant 0 : i32
    %502 = tpu.memref_slice %arg4[%225, %c0_i32_374] : memref<16x128xf32, #tpu.memory_space<any>> -> memref<1x128xf32, #tpu.memory_space<any>>
    %c45_i32_375 = arith.constant 45 : i32
    %c0_i32_376 = arith.constant 0 : i32
    %503 = tpu.memref_slice %arg7[%c45_i32_375, %c0_i32_376] : memref<64x128xf32, #tpu.memory_space<vmem>> -> memref<1x128xf32, #tpu.memory_space<vmem>>
    %504 = tpu.memref_slice %arg9[%c45_i32_373] : memref<64x!tpu.dma_semaphore, #tpu.memory_space<semaphore_mem>> -> memref<1x!tpu.dma_semaphore, #tpu.memory_space<semaphore_mem>>
    %505 = tpu.memref_squeeze %504 : memref<1x!tpu.dma_semaphore, #tpu.memory_space<semaphore_mem>> -> memref<!tpu.dma_semaphore, #tpu.memory_space<semaphore_mem>>
    tpu.wait_dma2 semaphore(%505 : memref<!tpu.dma_semaphore, #tpu.memory_space<semaphore_mem>>) src(%502 : memref<1x128xf32, #tpu.memory_space<any>>) dst(%503 : memref<1x128xf32, #tpu.memory_space<vmem>>)
    %c46_i32_377 = arith.constant 46 : i32
    %c0_i32_378 = arith.constant 0 : i32
    %506 = tpu.memref_slice %arg4[%230, %c0_i32_378] : memref<16x128xf32, #tpu.memory_space<any>> -> memref<1x128xf32, #tpu.memory_space<any>>
    %c46_i32_379 = arith.constant 46 : i32
    %c0_i32_380 = arith.constant 0 : i32
    %507 = tpu.memref_slice %arg7[%c46_i32_379, %c0_i32_380] : memref<64x128xf32, #tpu.memory_space<vmem>> -> memref<1x128xf32, #tpu.memory_space<vmem>>
    %508 = tpu.memref_slice %arg9[%c46_i32_377] : memref<64x!tpu.dma_semaphore, #tpu.memory_space<semaphore_mem>> -> memref<1x!tpu.dma_semaphore, #tpu.memory_space<semaphore_mem>>
    %509 = tpu.memref_squeeze %508 : memref<1x!tpu.dma_semaphore, #tpu.memory_space<semaphore_mem>> -> memref<!tpu.dma_semaphore, #tpu.memory_space<semaphore_mem>>
    tpu.wait_dma2 semaphore(%509 : memref<!tpu.dma_semaphore, #tpu.memory_space<semaphore_mem>>) src(%506 : memref<1x128xf32, #tpu.memory_space<any>>) dst(%507 : memref<1x128xf32, #tpu.memory_space<vmem>>)
    %c47_i32_381 = arith.constant 47 : i32
    %c0_i32_382 = arith.constant 0 : i32
    %510 = tpu.memref_slice %arg4[%235, %c0_i32_382] : memref<16x128xf32, #tpu.memory_space<any>> -> memref<1x128xf32, #tpu.memory_space<any>>
    %c47_i32_383 = arith.constant 47 : i32
    %c0_i32_384 = arith.constant 0 : i32
    %511 = tpu.memref_slice %arg7[%c47_i32_383, %c0_i32_384] : memref<64x128xf32, #tpu.memory_space<vmem>> -> memref<1x128xf32, #tpu.memory_space<vmem>>
    %512 = tpu.memref_slice %arg9[%c47_i32_381] : memref<64x!tpu.dma_semaphore, #tpu.memory_space<semaphore_mem>> -> memref<1x!tpu.dma_semaphore, #tpu.memory_space<semaphore_mem>>
    %513 = tpu.memref_squeeze %512 : memref<1x!tpu.dma_semaphore, #tpu.memory_space<semaphore_mem>> -> memref<!tpu.dma_semaphore, #tpu.memory_space<semaphore_mem>>
    tpu.wait_dma2 semaphore(%513 : memref<!tpu.dma_semaphore, #tpu.memory_space<semaphore_mem>>) src(%510 : memref<1x128xf32, #tpu.memory_space<any>>) dst(%511 : memref<1x128xf32, #tpu.memory_space<vmem>>)
    %c48_i32_385 = arith.constant 48 : i32
    %c0_i32_386 = arith.constant 0 : i32
    %514 = tpu.memref_slice %arg4[%240, %c0_i32_386] : memref<16x128xf32, #tpu.memory_space<any>> -> memref<1x128xf32, #tpu.memory_space<any>>
    %c48_i32_387 = arith.constant 48 : i32
    %c0_i32_388 = arith.constant 0 : i32
    %515 = tpu.memref_slice %arg7[%c48_i32_387, %c0_i32_388] : memref<64x128xf32, #tpu.memory_space<vmem>> -> memref<1x128xf32, #tpu.memory_space<vmem>>
    %516 = tpu.memref_slice %arg9[%c48_i32_385] : memref<64x!tpu.dma_semaphore, #tpu.memory_space<semaphore_mem>> -> memref<1x!tpu.dma_semaphore, #tpu.memory_space<semaphore_mem>>
    %517 = tpu.memref_squeeze %516 : memref<1x!tpu.dma_semaphore, #tpu.memory_space<semaphore_mem>> -> memref<!tpu.dma_semaphore, #tpu.memory_space<semaphore_mem>>
    tpu.wait_dma2 semaphore(%517 : memref<!tpu.dma_semaphore, #tpu.memory_space<semaphore_mem>>) src(%514 : memref<1x128xf32, #tpu.memory_space<any>>) dst(%515 : memref<1x128xf32, #tpu.memory_space<vmem>>)
    %c49_i32_389 = arith.constant 49 : i32
    %c0_i32_390 = arith.constant 0 : i32
    %518 = tpu.memref_slice %arg4[%245, %c0_i32_390] : memref<16x128xf32, #tpu.memory_space<any>> -> memref<1x128xf32, #tpu.memory_space<any>>
    %c49_i32_391 = arith.constant 49 : i32
    %c0_i32_392 = arith.constant 0 : i32
    %519 = tpu.memref_slice %arg7[%c49_i32_391, %c0_i32_392] : memref<64x128xf32, #tpu.memory_space<vmem>> -> memref<1x128xf32, #tpu.memory_space<vmem>>
    %520 = tpu.memref_slice %arg9[%c49_i32_389] : memref<64x!tpu.dma_semaphore, #tpu.memory_space<semaphore_mem>> -> memref<1x!tpu.dma_semaphore, #tpu.memory_space<semaphore_mem>>
    %521 = tpu.memref_squeeze %520 : memref<1x!tpu.dma_semaphore, #tpu.memory_space<semaphore_mem>> -> memref<!tpu.dma_semaphore, #tpu.memory_space<semaphore_mem>>
    tpu.wait_dma2 semaphore(%521 : memref<!tpu.dma_semaphore, #tpu.memory_space<semaphore_mem>>) src(%518 : memref<1x128xf32, #tpu.memory_space<any>>) dst(%519 : memref<1x128xf32, #tpu.memory_space<vmem>>)
    %c50_i32_393 = arith.constant 50 : i32
    %c0_i32_394 = arith.constant 0 : i32
    %522 = tpu.memref_slice %arg4[%250, %c0_i32_394] : memref<16x128xf32, #tpu.memory_space<any>> -> memref<1x128xf32, #tpu.memory_space<any>>
    %c50_i32_395 = arith.constant 50 : i32
    %c0_i32_396 = arith.constant 0 : i32
    %523 = tpu.memref_slice %arg7[%c50_i32_395, %c0_i32_396] : memref<64x128xf32, #tpu.memory_space<vmem>> -> memref<1x128xf32, #tpu.memory_space<vmem>>
    %524 = tpu.memref_slice %arg9[%c50_i32_393] : memref<64x!tpu.dma_semaphore, #tpu.memory_space<semaphore_mem>> -> memref<1x!tpu.dma_semaphore, #tpu.memory_space<semaphore_mem>>
    %525 = tpu.memref_squeeze %524 : memref<1x!tpu.dma_semaphore, #tpu.memory_space<semaphore_mem>> -> memref<!tpu.dma_semaphore, #tpu.memory_space<semaphore_mem>>
    tpu.wait_dma2 semaphore(%525 : memref<!tpu.dma_semaphore, #tpu.memory_space<semaphore_mem>>) src(%522 : memref<1x128xf32, #tpu.memory_space<any>>) dst(%523 : memref<1x128xf32, #tpu.memory_space<vmem>>)
    %c51_i32_397 = arith.constant 51 : i32
    %c0_i32_398 = arith.constant 0 : i32
    %526 = tpu.memref_slice %arg4[%255, %c0_i32_398] : memref<16x128xf32, #tpu.memory_space<any>> -> memref<1x128xf32, #tpu.memory_space<any>>
    %c51_i32_399 = arith.constant 51 : i32
    %c0_i32_400 = arith.constant 0 : i32
    %527 = tpu.memref_slice %arg7[%c51_i32_399, %c0_i32_400] : memref<64x128xf32, #tpu.memory_space<vmem>> -> memref<1x128xf32, #tpu.memory_space<vmem>>
    %528 = tpu.memref_slice %arg9[%c51_i32_397] : memref<64x!tpu.dma_semaphore, #tpu.memory_space<semaphore_mem>> -> memref<1x!tpu.dma_semaphore, #tpu.memory_space<semaphore_mem>>
    %529 = tpu.memref_squeeze %528 : memref<1x!tpu.dma_semaphore, #tpu.memory_space<semaphore_mem>> -> memref<!tpu.dma_semaphore, #tpu.memory_space<semaphore_mem>>
    tpu.wait_dma2 semaphore(%529 : memref<!tpu.dma_semaphore, #tpu.memory_space<semaphore_mem>>) src(%526 : memref<1x128xf32, #tpu.memory_space<any>>) dst(%527 : memref<1x128xf32, #tpu.memory_space<vmem>>)
    %c52_i32_401 = arith.constant 52 : i32
    %c0_i32_402 = arith.constant 0 : i32
    %530 = tpu.memref_slice %arg4[%260, %c0_i32_402] : memref<16x128xf32, #tpu.memory_space<any>> -> memref<1x128xf32, #tpu.memory_space<any>>
    %c52_i32_403 = arith.constant 52 : i32
    %c0_i32_404 = arith.constant 0 : i32
    %531 = tpu.memref_slice %arg7[%c52_i32_403, %c0_i32_404] : memref<64x128xf32, #tpu.memory_space<vmem>> -> memref<1x128xf32, #tpu.memory_space<vmem>>
    %532 = tpu.memref_slice %arg9[%c52_i32_401] : memref<64x!tpu.dma_semaphore, #tpu.memory_space<semaphore_mem>> -> memref<1x!tpu.dma_semaphore, #tpu.memory_space<semaphore_mem>>
    %533 = tpu.memref_squeeze %532 : memref<1x!tpu.dma_semaphore, #tpu.memory_space<semaphore_mem>> -> memref<!tpu.dma_semaphore, #tpu.memory_space<semaphore_mem>>
    tpu.wait_dma2 semaphore(%533 : memref<!tpu.dma_semaphore, #tpu.memory_space<semaphore_mem>>) src(%530 : memref<1x128xf32, #tpu.memory_space<any>>) dst(%531 : memref<1x128xf32, #tpu.memory_space<vmem>>)
    %c53_i32_405 = arith.constant 53 : i32
    %c0_i32_406 = arith.constant 0 : i32
    %534 = tpu.memref_slice %arg4[%265, %c0_i32_406] : memref<16x128xf32, #tpu.memory_space<any>> -> memref<1x128xf32, #tpu.memory_space<any>>
    %c53_i32_407 = arith.constant 53 : i32
    %c0_i32_408 = arith.constant 0 : i32
    %535 = tpu.memref_slice %arg7[%c53_i32_407, %c0_i32_408] : memref<64x128xf32, #tpu.memory_space<vmem>> -> memref<1x128xf32, #tpu.memory_space<vmem>>
    %536 = tpu.memref_slice %arg9[%c53_i32_405] : memref<64x!tpu.dma_semaphore, #tpu.memory_space<semaphore_mem>> -> memref<1x!tpu.dma_semaphore, #tpu.memory_space<semaphore_mem>>
    %537 = tpu.memref_squeeze %536 : memref<1x!tpu.dma_semaphore, #tpu.memory_space<semaphore_mem>> -> memref<!tpu.dma_semaphore, #tpu.memory_space<semaphore_mem>>
    tpu.wait_dma2 semaphore(%537 : memref<!tpu.dma_semaphore, #tpu.memory_space<semaphore_mem>>) src(%534 : memref<1x128xf32, #tpu.memory_space<any>>) dst(%535 : memref<1x128xf32, #tpu.memory_space<vmem>>)
    %c54_i32_409 = arith.constant 54 : i32
    %c0_i32_410 = arith.constant 0 : i32
    %538 = tpu.memref_slice %arg4[%270, %c0_i32_410] : memref<16x128xf32, #tpu.memory_space<any>> -> memref<1x128xf32, #tpu.memory_space<any>>
    %c54_i32_411 = arith.constant 54 : i32
    %c0_i32_412 = arith.constant 0 : i32
    %539 = tpu.memref_slice %arg7[%c54_i32_411, %c0_i32_412] : memref<64x128xf32, #tpu.memory_space<vmem>> -> memref<1x128xf32, #tpu.memory_space<vmem>>
    %540 = tpu.memref_slice %arg9[%c54_i32_409] : memref<64x!tpu.dma_semaphore, #tpu.memory_space<semaphore_mem>> -> memref<1x!tpu.dma_semaphore, #tpu.memory_space<semaphore_mem>>
    %541 = tpu.memref_squeeze %540 : memref<1x!tpu.dma_semaphore, #tpu.memory_space<semaphore_mem>> -> memref<!tpu.dma_semaphore, #tpu.memory_space<semaphore_mem>>
    tpu.wait_dma2 semaphore(%541 : memref<!tpu.dma_semaphore, #tpu.memory_space<semaphore_mem>>) src(%538 : memref<1x128xf32, #tpu.memory_space<any>>) dst(%539 : memref<1x128xf32, #tpu.memory_space<vmem>>)
    %c55_i32_413 = arith.constant 55 : i32
    %c0_i32_414 = arith.constant 0 : i32
    %542 = tpu.memref_slice %arg4[%275, %c0_i32_414] : memref<16x128xf32, #tpu.memory_space<any>> -> memref<1x128xf32, #tpu.memory_space<any>>
    %c55_i32_415 = arith.constant 55 : i32
    %c0_i32_416 = arith.constant 0 : i32
    %543 = tpu.memref_slice %arg7[%c55_i32_415, %c0_i32_416] : memref<64x128xf32, #tpu.memory_space<vmem>> -> memref<1x128xf32, #tpu.memory_space<vmem>>
    %544 = tpu.memref_slice %arg9[%c55_i32_413] : memref<64x!tpu.dma_semaphore, #tpu.memory_space<semaphore_mem>> -> memref<1x!tpu.dma_semaphore, #tpu.memory_space<semaphore_mem>>
    %545 = tpu.memref_squeeze %544 : memref<1x!tpu.dma_semaphore, #tpu.memory_space<semaphore_mem>> -> memref<!tpu.dma_semaphore, #tpu.memory_space<semaphore_mem>>
    tpu.wait_dma2 semaphore(%545 : memref<!tpu.dma_semaphore, #tpu.memory_space<semaphore_mem>>) src(%542 : memref<1x128xf32, #tpu.memory_space<any>>) dst(%543 : memref<1x128xf32, #tpu.memory_space<vmem>>)
    %c56_i32_417 = arith.constant 56 : i32
    %c0_i32_418 = arith.constant 0 : i32
    %546 = tpu.memref_slice %arg4[%280, %c0_i32_418] : memref<16x128xf32, #tpu.memory_space<any>> -> memref<1x128xf32, #tpu.memory_space<any>>
    %c56_i32_419 = arith.constant 56 : i32
    %c0_i32_420 = arith.constant 0 : i32
    %547 = tpu.memref_slice %arg7[%c56_i32_419, %c0_i32_420] : memref<64x128xf32, #tpu.memory_space<vmem>> -> memref<1x128xf32, #tpu.memory_space<vmem>>
    %548 = tpu.memref_slice %arg9[%c56_i32_417] : memref<64x!tpu.dma_semaphore, #tpu.memory_space<semaphore_mem>> -> memref<1x!tpu.dma_semaphore, #tpu.memory_space<semaphore_mem>>
    %549 = tpu.memref_squeeze %548 : memref<1x!tpu.dma_semaphore, #tpu.memory_space<semaphore_mem>> -> memref<!tpu.dma_semaphore, #tpu.memory_space<semaphore_mem>>
    tpu.wait_dma2 semaphore(%549 : memref<!tpu.dma_semaphore, #tpu.memory_space<semaphore_mem>>) src(%546 : memref<1x128xf32, #tpu.memory_space<any>>) dst(%547 : memref<1x128xf32, #tpu.memory_space<vmem>>)
    %c57_i32_421 = arith.constant 57 : i32
    %c0_i32_422 = arith.constant 0 : i32
    %550 = tpu.memref_slice %arg4[%285, %c0_i32_422] : memref<16x128xf32, #tpu.memory_space<any>> -> memref<1x128xf32, #tpu.memory_space<any>>
    %c57_i32_423 = arith.constant 57 : i32
    %c0_i32_424 = arith.constant 0 : i32
    %551 = tpu.memref_slice %arg7[%c57_i32_423, %c0_i32_424] : memref<64x128xf32, #tpu.memory_space<vmem>> -> memref<1x128xf32, #tpu.memory_space<vmem>>
    %552 = tpu.memref_slice %arg9[%c57_i32_421] : memref<64x!tpu.dma_semaphore, #tpu.memory_space<semaphore_mem>> -> memref<1x!tpu.dma_semaphore, #tpu.memory_space<semaphore_mem>>
    %553 = tpu.memref_squeeze %552 : memref<1x!tpu.dma_semaphore, #tpu.memory_space<semaphore_mem>> -> memref<!tpu.dma_semaphore, #tpu.memory_space<semaphore_mem>>
    tpu.wait_dma2 semaphore(%553 : memref<!tpu.dma_semaphore, #tpu.memory_space<semaphore_mem>>) src(%550 : memref<1x128xf32, #tpu.memory_space<any>>) dst(%551 : memref<1x128xf32, #tpu.memory_space<vmem>>)
    %c58_i32_425 = arith.constant 58 : i32
    %c0_i32_426 = arith.constant 0 : i32
    %554 = tpu.memref_slice %arg4[%290, %c0_i32_426] : memref<16x128xf32, #tpu.memory_space<any>> -> memref<1x128xf32, #tpu.memory_space<any>>
    %c58_i32_427 = arith.constant 58 : i32
    %c0_i32_428 = arith.constant 0 : i32
    %555 = tpu.memref_slice %arg7[%c58_i32_427, %c0_i32_428] : memref<64x128xf32, #tpu.memory_space<vmem>> -> memref<1x128xf32, #tpu.memory_space<vmem>>
    %556 = tpu.memref_slice %arg9[%c58_i32_425] : memref<64x!tpu.dma_semaphore, #tpu.memory_space<semaphore_mem>> -> memref<1x!tpu.dma_semaphore, #tpu.memory_space<semaphore_mem>>
    %557 = tpu.memref_squeeze %556 : memref<1x!tpu.dma_semaphore, #tpu.memory_space<semaphore_mem>> -> memref<!tpu.dma_semaphore, #tpu.memory_space<semaphore_mem>>
    tpu.wait_dma2 semaphore(%557 : memref<!tpu.dma_semaphore, #tpu.memory_space<semaphore_mem>>) src(%554 : memref<1x128xf32, #tpu.memory_space<any>>) dst(%555 : memref<1x128xf32, #tpu.memory_space<vmem>>)
    %c59_i32_429 = arith.constant 59 : i32
    %c0_i32_430 = arith.constant 0 : i32
    %558 = tpu.memref_slice %arg4[%295, %c0_i32_430] : memref<16x128xf32, #tpu.memory_space<any>> -> memref<1x128xf32, #tpu.memory_space<any>>
    %c59_i32_431 = arith.constant 59 : i32
    %c0_i32_432 = arith.constant 0 : i32
    %559 = tpu.memref_slice %arg7[%c59_i32_431, %c0_i32_432] : memref<64x128xf32, #tpu.memory_space<vmem>> -> memref<1x128xf32, #tpu.memory_space<vmem>>
    %560 = tpu.memref_slice %arg9[%c59_i32_429] : memref<64x!tpu.dma_semaphore, #tpu.memory_space<semaphore_mem>> -> memref<1x!tpu.dma_semaphore, #tpu.memory_space<semaphore_mem>>
    %561 = tpu.memref_squeeze %560 : memref<1x!tpu.dma_semaphore, #tpu.memory_space<semaphore_mem>> -> memref<!tpu.dma_semaphore, #tpu.memory_space<semaphore_mem>>
    tpu.wait_dma2 semaphore(%561 : memref<!tpu.dma_semaphore, #tpu.memory_space<semaphore_mem>>) src(%558 : memref<1x128xf32, #tpu.memory_space<any>>) dst(%559 : memref<1x128xf32, #tpu.memory_space<vmem>>)
    %c60_i32_433 = arith.constant 60 : i32
    %c0_i32_434 = arith.constant 0 : i32
    %562 = tpu.memref_slice %arg4[%300, %c0_i32_434] : memref<16x128xf32, #tpu.memory_space<any>> -> memref<1x128xf32, #tpu.memory_space<any>>
    %c60_i32_435 = arith.constant 60 : i32
    %c0_i32_436 = arith.constant 0 : i32
    %563 = tpu.memref_slice %arg7[%c60_i32_435, %c0_i32_436] : memref<64x128xf32, #tpu.memory_space<vmem>> -> memref<1x128xf32, #tpu.memory_space<vmem>>
    %564 = tpu.memref_slice %arg9[%c60_i32_433] : memref<64x!tpu.dma_semaphore, #tpu.memory_space<semaphore_mem>> -> memref<1x!tpu.dma_semaphore, #tpu.memory_space<semaphore_mem>>
    %565 = tpu.memref_squeeze %564 : memref<1x!tpu.dma_semaphore, #tpu.memory_space<semaphore_mem>> -> memref<!tpu.dma_semaphore, #tpu.memory_space<semaphore_mem>>
    tpu.wait_dma2 semaphore(%565 : memref<!tpu.dma_semaphore, #tpu.memory_space<semaphore_mem>>) src(%562 : memref<1x128xf32, #tpu.memory_space<any>>) dst(%563 : memref<1x128xf32, #tpu.memory_space<vmem>>)
    %c61_i32_437 = arith.constant 61 : i32
    %c0_i32_438 = arith.constant 0 : i32
    %566 = tpu.memref_slice %arg4[%305, %c0_i32_438] : memref<16x128xf32, #tpu.memory_space<any>> -> memref<1x128xf32, #tpu.memory_space<any>>
    %c61_i32_439 = arith.constant 61 : i32
    %c0_i32_440 = arith.constant 0 : i32
    %567 = tpu.memref_slice %arg7[%c61_i32_439, %c0_i32_440] : memref<64x128xf32, #tpu.memory_space<vmem>> -> memref<1x128xf32, #tpu.memory_space<vmem>>
    %568 = tpu.memref_slice %arg9[%c61_i32_437] : memref<64x!tpu.dma_semaphore, #tpu.memory_space<semaphore_mem>> -> memref<1x!tpu.dma_semaphore, #tpu.memory_space<semaphore_mem>>
    %569 = tpu.memref_squeeze %568 : memref<1x!tpu.dma_semaphore, #tpu.memory_space<semaphore_mem>> -> memref<!tpu.dma_semaphore, #tpu.memory_space<semaphore_mem>>
    tpu.wait_dma2 semaphore(%569 : memref<!tpu.dma_semaphore, #tpu.memory_space<semaphore_mem>>) src(%566 : memref<1x128xf32, #tpu.memory_space<any>>) dst(%567 : memref<1x128xf32, #tpu.memory_space<vmem>>)
    %c62_i32_441 = arith.constant 62 : i32
    %c0_i32_442 = arith.constant 0 : i32
    %570 = tpu.memref_slice %arg4[%310, %c0_i32_442] : memref<16x128xf32, #tpu.memory_space<any>> -> memref<1x128xf32, #tpu.memory_space<any>>
    %c62_i32_443 = arith.constant 62 : i32
    %c0_i32_444 = arith.constant 0 : i32
    %571 = tpu.memref_slice %arg7[%c62_i32_443, %c0_i32_444] : memref<64x128xf32, #tpu.memory_space<vmem>> -> memref<1x128xf32, #tpu.memory_space<vmem>>
    %572 = tpu.memref_slice %arg9[%c62_i32_441] : memref<64x!tpu.dma_semaphore, #tpu.memory_space<semaphore_mem>> -> memref<1x!tpu.dma_semaphore, #tpu.memory_space<semaphore_mem>>
    %573 = tpu.memref_squeeze %572 : memref<1x!tpu.dma_semaphore, #tpu.memory_space<semaphore_mem>> -> memref<!tpu.dma_semaphore, #tpu.memory_space<semaphore_mem>>
    tpu.wait_dma2 semaphore(%573 : memref<!tpu.dma_semaphore, #tpu.memory_space<semaphore_mem>>) src(%570 : memref<1x128xf32, #tpu.memory_space<any>>) dst(%571 : memref<1x128xf32, #tpu.memory_space<vmem>>)
    %c63_i32_445 = arith.constant 63 : i32
    %c0_i32_446 = arith.constant 0 : i32
    %574 = tpu.memref_slice %arg4[%315, %c0_i32_446] : memref<16x128xf32, #tpu.memory_space<any>> -> memref<1x128xf32, #tpu.memory_space<any>>
    %c63_i32_447 = arith.constant 63 : i32
    %c0_i32_448 = arith.constant 0 : i32
    %575 = tpu.memref_slice %arg7[%c63_i32_447, %c0_i32_448] : memref<64x128xf32, #tpu.memory_space<vmem>> -> memref<1x128xf32, #tpu.memory_space<vmem>>
    %576 = tpu.memref_slice %arg9[%c63_i32_445] : memref<64x!tpu.dma_semaphore, #tpu.memory_space<semaphore_mem>> -> memref<1x!tpu.dma_semaphore, #tpu.memory_space<semaphore_mem>>
    %577 = tpu.memref_squeeze %576 : memref<1x!tpu.dma_semaphore, #tpu.memory_space<semaphore_mem>> -> memref<!tpu.dma_semaphore, #tpu.memory_space<semaphore_mem>>
    tpu.wait_dma2 semaphore(%577 : memref<!tpu.dma_semaphore, #tpu.memory_space<semaphore_mem>>) src(%574 : memref<1x128xf32, #tpu.memory_space<any>>) dst(%575 : memref<1x128xf32, #tpu.memory_space<vmem>>)
    %c0_449 = arith.constant 0 : index
    %c0_450 = arith.constant 0 : index
    %578 = vector.load %arg2[%c0_449, %c0_450] : memref<128x128xbf16, #tpu.memory_space<vmem>>, vector<128x128xbf16>
    %cst = arith.constant 0.000000e+00 : f32
    %579 = vector.broadcast %cst : f32 to vector<8x128xf32>
    %c0_451 = arith.constant 0 : index
    %c0_452 = arith.constant 0 : index
    %580 = vector.load %arg7[%c0_451, %c0_452] : memref<64x128xf32, #tpu.memory_space<vmem>>, vector<8x128xf32>
    %581 = arith.truncf %579 : vector<8x128xf32> to vector<8x128xbf16>
    %cst_453 = arith.constant dense<0.000000e+00> : vector<8x128xf32>
    %582 = tpu.matmul %581, %578, %cst_453 {dimension_numbers = #tpu.dot_dimension_numbers<[1], [0], [0], [1], [0, 0, 1, 1], [], []>} : vector<8x128xbf16>, vector<128x128xbf16>, vector<8x128xf32> -> vector<8x128xf32>
    %583 = arith.addf %580, %582 : vector<8x128xf32>
    %584 = math.tanh %583 : vector<8x128xf32>
    %c8_454 = arith.constant 8 : index
    %c0_455 = arith.constant 0 : index
    %585 = vector.load %arg7[%c8_454, %c0_455] : memref<64x128xf32, #tpu.memory_space<vmem>>, vector<8x128xf32>
    %586 = arith.truncf %584 : vector<8x128xf32> to vector<8x128xbf16>
    %cst_456 = arith.constant dense<0.000000e+00> : vector<8x128xf32>
    %587 = tpu.matmul %586, %578, %cst_456 {dimension_numbers = #tpu.dot_dimension_numbers<[1], [0], [0], [1], [0, 0, 1, 1], [], []>} : vector<8x128xbf16>, vector<128x128xbf16>, vector<8x128xf32> -> vector<8x128xf32>
    %588 = arith.addf %585, %587 : vector<8x128xf32>
    %589 = math.tanh %588 : vector<8x128xf32>
    %c16_457 = arith.constant 16 : index
    %c0_458 = arith.constant 0 : index
    %590 = vector.load %arg7[%c16_457, %c0_458] : memref<64x128xf32, #tpu.memory_space<vmem>>, vector<8x128xf32>
    %591 = arith.truncf %589 : vector<8x128xf32> to vector<8x128xbf16>
    %cst_459 = arith.constant dense<0.000000e+00> : vector<8x128xf32>
    %592 = tpu.matmul %591, %578, %cst_459 {dimension_numbers = #tpu.dot_dimension_numbers<[1], [0], [0], [1], [0, 0, 1, 1], [], []>} : vector<8x128xbf16>, vector<128x128xbf16>, vector<8x128xf32> -> vector<8x128xf32>
    %593 = arith.addf %590, %592 : vector<8x128xf32>
    %594 = math.tanh %593 : vector<8x128xf32>
    %c24_460 = arith.constant 24 : index
    %c0_461 = arith.constant 0 : index
    %595 = vector.load %arg7[%c24_460, %c0_461] : memref<64x128xf32, #tpu.memory_space<vmem>>, vector<8x128xf32>
    %596 = arith.truncf %594 : vector<8x128xf32> to vector<8x128xbf16>
    %cst_462 = arith.constant dense<0.000000e+00> : vector<8x128xf32>
    %597 = tpu.matmul %596, %578, %cst_462 {dimension_numbers = #tpu.dot_dimension_numbers<[1], [0], [0], [1], [0, 0, 1, 1], [], []>} : vector<8x128xbf16>, vector<128x128xbf16>, vector<8x128xf32> -> vector<8x128xf32>
    %598 = arith.addf %595, %597 : vector<8x128xf32>
    %599 = math.tanh %598 : vector<8x128xf32>
    %c32_463 = arith.constant 32 : index
    %c0_464 = arith.constant 0 : index
    %600 = vector.load %arg7[%c32_463, %c0_464] : memref<64x128xf32, #tpu.memory_space<vmem>>, vector<8x128xf32>
    %601 = arith.truncf %599 : vector<8x128xf32> to vector<8x128xbf16>
    %cst_465 = arith.constant dense<0.000000e+00> : vector<8x128xf32>
    %602 = tpu.matmul %601, %578, %cst_465 {dimension_numbers = #tpu.dot_dimension_numbers<[1], [0], [0], [1], [0, 0, 1, 1], [], []>} : vector<8x128xbf16>, vector<128x128xbf16>, vector<8x128xf32> -> vector<8x128xf32>
    %603 = arith.addf %600, %602 : vector<8x128xf32>
    %604 = math.tanh %603 : vector<8x128xf32>
    %c40_466 = arith.constant 40 : index
    %c0_467 = arith.constant 0 : index
    %605 = vector.load %arg7[%c40_466, %c0_467] : memref<64x128xf32, #tpu.memory_space<vmem>>, vector<8x128xf32>
    %606 = arith.truncf %604 : vector<8x128xf32> to vector<8x128xbf16>
    %cst_468 = arith.constant dense<0.000000e+00> : vector<8x128xf32>
    %607 = tpu.matmul %606, %578, %cst_468 {dimension_numbers = #tpu.dot_dimension_numbers<[1], [0], [0], [1], [0, 0, 1, 1], [], []>} : vector<8x128xbf16>, vector<128x128xbf16>, vector<8x128xf32> -> vector<8x128xf32>
    %608 = arith.addf %605, %607 : vector<8x128xf32>
    %609 = math.tanh %608 : vector<8x128xf32>
    %c48_469 = arith.constant 48 : index
    %c0_470 = arith.constant 0 : index
    %610 = vector.load %arg7[%c48_469, %c0_470] : memref<64x128xf32, #tpu.memory_space<vmem>>, vector<8x128xf32>
    %611 = arith.truncf %609 : vector<8x128xf32> to vector<8x128xbf16>
    %cst_471 = arith.constant dense<0.000000e+00> : vector<8x128xf32>
    %612 = tpu.matmul %611, %578, %cst_471 {dimension_numbers = #tpu.dot_dimension_numbers<[1], [0], [0], [1], [0, 0, 1, 1], [], []>} : vector<8x128xbf16>, vector<128x128xbf16>, vector<8x128xf32> -> vector<8x128xf32>
    %613 = arith.addf %610, %612 : vector<8x128xf32>
    %614 = math.tanh %613 : vector<8x128xf32>
    %c56_472 = arith.constant 56 : index
    %c0_473 = arith.constant 0 : index
    %615 = vector.load %arg7[%c56_472, %c0_473] : memref<64x128xf32, #tpu.memory_space<vmem>>, vector<8x128xf32>
    %616 = arith.truncf %614 : vector<8x128xf32> to vector<8x128xbf16>
    %cst_474 = arith.constant dense<0.000000e+00> : vector<8x128xf32>
    %617 = tpu.matmul %616, %578, %cst_474 {dimension_numbers = #tpu.dot_dimension_numbers<[1], [0], [0], [1], [0, 0, 1, 1], [], []>} : vector<8x128xbf16>, vector<128x128xbf16>, vector<8x128xf32> -> vector<8x128xf32>
    %618 = arith.addf %615, %617 : vector<8x128xf32>
    %619 = math.tanh %618 : vector<8x128xf32>
    %c0_i32_475 = arith.constant 0 : i32
    %620 = tpu.memref_slice %arg10[%c0_i32_475] : memref<1x!tpu.dma_semaphore, #tpu.memory_space<semaphore_mem>> -> memref<1x!tpu.dma_semaphore, #tpu.memory_space<semaphore_mem>>
    %621 = tpu.memref_squeeze %620 : memref<1x!tpu.dma_semaphore, #tpu.memory_space<semaphore_mem>> -> memref<!tpu.dma_semaphore, #tpu.memory_space<semaphore_mem>>
    tpu.wait_dma2 semaphore(%621 : memref<!tpu.dma_semaphore, #tpu.memory_space<semaphore_mem>>) src(%arg5 : memref<128x128xbf16, #tpu.memory_space<any>>) dst(%arg8 : memref<128x128xbf16, #tpu.memory_space<vmem>>)
    %622 = arith.truncf %619 : vector<8x128xf32> to vector<8x128xbf16>
    %c0_476 = arith.constant 0 : index
    %c0_477 = arith.constant 0 : index
    %623 = vector.load %arg8[%c0_476, %c0_477] : memref<128x128xbf16, #tpu.memory_space<vmem>>, vector<128x128xbf16>
    %cst_478 = arith.constant dense<0.000000e+00> : vector<8x128xf32>
    %624 = tpu.matmul %622, %623, %cst_478 {dimension_numbers = #tpu.dot_dimension_numbers<[1], [0], [0], [1], [0, 0, 1, 1], [], []>} : vector<8x128xbf16>, vector<128x128xbf16>, vector<8x128xf32> -> vector<8x128xf32>
    %c0_479 = arith.constant 0 : index
    %c0_480 = arith.constant 0 : index
    %625 = vector.load %arg3[%c0_479, %c0_480] : memref<1x128xf32, #tpu.memory_space<vmem>>, vector<1x128xf32>
    %626 = vector.broadcast %625 : vector<1x128xf32> to vector<8x128xf32>
    %627 = arith.addf %624, %626 : vector<8x128xf32>
    %c0_481 = arith.constant 0 : index
    %c0_482 = arith.constant 0 : index
    %628 = vector.load %arg6[%c0_481, %c0_482] : memref<8x128xf32, #tpu.memory_space<vmem>>, vector<8x128xf32>
    tpu.vector_store %arg6[%c0_481, %c0_482], %627 {strides = array<i32>} : memref<8x128xf32, #tpu.memory_space<vmem>>, vector<8x128xf32>,
    return
  }
  func.func @transform_0(%arg0: i32, %arg1: memref<64xi32, #tpu.memory_space<smem>>) -> (i32, i32) {
    %c0_i32 = arith.constant 0 : i32
    %c0_i32_0 = arith.constant 0 : i32
    %c0_i32_1 = arith.constant 0 : i32
    return %c0_i32, %c0_i32_0 : i32, i32
  }
  func.func @transform_1(%arg0: i32, %arg1: memref<64xi32, #tpu.memory_space<smem>>) -> (i32, i32) {
    %c0_i32 = arith.constant 0 : i32
    %c0_i32_0 = arith.constant 0 : i32
    %c0_i32_1 = arith.constant 0 : i32
    return %c0_i32, %c0_i32_0 : i32, i32
  }
  func.func @transform_4(%arg0: i32, %arg1: memref<64xi32, #tpu.memory_space<smem>>) -> (i32, i32) {
    %c0_i32 = arith.constant 0 : i32
    %c0_i32_0 = arith.constant 0 : i32
    %c0_i32_1 = arith.constant 0 : i32
    return %c0_i32, %c0_i32_0 : i32, i32
  }
}

</mosaic_0001>

<llo_original>
// kernel: tpu_custom_call.1
$region0: #{tpu_custom_call.1}
  #allocation0 [shape = 'u32[]', space=smem, size = 0x4, offset = 0x4, fixed_abs, tag = 'smem constant byte address 0x4 - core index']
  #allocation1 [shape = 'u32[144,128]{1,0:T(1,128)}', space=vmem, size = 0x12000, scoped, tag = 'internal scratch']
  #allocation2 [shape = 'f32[64,128]{1,0:T(8,128)}', space=vmem, size = 0x8000, scoped, tag = 'scratch operand']
  #allocation3 [shape = 'bf16[128,128]{1,0:T(8,128)(2,1)}', space=vmem, size = 0x8000, scoped, tag = 'scratch operand']
  #allocation4 [shape = 's32[64]{0}', space=sflag, size = 0x100, scoped, tag = 'scratch operand']
  #allocation5 [shape = 's32[1]{0}', space=sflag, size = 0x4, scoped, tag = 'scratch operand']
  #allocation6 [shape = 's32[1]{0}', space=sflag, size = 0x4, scoped, tag = 'scoped memory for tpu_custom_call.1']
  #allocation7 [shape = 'u8[512]{0}', space=smem, size = 0x200, scoped, tag = 'prefetched SMEM operand 0']
  #allocation12 [shape = 's32[]', space=sflag, size = 0x4, offset = 0, fixed_abs, tag = 'sflag constant byte address 0x0 - dummy sync flag']
  #allocation13 [shape = 's32[]', space=sflag, size = 0x4, offset = 0, fixed_abs, tag = 'sflag constant byte address 0x0 - dummy sync flag']
  #allocation14 [shape = 'u32[]', space=smem, size = 0x4, offset = 0x44, fixed_abs, tag = 'smem constant byte address 0x44 - assertion arg 0']
  #allocation15 [shape = 'u32[]', space=smem, size = 0x4, offset = 0x48, fixed_abs, tag = 'smem constant byte address 0x48 - assertion arg 1']
  #allocation16 [shape = 's32[]', space=sflag, size = 0x4, offset = 0, fixed_abs, tag = 'sflag constant byte address 0x0 - dummy sync flag']
  #allocation17 [shape = 's32[]', space=sflag, size = 0x4, offset = 0, fixed_abs, tag = 'sflag constant byte address 0x0 - dummy sync flag']
  #allocation18 [shape = 's32[]', space=sflag, size = 0x4, offset = 0, fixed_abs, tag = 'sflag constant byte address 0x0 - dummy sync flag']
  #allocation19 [shape = 's32[]', space=sflag, size = 0x4, offset = 0, fixed_abs, tag = 'sflag constant byte address 0x0 - dummy sync flag']
  #allocation20 [shape = 's32[]', space=sflag, size = 0x4, offset = 0, fixed_abs, tag = 'sflag constant byte address 0x0 - dummy sync flag']
  #allocation21 [shape = 's32[]', space=sflag, size = 0x4, offset = 0, fixed_abs, tag = 'sflag constant byte address 0x0 - dummy sync flag']
  #allocation22 [shape = 's32[]', space=sflag, size = 0x4, offset = 0, fixed_abs, tag = 'sflag constant byte address 0x0 - dummy sync flag']
  #allocation23 [shape = 's32[]', space=sflag, size = 0x4, offset = 0, fixed_abs, tag = 'sflag constant byte address 0x0 - dummy sync flag']
  #allocation24 [shape = 's32[]', space=sflag, size = 0x4, offset = 0, fixed_abs, tag = 'sflag constant byte address 0x0 - dummy sync flag']
  #allocation25 [shape = 's32[]', space=sflag, size = 0x4, offset = 0, fixed_abs, tag = 'sflag constant byte address 0x0 - dummy sync flag']
  #allocation26 [shape = 's32[]', space=sflag, size = 0x4, offset = 0, fixed_abs, tag = 'sflag constant byte address 0x0 - dummy sync flag']
  #allocation27 [shape = 's32[]', space=sflag, size = 0x4, offset = 0, fixed_abs, tag = 'sflag constant byte address 0x0 - dummy sync flag']
  #allocation28 [shape = 's32[]', space=sflag, size = 0x4, offset = 0, fixed_abs, tag = 'sflag constant byte address 0x0 - dummy sync flag']
  #allocation29 [shape = 's32[]', space=sflag, size = 0x4, offset = 0, fixed_abs, tag = 'sflag constant byte address 0x0 - dummy sync flag']
  #allocation30 [shape = 's32[]', space=sflag, size = 0x4, offset = 0, fixed_abs, tag = 'sflag constant byte address 0x0 - dummy sync flag']
  #allocation31 [shape = 's32[]', space=sflag, size = 0x4, offset = 0, fixed_abs, tag = 'sflag constant byte address 0x0 - dummy sync flag']
  #allocation32 [shape = 's32[]', space=sflag, size = 0x4, offset = 0, fixed_abs, tag = 'sflag constant byte address 0x0 - dummy sync flag']
  #allocation33 [shape = 's32[]', space=sflag, size = 0x4, offset = 0, fixed_abs, tag = 'sflag constant byte address 0x0 - dummy sync flag']
  #allocation34 [shape = 's32[]', space=sflag, size = 0x4, offset = 0, fixed_abs, tag = 'sflag constant byte address 0x0 - dummy sync flag']
  #allocation35 [shape = 's32[]', space=sflag, size = 0x4, offset = 0, fixed_abs, tag = 'sflag constant byte address 0x0 - dummy sync flag']
  #allocation36 [shape = 's32[]', space=sflag, size = 0x4, offset = 0, fixed_abs, tag = 'sflag constant byte address 0x0 - dummy sync flag']
  #allocation37 [shape = 's32[]', space=sflag, size = 0x4, offset = 0, fixed_abs, tag = 'sflag constant byte address 0x0 - dummy sync flag']
  #allocation38 [shape = 's32[]', space=sflag, size = 0x4, offset = 0, fixed_abs, tag = 'sflag constant byte address 0x0 - dummy sync flag']
  #allocation39 [shape = 's32[]', space=sflag, size = 0x4, offset = 0, fixed_abs, tag = 'sflag constant byte address 0x0 - dummy sync flag']
  #allocation40 [shape = 's32[]', space=sflag, size = 0x4, offset = 0, fixed_abs, tag = 'sflag constant byte address 0x0 - dummy sync flag']
  #allocation41 [shape = 's32[]', space=sflag, size = 0x4, offset = 0, fixed_abs, tag = 'sflag constant byte address 0x0 - dummy sync flag']
  #allocation42 [shape = 's32[]', space=sflag, size = 0x4, offset = 0, fixed_abs, tag = 'sflag constant byte address 0x0 - dummy sync flag']
  #allocation43 [shape = 's32[]', space=sflag, size = 0x4, offset = 0, fixed_abs, tag = 'sflag constant byte address 0x0 - dummy sync flag']
  #allocation44 [shape = 's32[]', space=sflag, size = 0x4, offset = 0, fixed_abs, tag = 'sflag constant byte address 0x0 - dummy sync flag']
  #allocation45 [shape = 's32[]', space=sflag, size = 0x4, offset = 0, fixed_abs, tag = 'sflag constant byte address 0x0 - dummy sync flag']
  #allocation46 [shape = 's32[]', space=sflag, size = 0x4, offset = 0, fixed_abs, tag = 'sflag constant byte address 0x0 - dummy sync flag']
  #allocation47 [shape = 's32[]', space=sflag, size = 0x4, offset = 0, fixed_abs, tag = 'sflag constant byte address 0x0 - dummy sync flag']
  #allocation48 [shape = 's32[]', space=sflag, size = 0x4, offset = 0, fixed_abs, tag = 'sflag constant byte address 0x0 - dummy sync flag']
  #allocation49 [shape = 's32[]', space=sflag, size = 0x4, offset = 0, fixed_abs, tag = 'sflag constant byte address 0x0 - dummy sync flag']
  #allocation50 [shape = 's32[]', space=sflag, size = 0x4, offset = 0, fixed_abs, tag = 'sflag constant byte address 0x0 - dummy sync flag']
  #allocation51 [shape = 's32[]', space=sflag, size = 0x4, offset = 0, fixed_abs, tag = 'sflag constant byte address 0x0 - dummy sync flag']
  #allocation52 [shape = 's32[]', space=sflag, size = 0x4, offset = 0, fixed_abs, tag = 'sflag constant byte address 0x0 - dummy sync flag']
  #allocation53 [shape = 's32[]', space=sflag, size = 0x4, offset = 0, fixed_abs, tag = 'sflag constant byte address 0x0 - dummy sync flag']
  #allocation54 [shape = 's32[]', space=sflag, size = 0x4, offset = 0, fixed_abs, tag = 'sflag constant byte address 0x0 - dummy sync flag']
  #allocation55 [shape = 's32[]', space=sflag, size = 0x4, offset = 0, fixed_abs, tag = 'sflag constant byte address 0x0 - dummy sync flag']
  #allocation56 [shape = 's32[]', space=sflag, size = 0x4, offset = 0, fixed_abs, tag = 'sflag constant byte address 0x0 - dummy sync flag']
  #allocation57 [shape = 's32[]', space=sflag, size = 0x4, offset = 0, fixed_abs, tag = 'sflag constant byte address 0x0 - dummy sync flag']
  #allocation58 [shape = 's32[]', space=sflag, size = 0x4, offset = 0, fixed_abs, tag = 'sflag constant byte address 0x0 - dummy sync flag']
  #allocation59 [shape = 's32[]', space=sflag, size = 0x4, offset = 0, fixed_abs, tag = 'sflag constant byte address 0x0 - dummy sync flag']
  #allocation60 [shape = 's32[]', space=sflag, size = 0x4, offset = 0, fixed_abs, tag = 'sflag constant byte address 0x0 - dummy sync flag']
  #allocation61 [shape = 's32[]', space=sflag, size = 0x4, offset = 0, fixed_abs, tag = 'sflag constant byte address 0x0 - dummy sync flag']
  #allocation62 [shape = 's32[]', space=sflag, size = 0x4, offset = 0, fixed_abs, tag = 'sflag constant byte address 0x0 - dummy sync flag']
  #allocation63 [shape = 's32[]', space=sflag, size = 0x4, offset = 0, fixed_abs, tag = 'sflag constant byte address 0x0 - dummy sync flag']
  #allocation64 [shape = 's32[]', space=sflag, size = 0x4, offset = 0, fixed_abs, tag = 'sflag constant byte address 0x0 - dummy sync flag']
  #allocation65 [shape = 's32[]', space=sflag, size = 0x4, offset = 0, fixed_abs, tag = 'sflag constant byte address 0x0 - dummy sync flag']
  #allocation66 [shape = 's32[]', space=sflag, size = 0x4, offset = 0, fixed_abs, tag = 'sflag constant byte address 0x0 - dummy sync flag']
  #allocation67 [shape = 's32[]', space=sflag, size = 0x4, offset = 0, fixed_abs, tag = 'sflag constant byte address 0x0 - dummy sync flag']
  #allocation68 [shape = 's32[]', space=sflag, size = 0x4, offset = 0, fixed_abs, tag = 'sflag constant byte address 0x0 - dummy sync flag']
  #allocation69 [shape = 's32[]', space=sflag, size = 0x4, offset = 0, fixed_abs, tag = 'sflag constant byte address 0x0 - dummy sync flag']
  #allocation70 [shape = 's32[]', space=sflag, size = 0x4, offset = 0, fixed_abs, tag = 'sflag constant byte address 0x0 - dummy sync flag']
  #allocation71 [shape = 's32[]', space=sflag, size = 0x4, offset = 0, fixed_abs, tag = 'sflag constant byte address 0x0 - dummy sync flag']
  #allocation72 [shape = 's32[]', space=sflag, size = 0x4, offset = 0, fixed_abs, tag = 'sflag constant byte address 0x0 - dummy sync flag']
  #allocation73 [shape = 's32[]', space=sflag, size = 0x4, offset = 0, fixed_abs, tag = 'sflag constant byte address 0x0 - dummy sync flag']
  #allocation74 [shape = 's32[]', space=sflag, size = 0x4, offset = 0, fixed_abs, tag = 'sflag constant byte address 0x0 - dummy sync flag']
  #allocation75 [shape = 's32[]', space=sflag, size = 0x4, offset = 0, fixed_abs, tag = 'sflag constant byte address 0x0 - dummy sync flag']
  #allocation76 [shape = 's32[]', space=sflag, size = 0x4, offset = 0, fixed_abs, tag = 'sflag constant byte address 0x0 - dummy sync flag']
  #allocation77 [shape = 's32[]', space=sflag, size = 0x4, offset = 0, fixed_abs, tag = 'sflag constant byte address 0x0 - dummy sync flag']
  #allocation78 [shape = 's32[]', space=sflag, size = 0x4, offset = 0, fixed_abs, tag = 'sflag constant byte address 0x0 - dummy sync flag']
  #allocation79 [shape = 's32[]', space=sflag, size = 0x4, offset = 0, fixed_abs, tag = 'sflag constant byte address 0x0 - dummy sync flag']
  #allocation80 [shape = 's32[]', space=sflag, size = 0x4, offset = 0, fixed_abs, tag = 'sflag constant byte address 0x0 - dummy sync flag']
  #allocation81 [shape = 's32[]', space=sflag, size = 0x4, offset = 0, fixed_abs, tag = 'sflag constant byte address 0x0 - dummy sync flag']
  #allocation82 [shape = 's32[]', space=sflag, size = 0x4, offset = 0, fixed_abs, tag = 'sflag constant byte address 0x0 - dummy sync flag']
  #allocation83 [shape = 's32[]', space=sflag, size = 0x4, offset = 0, fixed_abs, tag = 'sflag constant byte address 0x0 - dummy sync flag']
  #allocation84 [shape = 's32[]', space=sflag, size = 0x4, offset = 0, fixed_abs, tag = 'sflag constant byte address 0x0 - dummy sync flag']
  #allocation85 [shape = 's32[]', space=sflag, size = 0x4, offset = 0, fixed_abs, tag = 'sflag constant byte address 0x0 - dummy sync flag']
  #allocation86 [shape = 's32[]', space=sflag, size = 0x4, offset = 0, fixed_abs, tag = 'sflag constant byte address 0x0 - dummy sync flag']
  #allocation87 [shape = 's32[]', space=sflag, size = 0x4, offset = 0, fixed_abs, tag = 'sflag constant byte address 0x0 - dummy sync flag']
  #allocation88 [shape = 's32[]', space=sflag, size = 0x4, offset = 0, fixed_abs, tag = 'sflag constant byte address 0x0 - dummy sync flag']
  #allocation89 [shape = 's32[]', space=sflag, size = 0x4, offset = 0, fixed_abs, tag = 'sflag constant byte address 0x0 - dummy sync flag']
  #allocation90 [shape = 's32[]', space=sflag, size = 0x4, offset = 0, fixed_abs, tag = 'sflag constant byte address 0x0 - dummy sync flag']
  #allocation91 [shape = 's32[]', space=sflag, size = 0x4, offset = 0, fixed_abs, tag = 'sflag constant byte address 0x0 - dummy sync flag']
  #allocation92 [shape = 's32[]', space=sflag, size = 0x4, offset = 0, fixed_abs, tag = 'sflag constant byte address 0x0 - dummy sync flag']
  #allocation93 [shape = 's32[]', space=sflag, size = 0x4, offset = 0, fixed_abs, tag = 'sflag constant byte address 0x0 - dummy sync flag']
  #allocation94 [shape = 's32[]', space=sflag, size = 0x4, offset = 0, fixed_abs, tag = 'sflag constant byte address 0x0 - dummy sync flag']
  #allocation95 [shape = 's32[]', space=sflag, size = 0x4, offset = 0, fixed_abs, tag = 'sflag constant byte address 0x0 - dummy sync flag']
  #allocation96 [shape = 's32[]', space=sflag, size = 0x4, offset = 0, fixed_abs, tag = 'sflag constant byte address 0x0 - dummy sync flag']
  #allocation97 [shape = 's32[]', space=sflag, size = 0x4, offset = 0, fixed_abs, tag = 'sflag constant byte address 0x0 - dummy sync flag']
  #allocation98 [shape = 's32[]', space=sflag, size = 0x4, offset = 0, fixed_abs, tag = 'sflag constant byte address 0x0 - dummy sync flag']
  #allocation99 [shape = 's32[]', space=sflag, size = 0x4, offset = 0, fixed_abs, tag = 'sflag constant byte address 0x0 - dummy sync flag']
  #allocation100 [shape = 's32[]', space=sflag, size = 0x4, offset = 0, fixed_abs, tag = 'sflag constant byte address 0x0 - dummy sync flag']
  #allocation101 [shape = 's32[]', space=sflag, size = 0x4, offset = 0, fixed_abs, tag = 'sflag constant byte address 0x0 - dummy sync flag']
  #allocation102 [shape = 's32[]', space=sflag, size = 0x4, offset = 0, fixed_abs, tag = 'sflag constant byte address 0x0 - dummy sync flag']
  #allocation103 [shape = 's32[]', space=sflag, size = 0x4, offset = 0, fixed_abs, tag = 'sflag constant byte address 0x0 - dummy sync flag']
  #allocation104 [shape = 's32[]', space=sflag, size = 0x4, offset = 0, fixed_abs, tag = 'sflag constant byte address 0x0 - dummy sync flag']
  #allocation105 [shape = 's32[]', space=sflag, size = 0x4, offset = 0, fixed_abs, tag = 'sflag constant byte address 0x0 - dummy sync flag']
  #allocation106 [shape = 's32[]', space=sflag, size = 0x4, offset = 0, fixed_abs, tag = 'sflag constant byte address 0x0 - dummy sync flag']
  #allocation107 [shape = 's32[]', space=sflag, size = 0x4, offset = 0, fixed_abs, tag = 'sflag constant byte address 0x0 - dummy sync flag']
  #allocation108 [shape = 's32[]', space=sflag, size = 0x4, offset = 0, fixed_abs, tag = 'sflag constant byte address 0x0 - dummy sync flag']
  #allocation109 [shape = 's32[]', space=sflag, size = 0x4, offset = 0, fixed_abs, tag = 'sflag constant byte address 0x0 - dummy sync flag']
  #allocation110 [shape = 's32[]', space=sflag, size = 0x4, offset = 0, fixed_abs, tag = 'sflag constant byte address 0x0 - dummy sync flag']
  #allocation111 [shape = 's32[]', space=sflag, size = 0x4, offset = 0, fixed_abs, tag = 'sflag constant byte address 0x0 - dummy sync flag']
  #allocation112 [shape = 's32[]', space=sflag, size = 0x4, offset = 0, fixed_abs, tag = 'sflag constant byte address 0x0 - dummy sync flag']
  #allocation113 [shape = 's32[]', space=sflag, size = 0x4, offset = 0, fixed_abs, tag = 'sflag constant byte address 0x0 - dummy sync flag']
  #allocation114 [shape = 's32[]', space=sflag, size = 0x4, offset = 0, fixed_abs, tag = 'sflag constant byte address 0x0 - dummy sync flag']
  #allocation115 [shape = 's32[]', space=sflag, size = 0x4, offset = 0, fixed_abs, tag = 'sflag constant byte address 0x0 - dummy sync flag']
  #allocation116 [shape = 's32[]', space=sflag, size = 0x4, offset = 0, fixed_abs, tag = 'sflag constant byte address 0x0 - dummy sync flag']
  #allocation117 [shape = 's32[]', space=sflag, size = 0x4, offset = 0, fixed_abs, tag = 'sflag constant byte address 0x0 - dummy sync flag']
  #allocation118 [shape = 's32[]', space=sflag, size = 0x4, offset = 0, fixed_abs, tag = 'sflag constant byte address 0x0 - dummy sync flag']
  #allocation119 [shape = 's32[]', space=sflag, size = 0x4, offset = 0, fixed_abs, tag = 'sflag constant byte address 0x0 - dummy sync flag']
  #allocation120 [shape = 's32[]', space=sflag, size = 0x4, offset = 0, fixed_abs, tag = 'sflag constant byte address 0x0 - dummy sync flag']
  #allocation121 [shape = 's32[]', space=sflag, size = 0x4, offset = 0, fixed_abs, tag = 'sflag constant byte address 0x0 - dummy sync flag']
  #allocation122 [shape = 's32[]', space=sflag, size = 0x4, offset = 0, fixed_abs, tag = 'sflag constant byte address 0x0 - dummy sync flag']
  #allocation123 [shape = 's32[]', space=sflag, size = 0x4, offset = 0, fixed_abs, tag = 'sflag constant byte address 0x0 - dummy sync flag']
  #allocation124 [shape = 's32[]', space=sflag, size = 0x4, offset = 0, fixed_abs, tag = 'sflag constant byte address 0x0 - dummy sync flag']
  #allocation125 [shape = 's32[]', space=sflag, size = 0x4, offset = 0, fixed_abs, tag = 'sflag constant byte address 0x0 - dummy sync flag']
  #allocation126 [shape = 's32[]', space=sflag, size = 0x4, offset = 0, fixed_abs, tag = 'sflag constant byte address 0x0 - dummy sync flag']
  #allocation127 [shape = 's32[]', space=sflag, size = 0x4, offset = 0, fixed_abs, tag = 'sflag constant byte address 0x0 - dummy sync flag']
  #allocation128 [shape = 's32[]', space=sflag, size = 0x4, offset = 0, fixed_abs, tag = 'sflag constant byte address 0x0 - dummy sync flag']
  #allocation129 [shape = 's32[]', space=sflag, size = 0x4, offset = 0, fixed_abs, tag = 'sflag constant byte address 0x0 - dummy sync flag']
  #allocation130 [shape = 's32[]', space=sflag, size = 0x4, offset = 0, fixed_abs, tag = 'sflag constant byte address 0x0 - dummy sync flag']
  #allocation131 [shape = 's32[]', space=sflag, size = 0x4, offset = 0, fixed_abs, tag = 'sflag constant byte address 0x0 - dummy sync flag']
  #allocation132 [shape = 's32[]', space=sflag, size = 0x4, offset = 0, fixed_abs, tag = 'sflag constant byte address 0x0 - dummy sync flag']
  #allocation133 [shape = 's32[]', space=sflag, size = 0x4, offset = 0, fixed_abs, tag = 'sflag constant byte address 0x0 - dummy sync flag']
  #allocation134 [shape = 's32[]', space=sflag, size = 0x4, offset = 0, fixed_abs, tag = 'sflag constant byte address 0x0 - dummy sync flag']
  #allocation135 [shape = 's32[]', space=sflag, size = 0x4, offset = 0, fixed_abs, tag = 'sflag constant byte address 0x0 - dummy sync flag']
  #allocation136 [shape = 's32[]', space=sflag, size = 0x4, offset = 0, fixed_abs, tag = 'sflag constant byte address 0x0 - dummy sync flag']
  #allocation137 [shape = 's32[]', space=sflag, size = 0x4, offset = 0, fixed_abs, tag = 'sflag constant byte address 0x0 - dummy sync flag']
  #allocation138 [shape = 's32[]', space=sflag, size = 0x4, offset = 0, fixed_abs, tag = 'sflag constant byte address 0x0 - dummy sync flag']
  #allocation139 [shape = 's32[]', space=sflag, size = 0x4, offset = 0, fixed_abs, tag = 'sflag constant byte address 0x0 - dummy sync flag']
  #allocation140 [shape = 's32[]', space=sflag, size = 0x4, offset = 0, fixed_abs, tag = 'sflag constant byte address 0x0 - dummy sync flag']
  #allocation141 [shape = 's32[]', space=sflag, size = 0x4, offset = 0, fixed_abs, tag = 'sflag constant byte address 0x0 - dummy sync flag']
  #allocation142 [shape = 's32[]', space=sflag, size = 0x4, offset = 0, fixed_abs, tag = 'sflag constant byte address 0x0 - dummy sync flag']
  #allocation143 [shape = 's32[]', space=sflag, size = 0x4, offset = 0, fixed_abs, tag = 'sflag constant byte address 0x0 - dummy sync flag']
  %s0 = inlined_call_operand.hbm [shape: s32[64], index: 0, kind: input, shape index: {}]
  %s1 = inlined_call_operand.hbm [shape: bf16[128,128], index: 1, kind: input, shape index: {}]
  %s2 = inlined_call_operand.vmem [shape: f32[1,128], index: 2, kind: input, shape index: {}]
  %s3 = inlined_call_operand.hbm [shape: f32[16,128], index: 3, kind: input, shape index: {}]
  %s4 = inlined_call_operand.hbm [shape: bf16[128,128], index: 4, kind: input, shape index: {}]
  %s5 = inlined_call_operand.hbm [shape: f32[8,128], index: 5, kind: output, shape index: {}]
  %s6 = sld [smem:[#allocation0]]
  $region282: #{tpu_custom_call.1} parent=0
    _
  %s8 = ssub.s32 1, %s6
  %s9 = scalar_select 0, %s8, %s6
  %11 = dma.hbm_to_smem %s0, 16, [#allocation7], [#allocation6]
  %12 = dma.done [#allocation6], 16
  %13 = sfence
  $region1: #{tpu_custom_call.1} parent=0
    #allocation8 [shape = 'u8[32768]{0}', space=vmem, size = 0x8000, scoped, tag = 'input window, operand 1, single buffered']
    #allocation9 [shape = 's32[1]{0}', space=sflag, size = 0x4, scoped, tag = 'scoped memory for tpu_custom_call.1']
    #allocation10 [shape = 's32[1]{0}', space=sflag, size = 0x4, scoped, tag = 'scoped memory for tpu_custom_call.1']
    #allocation11 [shape = 'u8[4096]{0}', space=vmem, size = 0x1000, scoped, tag = 'output window, operand 0, single buffered']
    %14 = vsyncpa [#allocation9], 0
    %15 = vsyncpa [#allocation10], 0
    // Predicated region
    $region2: #{tpu_custom_call.1} parent=1 // pred_check
      _
    $region3: #{tpu_custom_call.1} parent=1 // pred_check_branch
      %17 = sbr.rel (0) target = $region5
    $region4: #{tpu_custom_call.1} parent=1 // pred_region
      %s19 = ssub.s32 1024, 1024
      %20 = vsyncadd [#allocation9], %s19
      %s21 = sshll.u32 [#allocation8], 4
      %s22 = int_to_ptr.vmem [resolvable:$true] %s21
      %27 = dma.hbm_to_vmem [thread:$0]  %s1, 1024, %s22, [#allocation9], 64, 64, 4
    $region5: #{tpu_custom_call.1} parent=1 // pred_fallthru
      _
    // Predicated region
    $region6: #{tpu_custom_call.1} parent=1 // pred_check
      _
    $region7: #{tpu_custom_call.1} parent=1 // pred_check_branch
      %29 = sbr.rel (0) target = $region9
    $region8: #{tpu_custom_call.1} parent=1 // pred_region
      _
    $region9: #{tpu_custom_call.1} parent=1 // pred_fallthru
      _
    // Predicated region
    $region10: #{tpu_custom_call.1} parent=1 // pred_check
      _
    $region11: #{tpu_custom_call.1} parent=1 // pred_check_branch
      %31 = sbr.rel (0) target = $region13
    $region12: #{tpu_custom_call.1} parent=1 // pred_region
      %32 = dma.done [#allocation9], 1024
    $region13: #{tpu_custom_call.1} parent=1 // pred_fallthru
      _
    %s34 = sld [smem:[#allocation7]]
    %s35 = smul.addr %s34, 16
    %s36 = scalar_lea.hbm %s3, %s35
    // Predicated region
    $region14: #{tpu_custom_call.1} parent=1 // pred_check
      _
    $region15: #{tpu_custom_call.1} parent=1 // pred_check_branch
      %38 = sbr.rel target = $region17
    $region16: #{tpu_custom_call.1} parent=1 // pred_region
      %39 = sst [smem:[#allocation14]] [#allocation13]
      %40 = sst [smem:[#allocation15]] [#allocation12]
    $region17: #{tpu_custom_call.1} parent=1 // pred_fallthru
      _
    %42 = shalt.err (0)
    %s44 = sshll.u32 [#allocation2], 4
    %s45 = int_to_ptr.vmem [resolvable:$true] %s44
    %47 = dma.hbm_to_vmem [thread:$0]  %s36, 16, %s45, [#allocation4]
    %s48 = sld [smem:[#allocation7 + $0x1]]
    %s49 = smul.addr %s48, 16
    %s50 = scalar_lea.hbm %s3, %s49
    %s51 = scalar_lea.vmem [#allocation2], 1
    %s52 = scalar_lea.sflag [#allocation4], 1
    // Predicated region
    $region18: #{tpu_custom_call.1} parent=1 // pred_check
      _
    $region19: #{tpu_custom_call.1} parent=1 // pred_check_branch
      %54 = sbr.rel target = $region21
    $region20: #{tpu_custom_call.1} parent=1 // pred_region
      %55 = sst [smem:[#allocation14]] [#allocation17]
      %56 = sst [smem:[#allocation15]] [#allocation16]
    $region21: #{tpu_custom_call.1} parent=1 // pred_fallthru
      _
    %58 = shalt.err (0)
    %s60 = sshll.u32 %s51, 4
    %s61 = int_to_ptr.vmem [resolvable:$true] %s60
    %63 = dma.hbm_to_vmem [thread:$0]  %s50, 16, %s61, %s52
    %s64 = sld [smem:[#allocation7 + $0x2]]
    %s65 = smul.addr %s64, 16
    %s66 = scalar_lea.hbm %s3, %s65
    %s67 = scalar_lea.vmem [#allocation2], 2
    %s68 = scalar_lea.sflag [#allocation4], 2
    // Predicated region
    $region22: #{tpu_custom_call.1} parent=1 // pred_check
      _
    $region23: #{tpu_custom_call.1} parent=1 // pred_check_branch
      %70 = sbr.rel target = $region25
    $region24: #{tpu_custom_call.1} parent=1 // pred_region
      %71 = sst [smem:[#allocation14]] [#allocation19]
      %72 = sst [smem:[#allocation15]] [#allocation18]
    $region25: #{tpu_custom_call.1} parent=1 // pred_fallthru
      _
    %74 = shalt.err (0)
    %s76 = sshll.u32 %s67, 4
    %s77 = int_to_ptr.vmem [resolvable:$true] %s76
    %79 = dma.hbm_to_vmem [thread:$0]  %s66, 16, %s77, %s68
    %s80 = sld [smem:[#allocation7 + $0x3]]
    %s81 = smul.addr %s80, 16
    %s82 = scalar_lea.hbm %s3, %s81
    %s83 = scalar_lea.vmem [#allocation2], 3
    %s84 = scalar_lea.sflag [#allocation4], 3
    // Predicated region
    $region26: #{tpu_custom_call.1} parent=1 // pred_check
      _
    $region27: #{tpu_custom_call.1} parent=1 // pred_check_branch
      %86 = sbr.rel target = $region29
    $region28: #{tpu_custom_call.1} parent=1 // pred_region
      %87 = sst [smem:[#allocation14]] [#allocation21]
      %88 = sst [smem:[#allocation15]] [#allocation20]
    $region29: #{tpu_custom_call.1} parent=1 // pred_fallthru
      _
    %90 = shalt.err (0)
    %s92 = sshll.u32 %s83, 4
    %s93 = int_to_ptr.vmem [resolvable:$true] %s92
    %95 = dma.hbm_to_vmem [thread:$0]  %s82, 16, %s93, %s84
    %s96 = sld [smem:[#allocation7 + $0x4]]
    %s97 = smul.addr %s96, 16
    %s98 = scalar_lea.hbm %s3, %s97
    %s99 = scalar_lea.vmem [#allocation2], 4
    %s100 = scalar_lea.sflag [#allocation4], 4
    // Predicated region
    $region30: #{tpu_custom_call.1} parent=1 // pred_check
      _
    $region31: #{tpu_custom_call.1} parent=1 // pred_check_branch
      %102 = sbr.rel target = $region33
    $region32: #{tpu_custom_call.1} parent=1 // pred_region
      %103 = sst [smem:[#allocation14]] [#allocation23]
      %104 = sst [smem:[#allocation15]] [#allocation22]
    $region33: #{tpu_custom_call.1} parent=1 // pred_fallthru
      _
    %106 = shalt.err (0)
    %s108 = sshll.u32 %s99, 4
    %s109 = int_to_ptr.vmem [resolvable:$true] %s108
    %111 = dma.hbm_to_vmem [thread:$0]  %s98, 16, %s109, %s100
    %s112 = sld [smem:[#allocation7 + $0x5]]
    %s113 = smul.addr %s112, 16
    %s114 = scalar_lea.hbm %s3, %s113
    %s115 = scalar_lea.vmem [#allocation2], 5
    %s116 = scalar_lea.sflag [#allocation4], 5
    // Predicated region
    $region34: #{tpu_custom_call.1} parent=1 // pred_check
      _
    $region35: #{tpu_custom_call.1} parent=1 // pred_check_branch
      %118 = sbr.rel target = $region37
    $region36: #{tpu_custom_call.1} parent=1 // pred_region
      %119 = sst [smem:[#allocation14]] [#allocation25]
      %120 = sst [smem:[#allocation15]] [#allocation24]
    $region37: #{tpu_custom_call.1} parent=1 // pred_fallthru
      _
    %122 = shalt.err (0)
    %s124 = sshll.u32 %s115, 4
    %s125 = int_to_ptr.vmem [resolvable:$true] %s124
    %127 = dma.hbm_to_vmem [thread:$0]  %s114, 16, %s125, %s116
    %s128 = sld [smem:[#allocation7 + $0x6]]
    %s129 = smul.addr %s128, 16
    %s130 = scalar_lea.hbm %s3, %s129
    %s131 = scalar_lea.vmem [#allocation2], 6
    %s132 = scalar_lea.sflag [#allocation4], 6
    // Predicated region
    $region38: #{tpu_custom_call.1} parent=1 // pred_check
      _
    $region39: #{tpu_custom_call.1} parent=1 // pred_check_branch
      %134 = sbr.rel target = $region41
    $region40: #{tpu_custom_call.1} parent=1 // pred_region
      %135 = sst [smem:[#allocation14]] [#allocation27]
      %136 = sst [smem:[#allocation15]] [#allocation26]
    $region41: #{tpu_custom_call.1} parent=1 // pred_fallthru
      _
    %138 = shalt.err (0)
    %s140 = sshll.u32 %s131, 4
    %s141 = int_to_ptr.vmem [resolvable:$true] %s140
    %143 = dma.hbm_to_vmem [thread:$0]  %s130, 16, %s141, %s132
    %s144 = sld [smem:[#allocation7 + $0x7]]
    %s145 = smul.addr %s144, 16
    %s146 = scalar_lea.hbm %s3, %s145
    %s147 = scalar_lea.vmem [#allocation2], 7
    %s148 = scalar_lea.sflag [#allocation4], 7
    // Predicated region
    $region42: #{tpu_custom_call.1} parent=1 // pred_check
      _
    $region43: #{tpu_custom_call.1} parent=1 // pred_check_branch
      %150 = sbr.rel target = $region45
    $region44: #{tpu_custom_call.1} parent=1 // pred_region
      %151 = sst [smem:[#allocation14]] [#allocation29]
      %152 = sst [smem:[#allocation15]] [#allocation28]
    $region45: #{tpu_custom_call.1} parent=1 // pred_fallthru
      _
    %154 = shalt.err (0)
    %s156 = sshll.u32 %s147, 4
    %s157 = int_to_ptr.vmem [resolvable:$true] %s156
    %159 = dma.hbm_to_vmem [thread:$0]  %s146, 16, %s157, %s148
    %s160 = sld [smem:[#allocation7 + $0x8]]
    %s161 = smul.addr %s160, 16
    %s162 = scalar_lea.hbm %s3, %s161
    %s163 = scalar_lea.vmem [#allocation2], 8
    %s164 = scalar_lea.sflag [#allocation4], 8
    // Predicated region
    $region46: #{tpu_custom_call.1} parent=1 // pred_check
      _
    $region47: #{tpu_custom_call.1} parent=1 // pred_check_branch
      %166 = sbr.rel target = $region49
    $region48: #{tpu_custom_call.1} parent=1 // pred_region
      %167 = sst [smem:[#allocation14]] [#allocation31]
      %168 = sst [smem:[#allocation15]] [#allocation30]
    $region49: #{tpu_custom_call.1} parent=1 // pred_fallthru
      _
    %170 = shalt.err (0)
    %s172 = sshll.u32 %s163, 4
    %s173 = int_to_ptr.vmem [resolvable:$true] %s172
    %175 = dma.hbm_to_vmem [thread:$0]  %s162, 16, %s173, %s164
    %s176 = sld [smem:[#allocation7 + $0x9]]
    %s177 = smul.addr %s176, 16
    %s178 = scalar_lea.hbm %s3, %s177
    %s179 = scalar_lea.vmem [#allocation2], 9
    %s180 = scalar_lea.sflag [#allocation4], 9
    // Predicated region
    $region50: #{tpu_custom_call.1} parent=1 // pred_check
      _
    $region51: #{tpu_custom_call.1} parent=1 // pred_check_branch
      %182 = sbr.rel target = $region53
    $region52: #{tpu_custom_call.1} parent=1 // pred_region
      %183 = sst [smem:[#allocation14]] [#allocation33]
      %184 = sst [smem:[#allocation15]] [#allocation32]
    $region53: #{tpu_custom_call.1} parent=1 // pred_fallthru
      _
    %186 = shalt.err (0)
    %s188 = sshll.u32 %s179, 4
    %s189 = int_to_ptr.vmem [resolvable:$true] %s188
    %191 = dma.hbm_to_vmem [thread:$0]  %s178, 16, %s189, %s180
    %s192 = sld [smem:[#allocation7 + $0xa]]
    %s193 = smul.addr %s192, 16
    %s194 = scalar_lea.hbm %s3, %s193
    %s195 = scalar_lea.vmem [#allocation2], 10
    %s196 = scalar_lea.sflag [#allocation4], 10
    // Predicated region
    $region54: #{tpu_custom_call.1} parent=1 // pred_check
      _
    $region55: #{tpu_custom_call.1} parent=1 // pred_check_branch
      %198 = sbr.rel target = $region57
    $region56: #{tpu_custom_call.1} parent=1 // pred_region
      %199 = sst [smem:[#allocation14]] [#allocation35]
      %200 = sst [smem:[#allocation15]] [#allocation34]
    $region57: #{tpu_custom_call.1} parent=1 // pred_fallthru
      _
    %202 = shalt.err (0)
    %s204 = sshll.u32 %s195, 4
    %s205 = int_to_ptr.vmem [resolvable:$true] %s204
    %207 = dma.hbm_to_vmem [thread:$0]  %s194, 16, %s205, %s196
    %s208 = sld [smem:[#allocation7 + $0xb]]
    %s209 = smul.addr %s208, 16
    %s210 = scalar_lea.hbm %s3, %s209
    %s211 = scalar_lea.vmem [#allocation2], 11
    %s212 = scalar_lea.sflag [#allocation4], 11
    // Predicated region
    $region58: #{tpu_custom_call.1} parent=1 // pred_check
      _
    $region59: #{tpu_custom_call.1} parent=1 // pred_check_branch
      %214 = sbr.rel target = $region61
    $region60: #{tpu_custom_call.1} parent=1 // pred_region
      %215 = sst [smem:[#allocation14]] [#allocation37]
      %216 = sst [smem:[#allocation15]] [#allocation36]
    $region61: #{tpu_custom_call.1} parent=1 // pred_fallthru
      _
    %218 = shalt.err (0)
    %s220 = sshll.u32 %s211, 4
    %s221 = int_to_ptr.vmem [resolvable:$true] %s220
    %223 = dma.hbm_to_vmem [thread:$0]  %s210, 16, %s221, %s212
    %s224 = sld [smem:[#allocation7 + $0xc]]
    %s225 = smul.addr %s224, 16
    %s226 = scalar_lea.hbm %s3, %s225
    %s227 = scalar_lea.vmem [#allocation2], 12
    %s228 = scalar_lea.sflag [#allocation4], 12
    // Predicated region
    $region62: #{tpu_custom_call.1} parent=1 // pred_check
      _
    $region63: #{tpu_custom_call.1} parent=1 // pred_check_branch
      %230 = sbr.rel target = $region65
    $region64: #{tpu_custom_call.1} parent=1 // pred_region
      %231 = sst [smem:[#allocation14]] [#allocation39]
      %232 = sst [smem:[#allocation15]] [#allocation38]
    $region65: #{tpu_custom_call.1} parent=1 // pred_fallthru
      _
    %234 = shalt.err (0)
    %s236 = sshll.u32 %s227, 4
    %s237 = int_to_ptr.vmem [resolvable:$true] %s236
    %239 = dma.hbm_to_vmem [thread:$0]  %s226, 16, %s237, %s228
    %s240 = sld [smem:[#allocation7 + $0xd]]
    %s241 = smul.addr %s240, 16
    %s242 = scalar_lea.hbm %s3, %s241
    %s243 = scalar_lea.vmem [#allocation2], 13
    %s244 = scalar_lea.sflag [#allocation4], 13
    // Predicated region
    $region66: #{tpu_custom_call.1} parent=1 // pred_check
      _
    $region67: #{tpu_custom_call.1} parent=1 // pred_check_branch
      %246 = sbr.rel target = $region69
    $region68: #{tpu_custom_call.1} parent=1 // pred_region
      %247 = sst [smem:[#allocation14]] [#allocation41]
      %248 = sst [smem:[#allocation15]] [#allocation40]
    $region69: #{tpu_custom_call.1} parent=1 // pred_fallthru
      _
    %250 = shalt.err (0)
    %s252 = sshll.u32 %s243, 4
    %s253 = int_to_ptr.vmem [resolvable:$true] %s252
    %255 = dma.hbm_to_vmem [thread:$0]  %s242, 16, %s253, %s244
    %s256 = sld [smem:[#allocation7 + $0xe]]
    %s257 = smul.addr %s256, 16
    %s258 = scalar_lea.hbm %s3, %s257
    %s259 = scalar_lea.vmem [#allocation2], 14
    %s260 = scalar_lea.sflag [#allocation4], 14
    // Predicated region
    $region70: #{tpu_custom_call.1} parent=1 // pred_check
      _
    $region71: #{tpu_custom_call.1} parent=1 // pred_check_branch
      %262 = sbr.rel target = $region73
    $region72: #{tpu_custom_call.1} parent=1 // pred_region
      %263 = sst [smem:[#allocation14]] [#allocation43]
      %264 = sst [smem:[#allocation15]] [#allocation42]
    $region73: #{tpu_custom_call.1} parent=1 // pred_fallthru
      _
    %266 = shalt.err (0)
    %s268 = sshll.u32 %s259, 4
    %s269 = int_to_ptr.vmem [resolvable:$true] %s268
    %271 = dma.hbm_to_vmem [thread:$0]  %s258, 16, %s269, %s260
    %s272 = sld [smem:[#allocation7 + $0xf]]
    %s273 = smul.addr %s272, 16
    %s274 = scalar_lea.hbm %s3, %s273
    %s275 = scalar_lea.vmem [#allocation2], 15
    %s276 = scalar_lea.sflag [#allocation4], 15
    // Predicated region
    $region74: #{tpu_custom_call.1} parent=1 // pred_check
      _
    $region75: #{tpu_custom_call.1} parent=1 // pred_check_branch
      %278 = sbr.rel target = $region77
    $region76: #{tpu_custom_call.1} parent=1 // pred_region
      %279 = sst [smem:[#allocation14]] [#allocation45]
      %280 = sst [smem:[#allocation15]] [#allocation44]
    $region77: #{tpu_custom_call.1} parent=1 // pred_fallthru
      _
    %282 = shalt.err (0)
    %s284 = sshll.u32 %s275, 4
    %s285 = int_to_ptr.vmem [resolvable:$true] %s284
    %287 = dma.hbm_to_vmem [thread:$0]  %s274, 16, %s285, %s276
    %s288 = sld [smem:[#allocation7 + $0x10]]
    %s289 = smul.addr %s288, 16
    %s290 = scalar_lea.hbm %s3, %s289
    %s291 = scalar_lea.vmem [#allocation2], 16
    %s292 = scalar_lea.sflag [#allocation4], 16
    // Predicated region
    $region78: #{tpu_custom_call.1} parent=1 // pred_check
      _
    $region79: #{tpu_custom_call.1} parent=1 // pred_check_branch
      %294 = sbr.rel target = $region81
    $region80: #{tpu_custom_call.1} parent=1 // pred_region
      %295 = sst [smem:[#allocation14]] [#allocation47]
      %296 = sst [smem:[#allocation15]] [#allocation46]
    $region81: #{tpu_custom_call.1} parent=1 // pred_fallthru
      _
    %298 = shalt.err (0)
    %s300 = sshll.u32 %s291, 4
    %s301 = int_to_ptr.vmem [resolvable:$true] %s300
    %303 = dma.hbm_to_vmem [thread:$0]  %s290, 16, %s301, %s292
    %s304 = sld [smem:[#allocation7 + $0x11]]
    %s305 = smul.addr %s304, 16
    %s306 = scalar_lea.hbm %s3, %s305
    %s307 = scalar_lea.vmem [#allocation2], 17
    %s308 = scalar_lea.sflag [#allocation4], 17
    // Predicated region
    $region82: #{tpu_custom_call.1} parent=1 // pred_check
      _
    $region83: #{tpu_custom_call.1} parent=1 // pred_check_branch
      %310 = sbr.rel target = $region85
    $region84: #{tpu_custom_call.1} parent=1 // pred_region
      %311 = sst [smem:[#allocation14]] [#allocation49]
      %312 = sst [smem:[#allocation15]] [#allocation48]
    $region85: #{tpu_custom_call.1} parent=1 // pred_fallthru
      _
    %314 = shalt.err (0)
    %s316 = sshll.u32 %s307, 4
    %s317 = int_to_ptr.vmem [resolvable:$true] %s316
    %319 = dma.hbm_to_vmem [thread:$0]  %s306, 16, %s317, %s308
    %s320 = sld [smem:[#allocation7 + $0x12]]
    %s321 = smul.addr %s320, 16
    %s322 = scalar_lea.hbm %s3, %s321
    %s323 = scalar_lea.vmem [#allocation2], 18
    %s324 = scalar_lea.sflag [#allocation4], 18
    // Predicated region
    $region86: #{tpu_custom_call.1} parent=1 // pred_check
      _
    $region87: #{tpu_custom_call.1} parent=1 // pred_check_branch
      %326 = sbr.rel target = $region89
    $region88: #{tpu_custom_call.1} parent=1 // pred_region
      %327 = sst [smem:[#allocation14]] [#allocation51]
      %328 = sst [smem:[#allocation15]] [#allocation50]
    $region89: #{tpu_custom_call.1} parent=1 // pred_fallthru
      _
    %330 = shalt.err (0)
    %s332 = sshll.u32 %s323, 4
    %s333 = int_to_ptr.vmem [resolvable:$true] %s332
    %335 = dma.hbm_to_vmem [thread:$0]  %s322, 16, %s333, %s324
    %s336 = sld [smem:[#allocation7 + $0x13]]
    %s337 = smul.addr %s336, 16
    %s338 = scalar_lea.hbm %s3, %s337
    %s339 = scalar_lea.vmem [#allocation2], 19
    %s340 = scalar_lea.sflag [#allocation4], 19
    // Predicated region
    $region90: #{tpu_custom_call.1} parent=1 // pred_check
      _
    $region91: #{tpu_custom_call.1} parent=1 // pred_check_branch
      %342 = sbr.rel target = $region93
    $region92: #{tpu_custom_call.1} parent=1 // pred_region
      %343 = sst [smem:[#allocation14]] [#allocation53]
      %344 = sst [smem:[#allocation15]] [#allocation52]
    $region93: #{tpu_custom_call.1} parent=1 // pred_fallthru
      _
    %346 = shalt.err (0)
    %s348 = sshll.u32 %s339, 4
    %s349 = int_to_ptr.vmem [resolvable:$true] %s348
    %351 = dma.hbm_to_vmem [thread:$0]  %s338, 16, %s349, %s340
    %s352 = sld [smem:[#allocation7 + $0x14]]
    %s353 = smul.addr %s352, 16
    %s354 = scalar_lea.hbm %s3, %s353
    %s355 = scalar_lea.vmem [#allocation2], 20
    %s356 = scalar_lea.sflag [#allocation4], 20
    // Predicated region
    $region94: #{tpu_custom_call.1} parent=1 // pred_check
      _
    $region95: #{tpu_custom_call.1} parent=1 // pred_check_branch
      %358 = sbr.rel target = $region97
    $region96: #{tpu_custom_call.1} parent=1 // pred_region
      %359 = sst [smem:[#allocation14]] [#allocation55]
      %360 = sst [smem:[#allocation15]] [#allocation54]
    $region97: #{tpu_custom_call.1} parent=1 // pred_fallthru
      _
    %362 = shalt.err (0)
    %s364 = sshll.u32 %s355, 4
    %s365 = int_to_ptr.vmem [resolvable:$true] %s364
    %367 = dma.hbm_to_vmem [thread:$0]  %s354, 16, %s365, %s356
    %s368 = sld [smem:[#allocation7 + $0x15]]
    %s369 = smul.addr %s368, 16
    %s370 = scalar_lea.hbm %s3, %s369
    %s371 = scalar_lea.vmem [#allocation2], 21
    %s372 = scalar_lea.sflag [#allocation4], 21
    // Predicated region
    $region98: #{tpu_custom_call.1} parent=1 // pred_check
      _
    $region99: #{tpu_custom_call.1} parent=1 // pred_check_branch
      %374 = sbr.rel target = $region101
    $region100: #{tpu_custom_call.1} parent=1 // pred_region
      %375 = sst [smem:[#allocation14]] [#allocation57]
      %376 = sst [smem:[#allocation15]] [#allocation56]
    $region101: #{tpu_custom_call.1} parent=1 // pred_fallthru
      _
    %378 = shalt.err (0)
    %s380 = sshll.u32 %s371, 4
    %s381 = int_to_ptr.vmem [resolvable:$true] %s380
    %383 = dma.hbm_to_vmem [thread:$0]  %s370, 16, %s381, %s372
    %s384 = sld [smem:[#allocation7 + $0x16]]
    %s385 = smul.addr %s384, 16
    %s386 = scalar_lea.hbm %s3, %s385
    %s387 = scalar_lea.vmem [#allocation2], 22
    %s388 = scalar_lea.sflag [#allocation4], 22
    // Predicated region
    $region102: #{tpu_custom_call.1} parent=1 // pred_check
      _
    $region103: #{tpu_custom_call.1} parent=1 // pred_check_branch
      %390 = sbr.rel target = $region105
    $region104: #{tpu_custom_call.1} parent=1 // pred_region
      %391 = sst [smem:[#allocation14]] [#allocation59]
      %392 = sst [smem:[#allocation15]] [#allocation58]
    $region105: #{tpu_custom_call.1} parent=1 // pred_fallthru
      _
    %394 = shalt.err (0)
    %s396 = sshll.u32 %s387, 4
    %s397 = int_to_ptr.vmem [resolvable:$true] %s396
    %399 = dma.hbm_to_vmem [thread:$0]  %s386, 16, %s397, %s388
    %s400 = sld [smem:[#allocation7 + $0x17]]
    %s401 = smul.addr %s400, 16
    %s402 = scalar_lea.hbm %s3, %s401
    %s403 = scalar_lea.vmem [#allocation2], 23
    %s404 = scalar_lea.sflag [#allocation4], 23
    // Predicated region
    $region106: #{tpu_custom_call.1} parent=1 // pred_check
      _
    $region107: #{tpu_custom_call.1} parent=1 // pred_check_branch
      %406 = sbr.rel target = $region109
    $region108: #{tpu_custom_call.1} parent=1 // pred_region
      %407 = sst [smem:[#allocation14]] [#allocation61]
      %408 = sst [smem:[#allocation15]] [#allocation60]
    $region109: #{tpu_custom_call.1} parent=1 // pred_fallthru
      _
    %410 = shalt.err (0)
    %s412 = sshll.u32 %s403, 4
    %s413 = int_to_ptr.vmem [resolvable:$true] %s412
    %415 = dma.hbm_to_vmem [thread:$0]  %s402, 16, %s413, %s404
    %s416 = sld [smem:[#allocation7 + $0x18]]
    %s417 = smul.addr %s416, 16
    %s418 = scalar_lea.hbm %s3, %s417
    %s419 = scalar_lea.vmem [#allocation2], 24
    %s420 = scalar_lea.sflag [#allocation4], 24
    // Predicated region
    $region110: #{tpu_custom_call.1} parent=1 // pred_check
      _
    $region111: #{tpu_custom_call.1} parent=1 // pred_check_branch
      %422 = sbr.rel target = $region113
    $region112: #{tpu_custom_call.1} parent=1 // pred_region
      %423 = sst [smem:[#allocation14]] [#allocation63]
      %424 = sst [smem:[#allocation15]] [#allocation62]
    $region113: #{tpu_custom_call.1} parent=1 // pred_fallthru
      _
    %426 = shalt.err (0)
    %s428 = sshll.u32 %s419, 4
    %s429 = int_to_ptr.vmem [resolvable:$true] %s428
    %431 = dma.hbm_to_vmem [thread:$0]  %s418, 16, %s429, %s420
    %s432 = sld [smem:[#allocation7 + $0x19]]
    %s433 = smul.addr %s432, 16
    %s434 = scalar_lea.hbm %s3, %s433
    %s435 = scalar_lea.vmem [#allocation2], 25
    %s436 = scalar_lea.sflag [#allocation4], 25
    // Predicated region
    $region114: #{tpu_custom_call.1} parent=1 // pred_check
      _
    $region115: #{tpu_custom_call.1} parent=1 // pred_check_branch
      %438 = sbr.rel target = $region117
    $region116: #{tpu_custom_call.1} parent=1 // pred_region
      %439 = sst [smem:[#allocation14]] [#allocation65]
      %440 = sst [smem:[#allocation15]] [#allocation64]
    $region117: #{tpu_custom_call.1} parent=1 // pred_fallthru
      _
    %442 = shalt.err (0)
    %s444 = sshll.u32 %s435, 4
    %s445 = int_to_ptr.vmem [resolvable:$true] %s444
    %447 = dma.hbm_to_vmem [thread:$0]  %s434, 16, %s445, %s436
    %s448 = sld [smem:[#allocation7 + $0x1a]]
    %s449 = smul.addr %s448, 16
    %s450 = scalar_lea.hbm %s3, %s449
    %s451 = scalar_lea.vmem [#allocation2], 26
    %s452 = scalar_lea.sflag [#allocation4], 26
    // Predicated region
    $region118: #{tpu_custom_call.1} parent=1 // pred_check
      _
    $region119: #{tpu_custom_call.1} parent=1 // pred_check_branch
      %454 = sbr.rel target = $region121
    $region120: #{tpu_custom_call.1} parent=1 // pred_region
      %455 = sst [smem:[#allocation14]] [#allocation67]
      %456 = sst [smem:[#allocation15]] [#allocation66]
    $region121: #{tpu_custom_call.1} parent=1 // pred_fallthru
      _
    %458 = shalt.err (0)
    %s460 = sshll.u32 %s451, 4
    %s461 = int_to_ptr.vmem [resolvable:$true] %s460
    %463 = dma.hbm_to_vmem [thread:$0]  %s450, 16, %s461, %s452
    %s464 = sld [smem:[#allocation7 + $0x1b]]
    %s465 = smul.addr %s464, 16
    %s466 = scalar_lea.hbm %s3, %s465
    %s467 = scalar_lea.vmem [#allocation2], 27
    %s468 = scalar_lea.sflag [#allocation4], 27
    // Predicated region
    $region122: #{tpu_custom_call.1} parent=1 // pred_check
      _
    $region123: #{tpu_custom_call.1} parent=1 // pred_check_branch
      %470 = sbr.rel target = $region125
    $region124: #{tpu_custom_call.1} parent=1 // pred_region
      %471 = sst [smem:[#allocation14]] [#allocation69]
      %472 = sst [smem:[#allocation15]] [#allocation68]
    $region125: #{tpu_custom_call.1} parent=1 // pred_fallthru
      _
    %474 = shalt.err (0)
    %s476 = sshll.u32 %s467, 4
    %s477 = int_to_ptr.vmem [resolvable:$true] %s476
    %479 = dma.hbm_to_vmem [thread:$0]  %s466, 16, %s477, %s468
    %s480 = sld [smem:[#allocation7 + $0x1c]]
    %s481 = smul.addr %s480, 16
    %s482 = scalar_lea.hbm %s3, %s481
    %s483 = scalar_lea.vmem [#allocation2], 28
    %s484 = scalar_lea.sflag [#allocation4], 28
    // Predicated region
    $region126: #{tpu_custom_call.1} parent=1 // pred_check
      _
    $region127: #{tpu_custom_call.1} parent=1 // pred_check_branch
      %486 = sbr.rel target = $region129
    $region128: #{tpu_custom_call.1} parent=1 // pred_region
      %487 = sst [smem:[#allocation14]] [#allocation71]
      %488 = sst [smem:[#allocation15]] [#allocation70]
    $region129: #{tpu_custom_call.1} parent=1 // pred_fallthru
      _
    %490 = shalt.err (0)
    %s492 = sshll.u32 %s483, 4
    %s493 = int_to_ptr.vmem [resolvable:$true] %s492
    %495 = dma.hbm_to_vmem [thread:$0]  %s482, 16, %s493, %s484
    %s496 = sld [smem:[#allocation7 + $0x1d]]
    %s497 = smul.addr %s496, 16
    %s498 = scalar_lea.hbm %s3, %s497
    %s499 = scalar_lea.vmem [#allocation2], 29
    %s500 = scalar_lea.sflag [#allocation4], 29
    // Predicated region
    $region130: #{tpu_custom_call.1} parent=1 // pred_check
      _
    $region131: #{tpu_custom_call.1} parent=1 // pred_check_branch
      %502 = sbr.rel target = $region133
    $region132: #{tpu_custom_call.1} parent=1 // pred_region
      %503 = sst [smem:[#allocation14]] [#allocation73]
      %504 = sst [smem:[#allocation15]] [#allocation72]
    $region133: #{tpu_custom_call.1} parent=1 // pred_fallthru
      _
    %506 = shalt.err (0)
    %s508 = sshll.u32 %s499, 4
    %s509 = int_to_ptr.vmem [resolvable:$true] %s508
    %511 = dma.hbm_to_vmem [thread:$0]  %s498, 16, %s509, %s500
    %s512 = sld [smem:[#allocation7 + $0x1e]]
    %s513 = smul.addr %s512, 16
    %s514 = scalar_lea.hbm %s3, %s513
    %s515 = scalar_lea.vmem [#allocation2], 30
    %s516 = scalar_lea.sflag [#allocation4], 30
    // Predicated region
    $region134: #{tpu_custom_call.1} parent=1 // pred_check
      _
    $region135: #{tpu_custom_call.1} parent=1 // pred_check_branch
      %518 = sbr.rel target = $region137
    $region136: #{tpu_custom_call.1} parent=1 // pred_region
      %519 = sst [smem:[#allocation14]] [#allocation75]
      %520 = sst [smem:[#allocation15]] [#allocation74]
    $region137: #{tpu_custom_call.1} parent=1 // pred_fallthru
      _
    %522 = shalt.err (0)
    %s524 = sshll.u32 %s515, 4
    %s525 = int_to_ptr.vmem [resolvable:$true] %s524
    %527 = dma.hbm_to_vmem [thread:$0]  %s514, 16, %s525, %s516
    %s528 = sld [smem:[#allocation7 + $0x1f]]
    %s529 = smul.addr %s528, 16
    %s530 = scalar_lea.hbm %s3, %s529
    %s531 = scalar_lea.vmem [#allocation2], 31
    %s532 = scalar_lea.sflag [#allocation4], 31
    // Predicated region
    $region138: #{tpu_custom_call.1} parent=1 // pred_check
      _
    $region139: #{tpu_custom_call.1} parent=1 // pred_check_branch
      %534 = sbr.rel target = $region141
    $region140: #{tpu_custom_call.1} parent=1 // pred_region
      %535 = sst [smem:[#allocation14]] [#allocation77]
      %536 = sst [smem:[#allocation15]] [#allocation76]
    $region141: #{tpu_custom_call.1} parent=1 // pred_fallthru
      _
    %538 = shalt.err (0)
    %s540 = sshll.u32 %s531, 4
    %s541 = int_to_ptr.vmem [resolvable:$true] %s540
    %543 = dma.hbm_to_vmem [thread:$0]  %s530, 16, %s541, %s532
    %s544 = sld [smem:[#allocation7 + $0x20]]
    %s545 = smul.addr %s544, 16
    %s546 = scalar_lea.hbm %s3, %s545
    %s547 = scalar_lea.vmem [#allocation2], 32
    %s548 = scalar_lea.sflag [#allocation4], 32
    // Predicated region
    $region142: #{tpu_custom_call.1} parent=1 // pred_check
      _
    $region143: #{tpu_custom_call.1} parent=1 // pred_check_branch
      %550 = sbr.rel target = $region145
    $region144: #{tpu_custom_call.1} parent=1 // pred_region
      %551 = sst [smem:[#allocation14]] [#allocation79]
      %552 = sst [smem:[#allocation15]] [#allocation78]
    $region145: #{tpu_custom_call.1} parent=1 // pred_fallthru
      _
    %554 = shalt.err (0)
    %s556 = sshll.u32 %s547, 4
    %s557 = int_to_ptr.vmem [resolvable:$true] %s556
    %559 = dma.hbm_to_vmem [thread:$0]  %s546, 16, %s557, %s548
    %s560 = sld [smem:[#allocation7 + $0x21]]
    %s561 = smul.addr %s560, 16
    %s562 = scalar_lea.hbm %s3, %s561
    %s563 = scalar_lea.vmem [#allocation2], 33
    %s564 = scalar_lea.sflag [#allocation4], 33
    // Predicated region
    $region146: #{tpu_custom_call.1} parent=1 // pred_check
      _
    $region147: #{tpu_custom_call.1} parent=1 // pred_check_branch
      %566 = sbr.rel target = $region149
    $region148: #{tpu_custom_call.1} parent=1 // pred_region
      %567 = sst [smem:[#allocation14]] [#allocation81]
      %568 = sst [smem:[#allocation15]] [#allocation80]
    $region149: #{tpu_custom_call.1} parent=1 // pred_fallthru
      _
    %570 = shalt.err (0)
    %s572 = sshll.u32 %s563, 4
    %s573 = int_to_ptr.vmem [resolvable:$true] %s572
    %575 = dma.hbm_to_vmem [thread:$0]  %s562, 16, %s573, %s564
    %s576 = sld [smem:[#allocation7 + $0x22]]
    %s577 = smul.addr %s576, 16
    %s578 = scalar_lea.hbm %s3, %s577
    %s579 = scalar_lea.vmem [#allocation2], 34
    %s580 = scalar_lea.sflag [#allocation4], 34
    // Predicated region
    $region150: #{tpu_custom_call.1} parent=1 // pred_check
      _
    $region151: #{tpu_custom_call.1} parent=1 // pred_check_branch
      %582 = sbr.rel target = $region153
    $region152: #{tpu_custom_call.1} parent=1 // pred_region
      %583 = sst [smem:[#allocation14]] [#allocation83]
      %584 = sst [smem:[#allocation15]] [#allocation82]
    $region153: #{tpu_custom_call.1} parent=1 // pred_fallthru
      _
    %586 = shalt.err (0)
    %s588 = sshll.u32 %s579, 4
    %s589 = int_to_ptr.vmem [resolvable:$true] %s588
    %591 = dma.hbm_to_vmem [thread:$0]  %s578, 16, %s589, %s580
    %s592 = sld [smem:[#allocation7 + $0x23]]
    %s593 = smul.addr %s592, 16
    %s594 = scalar_lea.hbm %s3, %s593
    %s595 = scalar_lea.vmem [#allocation2], 35
    %s596 = scalar_lea.sflag [#allocation4], 35
    // Predicated region
    $region154: #{tpu_custom_call.1} parent=1 // pred_check
      _
    $region155: #{tpu_custom_call.1} parent=1 // pred_check_branch
      %598 = sbr.rel target = $region157
    $region156: #{tpu_custom_call.1} parent=1 // pred_region
      %599 = sst [smem:[#allocation14]] [#allocation85]
      %600 = sst [smem:[#allocation15]] [#allocation84]
    $region157: #{tpu_custom_call.1} parent=1 // pred_fallthru
      _
    %602 = shalt.err (0)
    %s604 = sshll.u32 %s595, 4
    %s605 = int_to_ptr.vmem [resolvable:$true] %s604
    %607 = dma.hbm_to_vmem [thread:$0]  %s594, 16, %s605, %s596
    %s608 = sld [smem:[#allocation7 + $0x24]]
    %s609 = smul.addr %s608, 16
    %s610 = scalar_lea.hbm %s3, %s609
    %s611 = scalar_lea.vmem [#allocation2], 36
    %s612 = scalar_lea.sflag [#allocation4], 36
    // Predicated region
    $region158: #{tpu_custom_call.1} parent=1 // pred_check
      _
    $region159: #{tpu_custom_call.1} parent=1 // pred_check_branch
      %614 = sbr.rel target = $region161
    $region160: #{tpu_custom_call.1} parent=1 // pred_region
      %615 = sst [smem:[#allocation14]] [#allocation87]
      %616 = sst [smem:[#allocation15]] [#allocation86]
    $region161: #{tpu_custom_call.1} parent=1 // pred_fallthru
      _
    %618 = shalt.err (0)
    %s620 = sshll.u32 %s611, 4
    %s621 = int_to_ptr.vmem [resolvable:$true] %s620
    %623 = dma.hbm_to_vmem [thread:$0]  %s610, 16, %s621, %s612
    %s624 = sld [smem:[#allocation7 + $0x25]]
    %s625 = smul.addr %s624, 16
    %s626 = scalar_lea.hbm %s3, %s625
    %s627 = scalar_lea.vmem [#allocation2], 37
    %s628 = scalar_lea.sflag [#allocation4], 37
    // Predicated region
    $region162: #{tpu_custom_call.1} parent=1 // pred_check
      _
    $region163: #{tpu_custom_call.1} parent=1 // pred_check_branch
      %630 = sbr.rel target = $region165
    $region164: #{tpu_custom_call.1} parent=1 // pred_region
      %631 = sst [smem:[#allocation14]] [#allocation89]
      %632 = sst [smem:[#allocation15]] [#allocation88]
    $region165: #{tpu_custom_call.1} parent=1 // pred_fallthru
      _
    %634 = shalt.err (0)
    %s636 = sshll.u32 %s627, 4
    %s637 = int_to_ptr.vmem [resolvable:$true] %s636
    %639 = dma.hbm_to_vmem [thread:$0]  %s626, 16, %s637, %s628
    %s640 = sld [smem:[#allocation7 + $0x26]]
    %s641 = smul.addr %s640, 16
    %s642 = scalar_lea.hbm %s3, %s641
    %s643 = scalar_lea.vmem [#allocation2], 38
    %s644 = scalar_lea.sflag [#allocation4], 38
    // Predicated region
    $region166: #{tpu_custom_call.1} parent=1 // pred_check
      _
    $region167: #{tpu_custom_call.1} parent=1 // pred_check_branch
      %646 = sbr.rel target = $region169
    $region168: #{tpu_custom_call.1} parent=1 // pred_region
      %647 = sst [smem:[#allocation14]] [#allocation91]
      %648 = sst [smem:[#allocation15]] [#allocation90]
    $region169: #{tpu_custom_call.1} parent=1 // pred_fallthru
      _
    %650 = shalt.err (0)
    %s652 = sshll.u32 %s643, 4
    %s653 = int_to_ptr.vmem [resolvable:$true] %s652
    %655 = dma.hbm_to_vmem [thread:$0]  %s642, 16, %s653, %s644
    %s656 = sld [smem:[#allocation7 + $0x27]]
    %s657 = smul.addr %s656, 16
    %s658 = scalar_lea.hbm %s3, %s657
    %s659 = scalar_lea.vmem [#allocation2], 39
    %s660 = scalar_lea.sflag [#allocation4], 39
    // Predicated region
    $region170: #{tpu_custom_call.1} parent=1 // pred_check
      _
    $region171: #{tpu_custom_call.1} parent=1 // pred_check_branch
      %662 = sbr.rel target = $region173
    $region172: #{tpu_custom_call.1} parent=1 // pred_region
      %663 = sst [smem:[#allocation14]] [#allocation93]
      %664 = sst [smem:[#allocation15]] [#allocation92]
    $region173: #{tpu_custom_call.1} parent=1 // pred_fallthru
      _
    %666 = shalt.err (0)
    %s668 = sshll.u32 %s659, 4
    %s669 = int_to_ptr.vmem [resolvable:$true] %s668
    %671 = dma.hbm_to_vmem [thread:$0]  %s658, 16, %s669, %s660
    %s672 = sld [smem:[#allocation7 + $0x28]]
    %s673 = smul.addr %s672, 16
    %s674 = scalar_lea.hbm %s3, %s673
    %s675 = scalar_lea.vmem [#allocation2], 40
    %s676 = scalar_lea.sflag [#allocation4], 40
    // Predicated region
    $region174: #{tpu_custom_call.1} parent=1 // pred_check
      _
    $region175: #{tpu_custom_call.1} parent=1 // pred_check_branch
      %678 = sbr.rel target = $region177
    $region176: #{tpu_custom_call.1} parent=1 // pred_region
      %679 = sst [smem:[#allocation14]] [#allocation95]
      %680 = sst [smem:[#allocation15]] [#allocation94]
    $region177: #{tpu_custom_call.1} parent=1 // pred_fallthru
      _
    %682 = shalt.err (0)
    %s684 = sshll.u32 %s675, 4
    %s685 = int_to_ptr.vmem [resolvable:$true] %s684
    %687 = dma.hbm_to_vmem [thread:$0]  %s674, 16, %s685, %s676
    %s688 = sld [smem:[#allocation7 + $0x29]]
    %s689 = smul.addr %s688, 16
    %s690 = scalar_lea.hbm %s3, %s689
    %s691 = scalar_lea.vmem [#allocation2], 41
    %s692 = scalar_lea.sflag [#allocation4], 41
    // Predicated region
    $region178: #{tpu_custom_call.1} parent=1 // pred_check
      _
    $region179: #{tpu_custom_call.1} parent=1 // pred_check_branch
      %694 = sbr.rel target = $region181
    $region180: #{tpu_custom_call.1} parent=1 // pred_region
      %695 = sst [smem:[#allocation14]] [#allocation97]
      %696 = sst [smem:[#allocation15]] [#allocation96]
    $region181: #{tpu_custom_call.1} parent=1 // pred_fallthru
      _
    %698 = shalt.err (0)
    %s700 = sshll.u32 %s691, 4
    %s701 = int_to_ptr.vmem [resolvable:$true] %s700
    %703 = dma.hbm_to_vmem [thread:$0]  %s690, 16, %s701, %s692
    %s704 = sld [smem:[#allocation7 + $0x2a]]
    %s705 = smul.addr %s704, 16
    %s706 = scalar_lea.hbm %s3, %s705
    %s707 = scalar_lea.vmem [#allocation2], 42
    %s708 = scalar_lea.sflag [#allocation4], 42
    // Predicated region
    $region182: #{tpu_custom_call.1} parent=1 // pred_check
      _
    $region183: #{tpu_custom_call.1} parent=1 // pred_check_branch
      %710 = sbr.rel target = $region185
    $region184: #{tpu_custom_call.1} parent=1 // pred_region
      %711 = sst [smem:[#allocation14]] [#allocation99]
      %712 = sst [smem:[#allocation15]] [#allocation98]
    $region185: #{tpu_custom_call.1} parent=1 // pred_fallthru
      _
    %714 = shalt.err (0)
    %s716 = sshll.u32 %s707, 4
    %s717 = int_to_ptr.vmem [resolvable:$true] %s716
    %719 = dma.hbm_to_vmem [thread:$0]  %s706, 16, %s717, %s708
    %s720 = sld [smem:[#allocation7 + $0x2b]]
    %s721 = smul.addr %s720, 16
    %s722 = scalar_lea.hbm %s3, %s721
    %s723 = scalar_lea.vmem [#allocation2], 43
    %s724 = scalar_lea.sflag [#allocation4], 43
    // Predicated region
    $region186: #{tpu_custom_call.1} parent=1 // pred_check
      _
    $region187: #{tpu_custom_call.1} parent=1 // pred_check_branch
      %726 = sbr.rel target = $region189
    $region188: #{tpu_custom_call.1} parent=1 // pred_region
      %727 = sst [smem:[#allocation14]] [#allocation101]
      %728 = sst [smem:[#allocation15]] [#allocation100]
    $region189: #{tpu_custom_call.1} parent=1 // pred_fallthru
      _
    %730 = shalt.err (0)
    %s732 = sshll.u32 %s723, 4
    %s733 = int_to_ptr.vmem [resolvable:$true] %s732
    %735 = dma.hbm_to_vmem [thread:$0]  %s722, 16, %s733, %s724
    %s736 = sld [smem:[#allocation7 + $0x2c]]
    %s737 = smul.addr %s736, 16
    %s738 = scalar_lea.hbm %s3, %s737
    %s739 = scalar_lea.vmem [#allocation2], 44
    %s740 = scalar_lea.sflag [#allocation4], 44
    // Predicated region
    $region190: #{tpu_custom_call.1} parent=1 // pred_check
      _
    $region191: #{tpu_custom_call.1} parent=1 // pred_check_branch
      %742 = sbr.rel target = $region193
    $region192: #{tpu_custom_call.1} parent=1 // pred_region
      %743 = sst [smem:[#allocation14]] [#allocation103]
      %744 = sst [smem:[#allocation15]] [#allocation102]
    $region193: #{tpu_custom_call.1} parent=1 // pred_fallthru
      _
    %746 = shalt.err (0)
    %s748 = sshll.u32 %s739, 4
    %s749 = int_to_ptr.vmem [resolvable:$true] %s748
    %751 = dma.hbm_to_vmem [thread:$0]  %s738, 16, %s749, %s740
    %s752 = sld [smem:[#allocation7 + $0x2d]]
    %s753 = smul.addr %s752, 16
    %s754 = scalar_lea.hbm %s3, %s753
    %s755 = scalar_lea.vmem [#allocation2], 45
    %s756 = scalar_lea.sflag [#allocation4], 45
    // Predicated region
    $region194: #{tpu_custom_call.1} parent=1 // pred_check
      _
    $region195: #{tpu_custom_call.1} parent=1 // pred_check_branch
      %758 = sbr.rel target = $region197
    $region196: #{tpu_custom_call.1} parent=1 // pred_region
      %759 = sst [smem:[#allocation14]] [#allocation105]
      %760 = sst [smem:[#allocation15]] [#allocation104]
    $region197: #{tpu_custom_call.1} parent=1 // pred_fallthru
      _
    %762 = shalt.err (0)
    %s764 = sshll.u32 %s755, 4
    %s765 = int_to_ptr.vmem [resolvable:$true] %s764
    %767 = dma.hbm_to_vmem [thread:$0]  %s754, 16, %s765, %s756
    %s768 = sld [smem:[#allocation7 + $0x2e]]
    %s769 = smul.addr %s768, 16
    %s770 = scalar_lea.hbm %s3, %s769
    %s771 = scalar_lea.vmem [#allocation2], 46
    %s772 = scalar_lea.sflag [#allocation4], 46
    // Predicated region
    $region198: #{tpu_custom_call.1} parent=1 // pred_check
      _
    $region199: #{tpu_custom_call.1} parent=1 // pred_check_branch
      %774 = sbr.rel target = $region201
    $region200: #{tpu_custom_call.1} parent=1 // pred_region
      %775 = sst [smem:[#allocation14]] [#allocation107]
      %776 = sst [smem:[#allocation15]] [#allocation106]
    $region201: #{tpu_custom_call.1} parent=1 // pred_fallthru
      _
    %778 = shalt.err (0)
    %s780 = sshll.u32 %s771, 4
    %s781 = int_to_ptr.vmem [resolvable:$true] %s780
    %783 = dma.hbm_to_vmem [thread:$0]  %s770, 16, %s781, %s772
    %s784 = sld [smem:[#allocation7 + $0x2f]]
    %s785 = smul.addr %s784, 16
    %s786 = scalar_lea.hbm %s3, %s785
    %s787 = scalar_lea.vmem [#allocation2], 47
    %s788 = scalar_lea.sflag [#allocation4], 47
    // Predicated region
    $region202: #{tpu_custom_call.1} parent=1 // pred_check
      _
    $region203: #{tpu_custom_call.1} parent=1 // pred_check_branch
      %790 = sbr.rel target = $region205
    $region204: #{tpu_custom_call.1} parent=1 // pred_region
      %791 = sst [smem:[#allocation14]] [#allocation109]
      %792 = sst [smem:[#allocation15]] [#allocation108]
    $region205: #{tpu_custom_call.1} parent=1 // pred_fallthru
      _
    %794 = shalt.err (0)
    %s796 = sshll.u32 %s787, 4
    %s797 = int_to_ptr.vmem [resolvable:$true] %s796
    %799 = dma.hbm_to_vmem [thread:$0]  %s786, 16, %s797, %s788
    %s800 = sld [smem:[#allocation7 + $0x30]]
    %s801 = smul.addr %s800, 16
    %s802 = scalar_lea.hbm %s3, %s801
    %s803 = scalar_lea.vmem [#allocation2], 48
    %s804 = scalar_lea.sflag [#allocation4], 48
    // Predicated region
    $region206: #{tpu_custom_call.1} parent=1 // pred_check
      _
    $region207: #{tpu_custom_call.1} parent=1 // pred_check_branch
      %806 = sbr.rel target = $region209
    $region208: #{tpu_custom_call.1} parent=1 // pred_region
      %807 = sst [smem:[#allocation14]] [#allocation111]
      %808 = sst [smem:[#allocation15]] [#allocation110]
    $region209: #{tpu_custom_call.1} parent=1 // pred_fallthru
      _
    %810 = shalt.err (0)
    %s812 = sshll.u32 %s803, 4
    %s813 = int_to_ptr.vmem [resolvable:$true] %s812
    %815 = dma.hbm_to_vmem [thread:$0]  %s802, 16, %s813, %s804
    %s816 = sld [smem:[#allocation7 + $0x31]]
    %s817 = smul.addr %s816, 16
    %s818 = scalar_lea.hbm %s3, %s817
    %s819 = scalar_lea.vmem [#allocation2], 49
    %s820 = scalar_lea.sflag [#allocation4], 49
    // Predicated region
    $region210: #{tpu_custom_call.1} parent=1 // pred_check
      _
    $region211: #{tpu_custom_call.1} parent=1 // pred_check_branch
      %822 = sbr.rel target = $region213
    $region212: #{tpu_custom_call.1} parent=1 // pred_region
      %823 = sst [smem:[#allocation14]] [#allocation113]
      %824 = sst [smem:[#allocation15]] [#allocation112]
    $region213: #{tpu_custom_call.1} parent=1 // pred_fallthru
      _
    %826 = shalt.err (0)
    %s828 = sshll.u32 %s819, 4
    %s829 = int_to_ptr.vmem [resolvable:$true] %s828
    %831 = dma.hbm_to_vmem [thread:$0]  %s818, 16, %s829, %s820
    %s832 = sld [smem:[#allocation7 + $0x32]]
    %s833 = smul.addr %s832, 16
    %s834 = scalar_lea.hbm %s3, %s833
    %s835 = scalar_lea.vmem [#allocation2], 50
    %s836 = scalar_lea.sflag [#allocation4], 50
    // Predicated region
    $region214: #{tpu_custom_call.1} parent=1 // pred_check
      _
    $region215: #{tpu_custom_call.1} parent=1 // pred_check_branch
      %838 = sbr.rel target = $region217
    $region216: #{tpu_custom_call.1} parent=1 // pred_region
      %839 = sst [smem:[#allocation14]] [#allocation115]
      %840 = sst [smem:[#allocation15]] [#allocation114]
    $region217: #{tpu_custom_call.1} parent=1 // pred_fallthru
      _
    %842 = shalt.err (0)
    %s844 = sshll.u32 %s835, 4
    %s845 = int_to_ptr.vmem [resolvable:$true] %s844
    %847 = dma.hbm_to_vmem [thread:$0]  %s834, 16, %s845, %s836
    %s848 = sld [smem:[#allocation7 + $0x33]]
    %s849 = smul.addr %s848, 16
    %s850 = scalar_lea.hbm %s3, %s849
    %s851 = scalar_lea.vmem [#allocation2], 51
    %s852 = scalar_lea.sflag [#allocation4], 51
    // Predicated region
    $region218: #{tpu_custom_call.1} parent=1 // pred_check
      _
    $region219: #{tpu_custom_call.1} parent=1 // pred_check_branch
      %854 = sbr.rel target = $region221
    $region220: #{tpu_custom_call.1} parent=1 // pred_region
      %855 = sst [smem:[#allocation14]] [#allocation117]
      %856 = sst [smem:[#allocation15]] [#allocation116]
    $region221: #{tpu_custom_call.1} parent=1 // pred_fallthru
      _
    %858 = shalt.err (0)
    %s860 = sshll.u32 %s851, 4
    %s861 = int_to_ptr.vmem [resolvable:$true] %s860
    %863 = dma.hbm_to_vmem [thread:$0]  %s850, 16, %s861, %s852
    %s864 = sld [smem:[#allocation7 + $0x34]]
    %s865 = smul.addr %s864, 16
    %s866 = scalar_lea.hbm %s3, %s865
    %s867 = scalar_lea.vmem [#allocation2], 52
    %s868 = scalar_lea.sflag [#allocation4], 52
    // Predicated region
    $region222: #{tpu_custom_call.1} parent=1 // pred_check
      _
    $region223: #{tpu_custom_call.1} parent=1 // pred_check_branch
      %870 = sbr.rel target = $region225
    $region224: #{tpu_custom_call.1} parent=1 // pred_region
      %871 = sst [smem:[#allocation14]] [#allocation119]
      %872 = sst [smem:[#allocation15]] [#allocation118]
    $region225: #{tpu_custom_call.1} parent=1 // pred_fallthru
      _
    %874 = shalt.err (0)
    %s876 = sshll.u32 %s867, 4
    %s877 = int_to_ptr.vmem [resolvable:$true] %s876
    %879 = dma.hbm_to_vmem [thread:$0]  %s866, 16, %s877, %s868
    %s880 = sld [smem:[#allocation7 + $0x35]]
    %s881 = smul.addr %s880, 16
    %s882 = scalar_lea.hbm %s3, %s881
    %s883 = scalar_lea.vmem [#allocation2], 53
    %s884 = scalar_lea.sflag [#allocation4], 53
    // Predicated region
    $region226: #{tpu_custom_call.1} parent=1 // pred_check
      _
    $region227: #{tpu_custom_call.1} parent=1 // pred_check_branch
      %886 = sbr.rel target = $region229
    $region228: #{tpu_custom_call.1} parent=1 // pred_region
      %887 = sst [smem:[#allocation14]] [#allocation121]
      %888 = sst [smem:[#allocation15]] [#allocation120]
    $region229: #{tpu_custom_call.1} parent=1 // pred_fallthru
      _
    %890 = shalt.err (0)
    %s892 = sshll.u32 %s883, 4
    %s893 = int_to_ptr.vmem [resolvable:$true] %s892
    %895 = dma.hbm_to_vmem [thread:$0]  %s882, 16, %s893, %s884
    %s896 = sld [smem:[#allocation7 + $0x36]]
    %s897 = smul.addr %s896, 16
    %s898 = scalar_lea.hbm %s3, %s897
    %s899 = scalar_lea.vmem [#allocation2], 54
    %s900 = scalar_lea.sflag [#allocation4], 54
    // Predicated region
    $region230: #{tpu_custom_call.1} parent=1 // pred_check
      _
    $region231: #{tpu_custom_call.1} parent=1 // pred_check_branch
      %902 = sbr.rel target = $region233
    $region232: #{tpu_custom_call.1} parent=1 // pred_region
      %903 = sst [smem:[#allocation14]] [#allocation123]
      %904 = sst [smem:[#allocation15]] [#allocation122]
    $region233: #{tpu_custom_call.1} parent=1 // pred_fallthru
      _
    %906 = shalt.err (0)
    %s908 = sshll.u32 %s899, 4
    %s909 = int_to_ptr.vmem [resolvable:$true] %s908
    %911 = dma.hbm_to_vmem [thread:$0]  %s898, 16, %s909, %s900
    %s912 = sld [smem:[#allocation7 + $0x37]]
    %s913 = smul.addr %s912, 16
    %s914 = scalar_lea.hbm %s3, %s913
    %s915 = scalar_lea.vmem [#allocation2], 55
    %s916 = scalar_lea.sflag [#allocation4], 55
    // Predicated region
    $region234: #{tpu_custom_call.1} parent=1 // pred_check
      _
    $region235: #{tpu_custom_call.1} parent=1 // pred_check_branch
      %918 = sbr.rel target = $region237
    $region236: #{tpu_custom_call.1} parent=1 // pred_region
      %919 = sst [smem:[#allocation14]] [#allocation125]
      %920 = sst [smem:[#allocation15]] [#allocation124]
    $region237: #{tpu_custom_call.1} parent=1 // pred_fallthru
      _
    %922 = shalt.err (0)
    %s924 = sshll.u32 %s915, 4
    %s925 = int_to_ptr.vmem [resolvable:$true] %s924
    %927 = dma.hbm_to_vmem [thread:$0]  %s914, 16, %s925, %s916
    %s928 = sld [smem:[#allocation7 + $0x38]]
    %s929 = smul.addr %s928, 16
    %s930 = scalar_lea.hbm %s3, %s929
    %s931 = scalar_lea.vmem [#allocation2], 56
    %s932 = scalar_lea.sflag [#allocation4], 56
    // Predicated region
    $region238: #{tpu_custom_call.1} parent=1 // pred_check
      _
    $region239: #{tpu_custom_call.1} parent=1 // pred_check_branch
      %934 = sbr.rel target = $region241
    $region240: #{tpu_custom_call.1} parent=1 // pred_region
      %935 = sst [smem:[#allocation14]] [#allocation127]
      %936 = sst [smem:[#allocation15]] [#allocation126]
    $region241: #{tpu_custom_call.1} parent=1 // pred_fallthru
      _
    %938 = shalt.err (0)
    %s940 = sshll.u32 %s931, 4
    %s941 = int_to_ptr.vmem [resolvable:$true] %s940
    %943 = dma.hbm_to_vmem [thread:$0]  %s930, 16, %s941, %s932
    %s944 = sld [smem:[#allocation7 + $0x39]]
    %s945 = smul.addr %s944, 16
    %s946 = scalar_lea.hbm %s3, %s945
    %s947 = scalar_lea.vmem [#allocation2], 57
    %s948 = scalar_lea.sflag [#allocation4], 57
    // Predicated region
    $region242: #{tpu_custom_call.1} parent=1 // pred_check
      _
    $region243: #{tpu_custom_call.1} parent=1 // pred_check_branch
      %950 = sbr.rel target = $region245
    $region244: #{tpu_custom_call.1} parent=1 // pred_region
      %951 = sst [smem:[#allocation14]] [#allocation129]
      %952 = sst [smem:[#allocation15]] [#allocation128]
    $region245: #{tpu_custom_call.1} parent=1 // pred_fallthru
      _
    %954 = shalt.err (0)
    %s956 = sshll.u32 %s947, 4
    %s957 = int_to_ptr.vmem [resolvable:$true] %s956
    %959 = dma.hbm_to_vmem [thread:$0]  %s946, 16, %s957, %s948
    %s960 = sld [smem:[#allocation7 + $0x3a]]
    %s961 = smul.addr %s960, 16
    %s962 = scalar_lea.hbm %s3, %s961
    %s963 = scalar_lea.vmem [#allocation2], 58
    %s964 = scalar_lea.sflag [#allocation4], 58
    // Predicated region
    $region246: #{tpu_custom_call.1} parent=1 // pred_check
      _
    $region247: #{tpu_custom_call.1} parent=1 // pred_check_branch
      %966 = sbr.rel target = $region249
    $region248: #{tpu_custom_call.1} parent=1 // pred_region
      %967 = sst [smem:[#allocation14]] [#allocation131]
      %968 = sst [smem:[#allocation15]] [#allocation130]
    $region249: #{tpu_custom_call.1} parent=1 // pred_fallthru
      _
    %970 = shalt.err (0)
    %s972 = sshll.u32 %s963, 4
    %s973 = int_to_ptr.vmem [resolvable:$true] %s972
    %975 = dma.hbm_to_vmem [thread:$0]  %s962, 16, %s973, %s964
    %s976 = sld [smem:[#allocation7 + $0x3b]]
    %s977 = smul.addr %s976, 16
    %s978 = scalar_lea.hbm %s3, %s977
    %s979 = scalar_lea.vmem [#allocation2], 59
    %s980 = scalar_lea.sflag [#allocation4], 59
    // Predicated region
    $region250: #{tpu_custom_call.1} parent=1 // pred_check
      _
    $region251: #{tpu_custom_call.1} parent=1 // pred_check_branch
      %982 = sbr.rel target = $region253
    $region252: #{tpu_custom_call.1} parent=1 // pred_region
      %983 = sst [smem:[#allocation14]] [#allocation133]
      %984 = sst [smem:[#allocation15]] [#allocation132]
    $region253: #{tpu_custom_call.1} parent=1 // pred_fallthru
      _
    %986 = shalt.err (0)
    %s988 = sshll.u32 %s979, 4
    %s989 = int_to_ptr.vmem [resolvable:$true] %s988
    %991 = dma.hbm_to_vmem [thread:$0]  %s978, 16, %s989, %s980
    %s992 = sld [smem:[#allocation7 + $0x3c]]
    %s993 = smul.addr %s992, 16
    %s994 = scalar_lea.hbm %s3, %s993
    %s995 = scalar_lea.vmem [#allocation2], 60
    %s996 = scalar_lea.sflag [#allocation4], 60
    // Predicated region
    $region254: #{tpu_custom_call.1} parent=1 // pred_check
      _
    $region255: #{tpu_custom_call.1} parent=1 // pred_check_branch
      %998 = sbr.rel target = $region257
    $region256: #{tpu_custom_call.1} parent=1 // pred_region
      %999 = sst [smem:[#allocation14]] [#allocation135]
      %1000 = sst [smem:[#allocation15]] [#allocation134]
    $region257: #{tpu_custom_call.1} parent=1 // pred_fallthru
      _
    %1002 = shalt.err (0)
    %s1004 = sshll.u32 %s995, 4
    %s1005 = int_to_ptr.vmem [resolvable:$true] %s1004
    %1007 = dma.hbm_to_vmem [thread:$0]  %s994, 16, %s1005, %s996
    %s1008 = sld [smem:[#allocation7 + $0x3d]]
    %s1009 = smul.addr %s1008, 16
    %s1010 = scalar_lea.hbm %s3, %s1009
    %s1011 = scalar_lea.vmem [#allocation2], 61
    %s1012 = scalar_lea.sflag [#allocation4], 61
    // Predicated region
    $region258: #{tpu_custom_call.1} parent=1 // pred_check
      _
    $region259: #{tpu_custom_call.1} parent=1 // pred_check_branch
      %1014 = sbr.rel target = $region261
    $region260: #{tpu_custom_call.1} parent=1 // pred_region
      %1015 = sst [smem:[#allocation14]] [#allocation137]
      %1016 = sst [smem:[#allocation15]] [#allocation136]
    $region261: #{tpu_custom_call.1} parent=1 // pred_fallthru
      _
    %1018 = shalt.err (0)
    %s1020 = sshll.u32 %s1011, 4
    %s1021 = int_to_ptr.vmem [resolvable:$true] %s1020
    %1023 = dma.hbm_to_vmem [thread:$0]  %s1010, 16, %s1021, %s1012
    %s1024 = sld [smem:[#allocation7 + $0x3e]]
    %s1025 = smul.addr %s1024, 16
    %s1026 = scalar_lea.hbm %s3, %s1025
    %s1027 = scalar_lea.vmem [#allocation2], 62
    %s1028 = scalar_lea.sflag [#allocation4], 62
    // Predicated region
    $region262: #{tpu_custom_call.1} parent=1 // pred_check
      _
    $region263: #{tpu_custom_call.1} parent=1 // pred_check_branch
      %1030 = sbr.rel target = $region265
    $region264: #{tpu_custom_call.1} parent=1 // pred_region
      %1031 = sst [smem:[#allocation14]] [#allocation139]
      %1032 = sst [smem:[#allocation15]] [#allocation138]
    $region265: #{tpu_custom_call.1} parent=1 // pred_fallthru
      _
    %1034 = shalt.err (0)
    %s1036 = sshll.u32 %s1027, 4
    %s1037 = int_to_ptr.vmem [resolvable:$true] %s1036
    %1039 = dma.hbm_to_vmem [thread:$0]  %s1026, 16, %s1037, %s1028
    %s1040 = sld [smem:[#allocation7 + $0x3f]]
    %s1041 = smul.addr %s1040, 16
    %s1042 = scalar_lea.hbm %s3, %s1041
    %s1043 = scalar_lea.vmem [#allocation2], 63
    %s1044 = scalar_lea.sflag [#allocation4], 63
    // Predicated region
    $region266: #{tpu_custom_call.1} parent=1 // pred_check
      _
    $region267: #{tpu_custom_call.1} parent=1 // pred_check_branch
      %1046 = sbr.rel target = $region269
    $region268: #{tpu_custom_call.1} parent=1 // pred_region
      %1047 = sst [smem:[#allocation14]] [#allocation141]
      %1048 = sst [smem:[#allocation15]] [#allocation140]
    $region269: #{tpu_custom_call.1} parent=1 // pred_fallthru
      _
    %1050 = shalt.err (0)
    %s1052 = sshll.u32 %s1043, 4
    %s1053 = int_to_ptr.vmem [resolvable:$true] %s1052
    %1055 = dma.hbm_to_vmem [thread:$0]  %s1042, 16, %s1053, %s1044
    // Predicated region
    $region270: #{tpu_custom_call.1} parent=1 // pred_check
      _
    $region271: #{tpu_custom_call.1} parent=1 // pred_check_branch
      %1057 = sbr.rel target = $region273
    $region272: #{tpu_custom_call.1} parent=1 // pred_region
      %1058 = sst [smem:[#allocation14]] [#allocation143]
      %1059 = sst [smem:[#allocation15]] [#allocation142]
    $region273: #{tpu_custom_call.1} parent=1 // pred_fallthru
      _
    %1061 = shalt.err (0)
    %s1063 = sshll.u32 [#allocation3], 4
    %s1064 = int_to_ptr.vmem [resolvable:$true] %s1063
    %1066 = dma.hbm_to_vmem [thread:$0]  %s4, 1024, %s1064, [#allocation5]
    %s1067 = smul.u32 1, 1
    %s1068 = sshll.u32 %s1067, 4
    %1069 = dma.done [#allocation4], %s1068
    %s1070 = sshll.u32 %s1067, 4
    %1071 = dma.done %s52, %s1070
    %s1072 = sshll.u32 %s1067, 4
    %1073 = dma.done %s68, %s1072
    %s1074 = sshll.u32 %s1067, 4
    %1075 = dma.done %s84, %s1074
    %s1076 = sshll.u32 %s1067, 4
    %1077 = dma.done %s100, %s1076
    %s1078 = sshll.u32 %s1067, 4
    %1079 = dma.done %s116, %s1078
    %s1080 = sshll.u32 %s1067, 4
    %1081 = dma.done %s132, %s1080
    %s1082 = sshll.u32 %s1067, 4
    %1083 = dma.done %s148, %s1082
    %s1084 = sshll.u32 %s1067, 4
    %1085 = dma.done %s164, %s1084
    %s1086 = sshll.u32 %s1067, 4
    %1087 = dma.done %s180, %s1086
    %s1088 = sshll.u32 %s1067, 4
    %1089 = dma.done %s196, %s1088
    %s1090 = sshll.u32 %s1067, 4
    %1091 = dma.done %s212, %s1090
    %s1092 = sshll.u32 %s1067, 4
    %1093 = dma.done %s228, %s1092
    %s1094 = sshll.u32 %s1067, 4
    %1095 = dma.done %s244, %s1094
    %s1096 = sshll.u32 %s1067, 4
    %1097 = dma.done %s260, %s1096
    %s1098 = sshll.u32 %s1067, 4
    %1099 = dma.done %s276, %s1098
    %s1100 = sshll.u32 %s1067, 4
    %1101 = dma.done %s292, %s1100
    %s1102 = sshll.u32 %s1067, 4
    %1103 = dma.done %s308, %s1102
    %s1104 = sshll.u32 %s1067, 4
    %1105 = dma.done %s324, %s1104
    %s1106 = sshll.u32 %s1067, 4
    %1107 = dma.done %s340, %s1106
    %s1108 = sshll.u32 %s1067, 4
    %1109 = dma.done %s356, %s1108
    %s1110 = sshll.u32 %s1067, 4
    %1111 = dma.done %s372, %s1110
    %s1112 = sshll.u32 %s1067, 4
    %1113 = dma.done %s388, %s1112
    %s1114 = sshll.u32 %s1067, 4
    %1115 = dma.done %s404, %s1114
    %s1116 = sshll.u32 %s1067, 4
    %1117 = dma.done %s420, %s1116
    %s1118 = sshll.u32 %s1067, 4
    %1119 = dma.done %s436, %s1118
    %s1120 = sshll.u32 %s1067, 4
    %1121 = dma.done %s452, %s1120
    %s1122 = sshll.u32 %s1067, 4
    %1123 = dma.done %s468, %s1122
    %s1124 = sshll.u32 %s1067, 4
    %1125 = dma.done %s484, %s1124
    %s1126 = sshll.u32 %s1067, 4
    %1127 = dma.done %s500, %s1126
    %s1128 = sshll.u32 %s1067, 4
    %1129 = dma.done %s516, %s1128
    %s1130 = sshll.u32 %s1067, 4
    %1131 = dma.done %s532, %s1130
    %s1132 = sshll.u32 %s1067, 4
    %1133 = dma.done %s548, %s1132
    %s1134 = sshll.u32 %s1067, 4
    %1135 = dma.done %s564, %s1134
    %s1136 = sshll.u32 %s1067, 4
    %1137 = dma.done %s580, %s1136
    %s1138 = sshll.u32 %s1067, 4
    %1139 = dma.done %s596, %s1138
    %s1140 = sshll.u32 %s1067, 4
    %1141 = dma.done %s612, %s1140
    %s1142 = sshll.u32 %s1067, 4
    %1143 = dma.done %s628, %s1142
    %s1144 = sshll.u32 %s1067, 4
    %1145 = dma.done %s644, %s1144
    %s1146 = sshll.u32 %s1067, 4
    %1147 = dma.done %s660, %s1146
    %s1148 = sshll.u32 %s1067, 4
    %1149 = dma.done %s676, %s1148
    %s1150 = sshll.u32 %s1067, 4
    %1151 = dma.done %s692, %s1150
    %s1152 = sshll.u32 %s1067, 4
    %1153 = dma.done %s708, %s1152
    %s1154 = sshll.u32 %s1067, 4
    %1155 = dma.done %s724, %s1154
    %s1156 = sshll.u32 %s1067, 4
    %1157 = dma.done %s740, %s1156
    %s1158 = sshll.u32 %s1067, 4
    %1159 = dma.done %s756, %s1158
    %s1160 = sshll.u32 %s1067, 4
    %1161 = dma.done %s772, %s1160
    %s1162 = sshll.u32 %s1067, 4
    %1163 = dma.done %s788, %s1162
    %s1164 = sshll.u32 %s1067, 4
    %1165 = dma.done %s804, %s1164
    %s1166 = sshll.u32 %s1067, 4
    %1167 = dma.done %s820, %s1166
    %s1168 = sshll.u32 %s1067, 4
    %1169 = dma.done %s836, %s1168
    %s1170 = sshll.u32 %s1067, 4
    %1171 = dma.done %s852, %s1170
    %s1172 = sshll.u32 %s1067, 4
    %1173 = dma.done %s868, %s1172
    %s1174 = sshll.u32 %s1067, 4
    %1175 = dma.done %s884, %s1174
    %s1176 = sshll.u32 %s1067, 4
    %1177 = dma.done %s900, %s1176
    %s1178 = sshll.u32 %s1067, 4
    %1179 = dma.done %s916, %s1178
    %s1180 = sshll.u32 %s1067, 4
    %1181 = dma.done %s932, %s1180
    %s1182 = sshll.u32 %s1067, 4
    %1183 = dma.done %s948, %s1182
    %s1184 = sshll.u32 %s1067, 4
    %1185 = dma.done %s964, %s1184
    %s1186 = sshll.u32 %s1067, 4
    %1187 = dma.done %s980, %s1186
    %s1188 = sshll.u32 %s1067, 4
    %1189 = dma.done %s996, %s1188
    %s1190 = sshll.u32 %s1067, 4
    %1191 = dma.done %s1012, %s1190
    %s1192 = sshll.u32 %s1067, 4
    %1193 = dma.done %s1028, %s1192
    %s1194 = sshll.u32 %s1067, 4
    %1195 = dma.done %s1044, %s1194
    %v1196 = vld [vmem:[#allocation8] sm:$0xf]
    %v1197 = vld [vmem:[#allocation8 + $0x4] sm:$0xf]
    %v1198 = vld [vmem:[#allocation8 + $0x8] sm:$0xf]
    %v1199 = vld [vmem:[#allocation8 + $0xc] sm:$0xf]
    %v1200 = vld [vmem:[#allocation8 + $0x10] sm:$0xf]
    %v1201 = vld [vmem:[#allocation8 + $0x14] sm:$0xf]
    %v1202 = vld [vmem:[#allocation8 + $0x18] sm:$0xf]
    %v1203 = vld [vmem:[#allocation8 + $0x1c] sm:$0xf]
    %v1204 = vld [vmem:[#allocation8 + $0x20] sm:$0xf]
    %v1205 = vld [vmem:[#allocation8 + $0x24] sm:$0xf]
    %v1206 = vld [vmem:[#allocation8 + $0x28] sm:$0xf]
    %v1207 = vld [vmem:[#allocation8 + $0x2c] sm:$0xf]
    %v1208 = vld [vmem:[#allocation8 + $0x30] sm:$0xf]
    %v1209 = vld [vmem:[#allocation8 + $0x34] sm:$0xf]
    %v1210 = vld [vmem:[#allocation8 + $0x38] sm:$0xf]
    %v1211 = vld [vmem:[#allocation8 + $0x3c] sm:$0xf]
    %v1212 = vld [vmem:[#allocation2] sm:$0xff]
    %v1229 = vunpack.c.l.b16 %v1196
    %v1230 = vunpack.c.l.b16 %v1197
    %v1231 = vunpack.c.l.b16 %v1198
    %v1232 = vunpack.c.l.b16 %v1199
    %v1233 = vunpack.c.l.b16 %v1200
    %v1234 = vunpack.c.l.b16 %v1201
    %v1235 = vunpack.c.l.b16 %v1202
    %v1236 = vunpack.c.l.b16 %v1203
    %v1237 = vunpack.c.l.b16 %v1204
    %v1238 = vunpack.c.l.b16 %v1205
    %v1239 = vunpack.c.l.b16 %v1206
    %v1240 = vunpack.c.l.b16 %v1207
    %v1241 = vunpack.c.l.b16 %v1208
    %v1242 = vunpack.c.l.b16 %v1209
    %v1243 = vunpack.c.l.b16 %v1210
    %v1244 = vunpack.c.l.b16 %v1211
    %v1245 = vpack.c.b16 %v1230, %v1229
    %v1246 = vpack.c.b16 %v1232, %v1231
    %v1247 = vpack.c.b16 %v1234, %v1233
    %v1248 = vpack.c.b16 %v1236, %v1235
    %v1249 = vpack.c.b16 %v1238, %v1237
    %v1250 = vpack.c.b16 %v1240, %v1239
    %v1251 = vpack.c.b16 %v1242, %v1241
    %v1252 = vpack.c.b16 %v1244, %v1243
    %1261 = vmatprep.subr.bf16.mxu0 0
    %1262 = vmatpush1.bf16.msra.mxu0 %v1252
    %1263 = vmatprep.subr.bf16.mxu0 0
    %1264 = vmatpush1.bf16.msra.mxu0 %v1251
    %1265 = vmatprep.subr.bf16.mxu0 0
    %1266 = vmatpush1.bf16.msra.mxu0 %v1250
    %1267 = vmatprep.subr.bf16.mxu0 0
    %1268 = vmatpush1.bf16.msra.mxu0 %v1249
    %1269 = vmatprep.subr.bf16.mxu0 0
    %1270 = vmatpush1.bf16.msra.mxu0 %v1248
    %1271 = vmatprep.subr.bf16.mxu0 0
    %1272 = vmatpush1.bf16.msra.mxu0 %v1247
    %1273 = vmatprep.subr.bf16.mxu0 0
    %1274 = vmatpush1.bf16.msra.mxu0 %v1246
    %1275 = vmatprep.subr.bf16.mxu0 0
    %1276 = vmatpush1.bf16.msra.mxu0 %v1245
    %1277 = vmatprep.subr.bf16.mxu0 0
    %1278 = vmatpush2.bf16.msra.mxu0 0
    %1279 = vmatprep.subr.bf16.mxu0 0
    %1280 = vmatpush2.bf16.msra.mxu0 0
    %1281 = vmatprep.subr.bf16.mxu0 0
    %1282 = vmatpush2.bf16.msra.mxu0 0
    %1283 = vmatprep.subr.bf16.mxu0 0
    %1284 = vmatpush2.bf16.msra.mxu0 0
    %1285 = vmatprep.subr.bf16.mxu0 0
    %1286 = vmatpush2.bf16.msra.mxu0 0
    %1287 = vmatprep.subr.bf16.mxu0 0
    %1288 = vmatpush2.bf16.msra.mxu0 0
    %1289 = vmatprep.subr.bf16.mxu0 0
    %1290 = vmatpush2.bf16.msra.mxu0 0
    %1291 = vmatprep.subr.bf16.mxu0 0
    %1292 = vmatpush2.bf16.msra.mxu0 0
    %1293 = vmatprep.mubr.bf16.mxu0 0
    %1294 = vmatmul.mubr.bf16.gmra.mxu0 0
    %v1295 = vpop.f32.mrf.mxu0
    %v1296 = vadd.f32 0.0, %v1295
    %v1297 = vpop.f32.mrf.mxu0
    %v1298 = vpop.f32.mrf.mxu0
    %v1299 = vpop.f32.mrf.mxu0
    %1300 = vdwg.mxu0
    %v1301 = vadd.f32 %v1212, %v1296
    %v1302 = vtanh.pop %v1301
    %v1303 = vld [vmem:[#allocation2 + $0x8] sm:$0xff]
    %v1304 = vpack.c.bf16 %v1302, %v1302
    %1305 = vmatprep.subr.bf16.mxu0 0
    %1306 = vmatpush1.bf16.msra.mxu0 %v1252
    %1307 = vmatprep.subr.bf16.mxu0 0
    %1308 = vmatpush1.bf16.msra.mxu0 %v1251
    %1309 = vmatprep.subr.bf16.mxu0 0
    %1310 = vmatpush1.bf16.msra.mxu0 %v1250
    %1311 = vmatprep.subr.bf16.mxu0 0
    %1312 = vmatpush1.bf16.msra.mxu0 %v1249
    %1313 = vmatprep.subr.bf16.mxu0 0
    %1314 = vmatpush1.bf16.msra.mxu0 %v1248
    %1315 = vmatprep.subr.bf16.mxu0 0
    %1316 = vmatpush1.bf16.msra.mxu0 %v1247
    %1317 = vmatprep.subr.bf16.mxu0 0
    %1318 = vmatpush1.bf16.msra.mxu0 %v1246
    %1319 = vmatprep.subr.bf16.mxu0 0
    %1320 = vmatpush1.bf16.msra.mxu0 %v1245
    %1321 = vmatprep.subr.bf16.mxu0 0
    %1322 = vmatpush2.bf16.msra.mxu0 0
    %1323 = vmatprep.subr.bf16.mxu0 0
    %1324 = vmatpush2.bf16.msra.mxu0 0
    %1325 = vmatprep.subr.bf16.mxu0 0
    %1326 = vmatpush2.bf16.msra.mxu0 0
    %1327 = vmatprep.subr.bf16.mxu0 0
    %1328 = vmatpush2.bf16.msra.mxu0 0
    %1329 = vmatprep.subr.bf16.mxu0 0
    %1330 = vmatpush2.bf16.msra.mxu0 0
    %1331 = vmatprep.subr.bf16.mxu0 0
    %1332 = vmatpush2.bf16.msra.mxu0 0
    %1333 = vmatprep.subr.bf16.mxu0 0
    %1334 = vmatpush2.bf16.msra.mxu0 0
    %1335 = vmatprep.subr.bf16.mxu0 0
    %1336 = vmatpush2.bf16.msra.mxu0 0
    %1337 = vmatprep.mubr.bf16.mxu0 0
    %1338 = vmatmul.mubr.bf16.gmra.mxu0 %v1304
    %v1339 = vpop.f32.mrf.mxu0
    %v1340 = vadd.f32 0.0, %v1339
    %v1341 = vpop.f32.mrf.mxu0
    %v1342 = vpop.f32.mrf.mxu0
    %v1343 = vpop.f32.mrf.mxu0
    %1344 = vdwg.mxu0
    %v1345 = vadd.f32 %v1303, %v1340
    %v1346 = vtanh.pop %v1345
    %v1347 = vld [vmem:[#allocation2 + $0x10] sm:$0xff]
    %v1348 = vpack.c.bf16 %v1346, %v1346
    %1349 = vmatprep.subr.bf16.mxu0 0
    %1350 = vmatpush1.bf16.msra.mxu0 %v1252
    %1351 = vmatprep.subr.bf16.mxu0 0
    %1352 = vmatpush1.bf16.msra.mxu0 %v1251
    %1353 = vmatprep.subr.bf16.mxu0 0
    %1354 = vmatpush1.bf16.msra.mxu0 %v1250
    %1355 = vmatprep.subr.bf16.mxu0 0
    %1356 = vmatpush1.bf16.msra.mxu0 %v1249
    %1357 = vmatprep.subr.bf16.mxu0 0
    %1358 = vmatpush1.bf16.msra.mxu0 %v1248
    %1359 = vmatprep.subr.bf16.mxu0 0
    %1360 = vmatpush1.bf16.msra.mxu0 %v1247
    %1361 = vmatprep.subr.bf16.mxu0 0
    %1362 = vmatpush1.bf16.msra.mxu0 %v1246
    %1363 = vmatprep.subr.bf16.mxu0 0
    %1364 = vmatpush1.bf16.msra.mxu0 %v1245
    %1365 = vmatprep.subr.bf16.mxu0 0
    %1366 = vmatpush2.bf16.msra.mxu0 0
    %1367 = vmatprep.subr.bf16.mxu0 0
    %1368 = vmatpush2.bf16.msra.mxu0 0
    %1369 = vmatprep.subr.bf16.mxu0 0
    %1370 = vmatpush2.bf16.msra.mxu0 0
    %1371 = vmatprep.subr.bf16.mxu0 0
    %1372 = vmatpush2.bf16.msra.mxu0 0
    %1373 = vmatprep.subr.bf16.mxu0 0
    %1374 = vmatpush2.bf16.msra.mxu0 0
    %1375 = vmatprep.subr.bf16.mxu0 0
    %1376 = vmatpush2.bf16.msra.mxu0 0
    %1377 = vmatprep.subr.bf16.mxu0 0
    %1378 = vmatpush2.bf16.msra.mxu0 0
    %1379 = vmatprep.subr.bf16.mxu0 0
    %1380 = vmatpush2.bf16.msra.mxu0 0
    %1381 = vmatprep.mubr.bf16.mxu0 0
    %1382 = vmatmul.mubr.bf16.gmra.mxu0 %v1348
    %v1383 = vpop.f32.mrf.mxu0
    %v1384 = vadd.f32 0.0, %v1383
    %v1385 = vpop.f32.mrf.mxu0
    %v1386 = vpop.f32.mrf.mxu0
    %v1387 = vpop.f32.mrf.mxu0
    %1388 = vdwg.mxu0
    %v1389 = vadd.f32 %v1347, %v1384
    %v1390 = vtanh.pop %v1389
    %v1391 = vld [vmem:[#allocation2 + $0x18] sm:$0xff]
    %v1392 = vpack.c.bf16 %v1390, %v1390
    %1393 = vmatprep.subr.bf16.mxu0 0
    %1394 = vmatpush1.bf16.msra.mxu0 %v1252
    %1395 = vmatprep.subr.bf16.mxu0 0
    %1396 = vmatpush1.bf16.msra.mxu0 %v1251
    %1397 = vmatprep.subr.bf16.mxu0 0
    %1398 = vmatpush1.bf16.msra.mxu0 %v1250
    %1399 = vmatprep.subr.bf16.mxu0 0
    %1400 = vmatpush1.bf16.msra.mxu0 %v1249
    %1401 = vmatprep.subr.bf16.mxu0 0
    %1402 = vmatpush1.bf16.msra.mxu0 %v1248
    %1403 = vmatprep.subr.bf16.mxu0 0
    %1404 = vmatpush1.bf16.msra.mxu0 %v1247
    %1405 = vmatprep.subr.bf16.mxu0 0
    %1406 = vmatpush1.bf16.msra.mxu0 %v1246
    %1407 = vmatprep.subr.bf16.mxu0 0
    %1408 = vmatpush1.bf16.msra.mxu0 %v1245
    %1409 = vmatprep.subr.bf16.mxu0 0
    %1410 = vmatpush2.bf16.msra.mxu0 0
    %1411 = vmatprep.subr.bf16.mxu0 0
    %1412 = vmatpush2.bf16.msra.mxu0 0
    %1413 = vmatprep.subr.bf16.mxu0 0
    %1414 = vmatpush2.bf16.msra.mxu0 0
    %1415 = vmatprep.subr.bf16.mxu0 0
    %1416 = vmatpush2.bf16.msra.mxu0 0
    %1417 = vmatprep.subr.bf16.mxu0 0
    %1418 = vmatpush2.bf16.msra.mxu0 0
    %1419 = vmatprep.subr.bf16.mxu0 0
    %1420 = vmatpush2.bf16.msra.mxu0 0
    %1421 = vmatprep.subr.bf16.mxu0 0
    %1422 = vmatpush2.bf16.msra.mxu0 0
    %1423 = vmatprep.subr.bf16.mxu0 0
    %1424 = vmatpush2.bf16.msra.mxu0 0
    %1425 = vmatprep.mubr.bf16.mxu0 0
    %1426 = vmatmul.mubr.bf16.gmra.mxu0 %v1392
    %v1427 = vpop.f32.mrf.mxu0
    %v1428 = vadd.f32 0.0, %v1427
    %v1429 = vpop.f32.mrf.mxu0
    %v1430 = vpop.f32.mrf.mxu0
    %v1431 = vpop.f32.mrf.mxu0
    %1432 = vdwg.mxu0
    %v1433 = vadd.f32 %v1391, %v1428
    %v1434 = vtanh.pop %v1433
    %v1435 = vld [vmem:[#allocation2 + $0x20] sm:$0xff]
    %v1436 = vpack.c.bf16 %v1434, %v1434
    %1437 = vmatprep.subr.bf16.mxu0 0
    %1438 = vmatpush1.bf16.msra.mxu0 %v1252
    %1439 = vmatprep.subr.bf16.mxu0 0
    %1440 = vmatpush1.bf16.msra.mxu0 %v1251
    %1441 = vmatprep.subr.bf16.mxu0 0
    %1442 = vmatpush1.bf16.msra.mxu0 %v1250
    %1443 = vmatprep.subr.bf16.mxu0 0
    %1444 = vmatpush1.bf16.msra.mxu0 %v1249
    %1445 = vmatprep.subr.bf16.mxu0 0
    %1446 = vmatpush1.bf16.msra.mxu0 %v1248
    %1447 = vmatprep.subr.bf16.mxu0 0
    %1448 = vmatpush1.bf16.msra.mxu0 %v1247
    %1449 = vmatprep.subr.bf16.mxu0 0
    %1450 = vmatpush1.bf16.msra.mxu0 %v1246
    %1451 = vmatprep.subr.bf16.mxu0 0
    %1452 = vmatpush1.bf16.msra.mxu0 %v1245
    %1453 = vmatprep.subr.bf16.mxu0 0
    %1454 = vmatpush2.bf16.msra.mxu0 0
    %1455 = vmatprep.subr.bf16.mxu0 0
    %1456 = vmatpush2.bf16.msra.mxu0 0
    %1457 = vmatprep.subr.bf16.mxu0 0
    %1458 = vmatpush2.bf16.msra.mxu0 0
    %1459 = vmatprep.subr.bf16.mxu0 0
    %1460 = vmatpush2.bf16.msra.mxu0 0
    %1461 = vmatprep.subr.bf16.mxu0 0
    %1462 = vmatpush2.bf16.msra.mxu0 0
    %1463 = vmatprep.subr.bf16.mxu0 0
    %1464 = vmatpush2.bf16.msra.mxu0 0
    %1465 = vmatprep.subr.bf16.mxu0 0
    %1466 = vmatpush2.bf16.msra.mxu0 0
    %1467 = vmatprep.subr.bf16.mxu0 0
    %1468 = vmatpush2.bf16.msra.mxu0 0
    %1469 = vmatprep.mubr.bf16.mxu0 0
    %1470 = vmatmul.mubr.bf16.gmra.mxu0 %v1436
    %v1471 = vpop.f32.mrf.mxu0
    %v1472 = vadd.f32 0.0, %v1471
    %v1473 = vpop.f32.mrf.mxu0
    %v1474 = vpop.f32.mrf.mxu0
    %v1475 = vpop.f32.mrf.mxu0
    %1476 = vdwg.mxu0
    %v1477 = vadd.f32 %v1435, %v1472
    %v1478 = vtanh.pop %v1477
    %v1479 = vld [vmem:[#allocation2 + $0x28] sm:$0xff]
    %v1480 = vpack.c.bf16 %v1478, %v1478
    %1481 = vmatprep.subr.bf16.mxu0 0
    %1482 = vmatpush1.bf16.msra.mxu0 %v1252
    %1483 = vmatprep.subr.bf16.mxu0 0
    %1484 = vmatpush1.bf16.msra.mxu0 %v1251
    %1485 = vmatprep.subr.bf16.mxu0 0
    %1486 = vmatpush1.bf16.msra.mxu0 %v1250
    %1487 = vmatprep.subr.bf16.mxu0 0
    %1488 = vmatpush1.bf16.msra.mxu0 %v1249
    %1489 = vmatprep.subr.bf16.mxu0 0
    %1490 = vmatpush1.bf16.msra.mxu0 %v1248
    %1491 = vmatprep.subr.bf16.mxu0 0
    %1492 = vmatpush1.bf16.msra.mxu0 %v1247
    %1493 = vmatprep.subr.bf16.mxu0 0
    %1494 = vmatpush1.bf16.msra.mxu0 %v1246
    %1495 = vmatprep.subr.bf16.mxu0 0
    %1496 = vmatpush1.bf16.msra.mxu0 %v1245
    %1497 = vmatprep.subr.bf16.mxu0 0
    %1498 = vmatpush2.bf16.msra.mxu0 0
    %1499 = vmatprep.subr.bf16.mxu0 0
    %1500 = vmatpush2.bf16.msra.mxu0 0
    %1501 = vmatprep.subr.bf16.mxu0 0
    %1502 = vmatpush2.bf16.msra.mxu0 0
    %1503 = vmatprep.subr.bf16.mxu0 0
    %1504 = vmatpush2.bf16.msra.mxu0 0
    %1505 = vmatprep.subr.bf16.mxu0 0
    %1506 = vmatpush2.bf16.msra.mxu0 0
    %1507 = vmatprep.subr.bf16.mxu0 0
    %1508 = vmatpush2.bf16.msra.mxu0 0
    %1509 = vmatprep.subr.bf16.mxu0 0
    %1510 = vmatpush2.bf16.msra.mxu0 0
    %1511 = vmatprep.subr.bf16.mxu0 0
    %1512 = vmatpush2.bf16.msra.mxu0 0
    %1513 = vmatprep.mubr.bf16.mxu0 0
    %1514 = vmatmul.mubr.bf16.gmra.mxu0 %v1480
    %v1515 = vpop.f32.mrf.mxu0
    %v1516 = vadd.f32 0.0, %v1515
    %v1517 = vpop.f32.mrf.mxu0
    %v1518 = vpop.f32.mrf.mxu0
    %v1519 = vpop.f32.mrf.mxu0
    %1520 = vdwg.mxu0
    %v1521 = vadd.f32 %v1479, %v1516
    %v1522 = vtanh.pop %v1521
    %v1523 = vld [vmem:[#allocation2 + $0x30] sm:$0xff]
    %v1524 = vpack.c.bf16 %v1522, %v1522
    %1525 = vmatprep.subr.bf16.mxu0 0
    %1526 = vmatpush1.bf16.msra.mxu0 %v1252
    %1527 = vmatprep.subr.bf16.mxu0 0
    %1528 = vmatpush1.bf16.msra.mxu0 %v1251
    %1529 = vmatprep.subr.bf16.mxu0 0
    %1530 = vmatpush1.bf16.msra.mxu0 %v1250
    %1531 = vmatprep.subr.bf16.mxu0 0
    %1532 = vmatpush1.bf16.msra.mxu0 %v1249
    %1533 = vmatprep.subr.bf16.mxu0 0
    %1534 = vmatpush1.bf16.msra.mxu0 %v1248
    %1535 = vmatprep.subr.bf16.mxu0 0
    %1536 = vmatpush1.bf16.msra.mxu0 %v1247
    %1537 = vmatprep.subr.bf16.mxu0 0
    %1538 = vmatpush1.bf16.msra.mxu0 %v1246
    %1539 = vmatprep.subr.bf16.mxu0 0
    %1540 = vmatpush1.bf16.msra.mxu0 %v1245
    %1541 = vmatprep.subr.bf16.mxu0 0
    %1542 = vmatpush2.bf16.msra.mxu0 0
    %1543 = vmatprep.subr.bf16.mxu0 0
    %1544 = vmatpush2.bf16.msra.mxu0 0
    %1545 = vmatprep.subr.bf16.mxu0 0
    %1546 = vmatpush2.bf16.msra.mxu0 0
    %1547 = vmatprep.subr.bf16.mxu0 0
    %1548 = vmatpush2.bf16.msra.mxu0 0
    %1549 = vmatprep.subr.bf16.mxu0 0
    %1550 = vmatpush2.bf16.msra.mxu0 0
    %1551 = vmatprep.subr.bf16.mxu0 0
    %1552 = vmatpush2.bf16.msra.mxu0 0
    %1553 = vmatprep.subr.bf16.mxu0 0
    %1554 = vmatpush2.bf16.msra.mxu0 0
    %1555 = vmatprep.subr.bf16.mxu0 0
    %1556 = vmatpush2.bf16.msra.mxu0 0
    %1557 = vmatprep.mubr.bf16.mxu0 0
    %1558 = vmatmul.mubr.bf16.gmra.mxu0 %v1524
    %v1559 = vpop.f32.mrf.mxu0
    %v1560 = vadd.f32 0.0, %v1559
    %v1561 = vpop.f32.mrf.mxu0
    %v1562 = vpop.f32.mrf.mxu0
    %v1563 = vpop.f32.mrf.mxu0
    %1564 = vdwg.mxu0
    %v1565 = vadd.f32 %v1523, %v1560
    %v1566 = vtanh.pop %v1565
    %v1567 = vld [vmem:[#allocation2 + $0x38] sm:$0xff]
    %v1568 = vpack.c.bf16 %v1566, %v1566
    %1569 = vmatprep.subr.bf16.mxu0 0
    %1570 = vmatpush1.bf16.msra.mxu0 %v1252
    %1571 = vmatprep.subr.bf16.mxu0 0
    %1572 = vmatpush1.bf16.msra.mxu0 %v1251
    %1573 = vmatprep.subr.bf16.mxu0 0
    %1574 = vmatpush1.bf16.msra.mxu0 %v1250
    %1575 = vmatprep.subr.bf16.mxu0 0
    %1576 = vmatpush1.bf16.msra.mxu0 %v1249
    %1577 = vmatprep.subr.bf16.mxu0 0
    %1578 = vmatpush1.bf16.msra.mxu0 %v1248
    %1579 = vmatprep.subr.bf16.mxu0 0
    %1580 = vmatpush1.bf16.msra.mxu0 %v1247
    %1581 = vmatprep.subr.bf16.mxu0 0
    %1582 = vmatpush1.bf16.msra.mxu0 %v1246
    %1583 = vmatprep.subr.bf16.mxu0 0
    %1584 = vmatpush1.bf16.msra.mxu0 %v1245
    %1585 = vmatprep.subr.bf16.mxu0 0
    %1586 = vmatpush2.bf16.msra.mxu0 0
    %1587 = vmatprep.subr.bf16.mxu0 0
    %1588 = vmatpush2.bf16.msra.mxu0 0
    %1589 = vmatprep.subr.bf16.mxu0 0
    %1590 = vmatpush2.bf16.msra.mxu0 0
    %1591 = vmatprep.subr.bf16.mxu0 0
    %1592 = vmatpush2.bf16.msra.mxu0 0
    %1593 = vmatprep.subr.bf16.mxu0 0
    %1594 = vmatpush2.bf16.msra.mxu0 0
    %1595 = vmatprep.subr.bf16.mxu0 0
    %1596 = vmatpush2.bf16.msra.mxu0 0
    %1597 = vmatprep.subr.bf16.mxu0 0
    %1598 = vmatpush2.bf16.msra.mxu0 0
    %1599 = vmatprep.subr.bf16.mxu0 0
    %1600 = vmatpush2.bf16.msra.mxu0 0
    %1601 = vmatprep.mubr.bf16.mxu0 0
    %1602 = vmatmul.mubr.bf16.gmra.mxu0 %v1568
    %v1603 = vpop.f32.mrf.mxu0
    %v1604 = vadd.f32 0.0, %v1603
    %v1605 = vpop.f32.mrf.mxu0
    %v1606 = vpop.f32.mrf.mxu0
    %v1607 = vpop.f32.mrf.mxu0
    %1608 = vdwg.mxu0
    %v1609 = vadd.f32 %v1567, %v1604
    %v1610 = vtanh.pop %v1609
    %s1611 = smul.u32 4, 16
    %s1612 = smul.u32 %s1611, 1
    %s1613 = sshll.u32 %s1612, 4
    %1614 = dma.done [#allocation5], %s1613
    %v1615 = vpack.c.bf16 %v1610, %v1610
    %v1616 = vld [vmem:[#allocation3] sm:$0xf]
    %v1617 = vld [vmem:[#allocation3 + $0x4] sm:$0xf]
    %v1618 = vld [vmem:[#allocation3 + $0x8] sm:$0xf]
    %v1619 = vld [vmem:[#allocation3 + $0xc] sm:$0xf]
    %v1620 = vld [vmem:[#allocation3 + $0x10] sm:$0xf]
    %v1621 = vld [vmem:[#allocation3 + $0x14] sm:$0xf]
    %v1622 = vld [vmem:[#allocation3 + $0x18] sm:$0xf]
    %v1623 = vld [vmem:[#allocation3 + $0x1c] sm:$0xf]
    %v1624 = vld [vmem:[#allocation3 + $0x20] sm:$0xf]
    %v1625 = vld [vmem:[#allocation3 + $0x24] sm:$0xf]
    %v1626 = vld [vmem:[#allocation3 + $0x28] sm:$0xf]
    %v1627 = vld [vmem:[#allocation3 + $0x2c] sm:$0xf]
    %v1628 = vld [vmem:[#allocation3 + $0x30] sm:$0xf]
    %v1629 = vld [vmem:[#allocation3 + $0x34] sm:$0xf]
    %v1630 = vld [vmem:[#allocation3 + $0x38] sm:$0xf]
    %v1631 = vld [vmem:[#allocation3 + $0x3c] sm:$0xf]
    %v1632 = vld [vmem:[%s2] sm:$0x1]
    %v1634 = vlaneseq
    %v1635 = vshrl.u32 %v1634, 7
    %v1636 = vsub.s32 0, %v1635
    %v1637 = vrot.slane %v1632, %v1636
    %v1655 = vunpack.c.l.b16 %v1616
    %v1656 = vunpack.c.l.b16 %v1617
    %v1657 = vunpack.c.l.b16 %v1618
    %v1658 = vunpack.c.l.b16 %v1619
    %v1659 = vunpack.c.l.b16 %v1620
    %v1660 = vunpack.c.l.b16 %v1621
    %v1661 = vunpack.c.l.b16 %v1622
    %v1662 = vunpack.c.l.b16 %v1623
    %v1663 = vunpack.c.l.b16 %v1624
    %v1664 = vunpack.c.l.b16 %v1625
    %v1665 = vunpack.c.l.b16 %v1626
    %v1666 = vunpack.c.l.b16 %v1627
    %v1667 = vunpack.c.l.b16 %v1628
    %v1668 = vunpack.c.l.b16 %v1629
    %v1669 = vunpack.c.l.b16 %v1630
    %v1670 = vunpack.c.l.b16 %v1631
    %v1671 = vpack.c.b16 %v1656, %v1655
    %v1672 = vpack.c.b16 %v1658, %v1657
    %v1673 = vpack.c.b16 %v1660, %v1659
    %v1674 = vpack.c.b16 %v1662, %v1661
    %v1675 = vpack.c.b16 %v1664, %v1663
    %v1676 = vpack.c.b16 %v1666, %v1665
    %v1677 = vpack.c.b16 %v1668, %v1667
    %v1678 = vpack.c.b16 %v1670, %v1669
    %1687 = vmatprep.subr.bf16.mxu0 0
    %1688 = vmatpush1.bf16.msra.mxu0 %v1678
    %1689 = vmatprep.subr.bf16.mxu0 0
    %1690 = vmatpush1.bf16.msra.mxu0 %v1677
    %1691 = vmatprep.subr.bf16.mxu0 0
    %1692 = vmatpush1.bf16.msra.mxu0 %v1676
    %1693 = vmatprep.subr.bf16.mxu0 0
    %1694 = vmatpush1.bf16.msra.mxu0 %v1675
    %1695 = vmatprep.subr.bf16.mxu0 0
    %1696 = vmatpush1.bf16.msra.mxu0 %v1674
    %1697 = vmatprep.subr.bf16.mxu0 0
    %1698 = vmatpush1.bf16.msra.mxu0 %v1673
    %1699 = vmatprep.subr.bf16.mxu0 0
    %1700 = vmatpush1.bf16.msra.mxu0 %v1672
    %1701 = vmatprep.subr.bf16.mxu0 0
    %1702 = vmatpush1.bf16.msra.mxu0 %v1671
    %1703 = vmatprep.subr.bf16.mxu0 0
    %1704 = vmatpush2.bf16.msra.mxu0 0
    %1705 = vmatprep.subr.bf16.mxu0 0
    %1706 = vmatpush2.bf16.msra.mxu0 0
    %1707 = vmatprep.subr.bf16.mxu0 0
    %1708 = vmatpush2.bf16.msra.mxu0 0
    %1709 = vmatprep.subr.bf16.mxu0 0
    %1710 = vmatpush2.bf16.msra.mxu0 0
    %1711 = vmatprep.subr.bf16.mxu0 0
    %1712 = vmatpush2.bf16.msra.mxu0 0
    %1713 = vmatprep.subr.bf16.mxu0 0
    %1714 = vmatpush2.bf16.msra.mxu0 0
    %1715 = vmatprep.subr.bf16.mxu0 0
    %1716 = vmatpush2.bf16.msra.mxu0 0
    %1717 = vmatprep.subr.bf16.mxu0 0
    %1718 = vmatpush2.bf16.msra.mxu0 0
    %1719 = vmatprep.mubr.bf16.mxu0 0
    %1720 = vmatmul.mubr.bf16.gmra.mxu0 %v1615
    %v1721 = vpop.f32.mrf.mxu0
    %v1722 = vadd.f32 %v1637, %v1721
    %v1723 = vpop.f32.mrf.mxu0
    %v1724 = vpop.f32.mrf.mxu0
    %v1725 = vpop.f32.mrf.mxu0
    %1726 = vdwg.mxu0
    %1727 = vst [vmem:[#allocation11] sm:$0xff] %v1722
    // Predicated region
    $region274: #{tpu_custom_call.1} parent=1 // pred_check
      _
    $region275: #{tpu_custom_call.1} parent=1 // pred_check_branch
      %1729 = sbr.rel (0) target = $region277
    $region276: #{tpu_custom_call.1} parent=1 // pred_region
      %s1731 = ssub.s32 128, 128
      %1732 = vsyncadd [#allocation10], %s1731
      %s1734 = sshll.u32 [#allocation11], 4
      %s1735 = int_to_ptr.vmem [resolvable:$true] %s1734
      %1737 = dma.vmem_to_hbm [thread:$0]  %s1735, 128, %s5, [#allocation10]
    $region277: #{tpu_custom_call.1} parent=1 // pred_fallthru
      _
    // Predicated region
    $region278: #{tpu_custom_call.1} parent=1 // pred_check
      _
    $region279: #{tpu_custom_call.1} parent=1 // pred_check_branch
      %1739 = sbr.rel (0) target = $region281
    $region280: #{tpu_custom_call.1} parent=1 // pred_region
      %1740 = dma.done [#allocation10], 128
    $region281: #{tpu_custom_call.1} parent=1 // pred_fallthru
      _
    %1741 = vsyncpa [#allocation9], 1
    %1742 = vsyncpa [#allocation10], 1
  %1743 = vsyncmov [#allocation4]
  %s1744 = vpop.sfrf %1743
  %p1745 = scmp.eq.s32.totalorder %s1744, 0
  %p1746 = pneg %p1745
  %1748 = shalt.err (%p1746)
  %s1749 = scalar_lea.sflag [#allocation4], 1
  %1750 = vsyncmov %s1749
  %s1751 = vpop.sfrf %1750
  %p1752 = scmp.eq.s32.totalorder %s1751, 0
  %p1753 = pneg %p1752
  %1755 = shalt.err (%p1753)
  %s1756 = scalar_lea.sflag [#allocation4], 2
  %1757 = vsyncmov %s1756
  %s1758 = vpop.sfrf %1757
  %p1759 = scmp.eq.s32.totalorder %s1758, 0
  %p1760 = pneg %p1759
  %1762 = shalt.err (%p1760)
  %s1763 = scalar_lea.sflag [#allocation4], 3
  %1764 = vsyncmov %s1763
  %s1765 = vpop.sfrf %1764
  %p1766 = scmp.eq.s32.totalorder %s1765, 0
  %p1767 = pneg %p1766
  %1769 = shalt.err (%p1767)
  %s1770 = scalar_lea.sflag [#allocation4], 4
  %1771 = vsyncmov %s1770
  %s1772 = vpop.sfrf %1771
  %p1773 = scmp.eq.s32.totalorder %s1772, 0
  %p1774 = pneg %p1773
  %1776 = shalt.err (%p1774)
  %s1777 = scalar_lea.sflag [#allocation4], 5
  %1778 = vsyncmov %s1777
  %s1779 = vpop.sfrf %1778
  %p1780 = scmp.eq.s32.totalorder %s1779, 0
  %p1781 = pneg %p1780
  %1783 = shalt.err (%p1781)
  %s1784 = scalar_lea.sflag [#allocation4], 6
  %1785 = vsyncmov %s1784
  %s1786 = vpop.sfrf %1785
  %p1787 = scmp.eq.s32.totalorder %s1786, 0
  %p1788 = pneg %p1787
  %1790 = shalt.err (%p1788)
  %s1791 = scalar_lea.sflag [#allocation4], 7
  %1792 = vsyncmov %s1791
  %s1793 = vpop.sfrf %1792
  %p1794 = scmp.eq.s32.totalorder %s1793, 0
  %p1795 = pneg %p1794
  %1797 = shalt.err (%p1795)
  %s1798 = scalar_lea.sflag [#allocation4], 8
  %1799 = vsyncmov %s1798
  %s1800 = vpop.sfrf %1799
  %p1801 = scmp.eq.s32.totalorder %s1800, 0
  %p1802 = pneg %p1801
  %1804 = shalt.err (%p1802)
  %s1805 = scalar_lea.sflag [#allocation4], 9
  %1806 = vsyncmov %s1805
  %s1807 = vpop.sfrf %1806
  %p1808 = scmp.eq.s32.totalorder %s1807, 0
  %p1809 = pneg %p1808
  %1811 = shalt.err (%p1809)
  %s1812 = scalar_lea.sflag [#allocation4], 10
  %1813 = vsyncmov %s1812
  %s1814 = vpop.sfrf %1813
  %p1815 = scmp.eq.s32.totalorder %s1814, 0
  %p1816 = pneg %p1815
  %1818 = shalt.err (%p1816)
  %s1819 = scalar_lea.sflag [#allocation4], 11
  %1820 = vsyncmov %s1819
  %s1821 = vpop.sfrf %1820
  %p1822 = scmp.eq.s32.totalorder %s1821, 0
  %p1823 = pneg %p1822
  %1825 = shalt.err (%p1823)
  %s1826 = scalar_lea.sflag [#allocation4], 12
  %1827 = vsyncmov %s1826
  %s1828 = vpop.sfrf %1827
  %p1829 = scmp.eq.s32.totalorder %s1828, 0
  %p1830 = pneg %p1829
  %1832 = shalt.err (%p1830)
  %s1833 = scalar_lea.sflag [#allocation4], 13
  %1834 = vsyncmov %s1833
  %s1835 = vpop.sfrf %1834
  %p1836 = scmp.eq.s32.totalorder %s1835, 0
  %p1837 = pneg %p1836
  %1839 = shalt.err (%p1837)
  %s1840 = scalar_lea.sflag [#allocation4], 14
  %1841 = vsyncmov %s1840
  %s1842 = vpop.sfrf %1841
  %p1843 = scmp.eq.s32.totalorder %s1842, 0
  %p1844 = pneg %p1843
  %1846 = shalt.err (%p1844)
  %s1847 = scalar_lea.sflag [#allocation4], 15
  %1848 = vsyncmov %s1847
  %s1849 = vpop.sfrf %1848
  %p1850 = scmp.eq.s32.totalorder %s1849, 0
  %p1851 = pneg %p1850
  %1853 = shalt.err (%p1851)
  %s1854 = scalar_lea.sflag [#allocation4], 16
  %1855 = vsyncmov %s1854
  %s1856 = vpop.sfrf %1855
  %p1857 = scmp.eq.s32.totalorder %s1856, 0
  %p1858 = pneg %p1857
  %1860 = shalt.err (%p1858)
  %s1861 = scalar_lea.sflag [#allocation4], 17
  %1862 = vsyncmov %s1861
  %s1863 = vpop.sfrf %1862
  %p1864 = scmp.eq.s32.totalorder %s1863, 0
  %p1865 = pneg %p1864
  %1867 = shalt.err (%p1865)
  %s1868 = scalar_lea.sflag [#allocation4], 18
  %1869 = vsyncmov %s1868
  %s1870 = vpop.sfrf %1869
  %p1871 = scmp.eq.s32.totalorder %s1870, 0
  %p1872 = pneg %p1871
  %1874 = shalt.err (%p1872)
  %s1875 = scalar_lea.sflag [#allocation4], 19
  %1876 = vsyncmov %s1875
  %s1877 = vpop.sfrf %1876
  %p1878 = scmp.eq.s32.totalorder %s1877, 0
  %p1879 = pneg %p1878
  %1881 = shalt.err (%p1879)
  %s1882 = scalar_lea.sflag [#allocation4], 20
  %1883 = vsyncmov %s1882
  %s1884 = vpop.sfrf %1883
  %p1885 = scmp.eq.s32.totalorder %s1884, 0
  %p1886 = pneg %p1885
  %1888 = shalt.err (%p1886)
  %s1889 = scalar_lea.sflag [#allocation4], 21
  %1890 = vsyncmov %s1889
  %s1891 = vpop.sfrf %1890
  %p1892 = scmp.eq.s32.totalorder %s1891, 0
  %p1893 = pneg %p1892
  %1895 = shalt.err (%p1893)
  %s1896 = scalar_lea.sflag [#allocation4], 22
  %1897 = vsyncmov %s1896
  %s1898 = vpop.sfrf %1897
  %p1899 = scmp.eq.s32.totalorder %s1898, 0
  %p1900 = pneg %p1899
  %1902 = shalt.err (%p1900)
  %s1903 = scalar_lea.sflag [#allocation4], 23
  %1904 = vsyncmov %s1903
  %s1905 = vpop.sfrf %1904
  %p1906 = scmp.eq.s32.totalorder %s1905, 0
  %p1907 = pneg %p1906
  %1909 = shalt.err (%p1907)
  %s1910 = scalar_lea.sflag [#allocation4], 24
  %1911 = vsyncmov %s1910
  %s1912 = vpop.sfrf %1911
  %p1913 = scmp.eq.s32.totalorder %s1912, 0
  %p1914 = pneg %p1913
  %1916 = shalt.err (%p1914)
  %s1917 = scalar_lea.sflag [#allocation4], 25
  %1918 = vsyncmov %s1917
  %s1919 = vpop.sfrf %1918
  %p1920 = scmp.eq.s32.totalorder %s1919, 0
  %p1921 = pneg %p1920
  %1923 = shalt.err (%p1921)
  %s1924 = scalar_lea.sflag [#allocation4], 26
  %1925 = vsyncmov %s1924
  %s1926 = vpop.sfrf %1925
  %p1927 = scmp.eq.s32.totalorder %s1926, 0
  %p1928 = pneg %p1927
  %1930 = shalt.err (%p1928)
  %s1931 = scalar_lea.sflag [#allocation4], 27
  %1932 = vsyncmov %s1931
  %s1933 = vpop.sfrf %1932
  %p1934 = scmp.eq.s32.totalorder %s1933, 0
  %p1935 = pneg %p1934
  %1937 = shalt.err (%p1935)
  %s1938 = scalar_lea.sflag [#allocation4], 28
  %1939 = vsyncmov %s1938
  %s1940 = vpop.sfrf %1939
  %p1941 = scmp.eq.s32.totalorder %s1940, 0
  %p1942 = pneg %p1941
  %1944 = shalt.err (%p1942)
  %s1945 = scalar_lea.sflag [#allocation4], 29
  %1946 = vsyncmov %s1945
  %s1947 = vpop.sfrf %1946
  %p1948 = scmp.eq.s32.totalorder %s1947, 0
  %p1949 = pneg %p1948
  %1951 = shalt.err (%p1949)
  %s1952 = scalar_lea.sflag [#allocation4], 30
  %1953 = vsyncmov %s1952
  %s1954 = vpop.sfrf %1953
  %p1955 = scmp.eq.s32.totalorder %s1954, 0
  %p1956 = pneg %p1955
  %1958 = shalt.err (%p1956)
  %s1959 = scalar_lea.sflag [#allocation4], 31
  %1960 = vsyncmov %s1959
  %s1961 = vpop.sfrf %1960
  %p1962 = scmp.eq.s32.totalorder %s1961, 0
  %p1963 = pneg %p1962
  %1965 = shalt.err (%p1963)
  %s1966 = scalar_lea.sflag [#allocation4], 32
  %1967 = vsyncmov %s1966
  %s1968 = vpop.sfrf %1967
  %p1969 = scmp.eq.s32.totalorder %s1968, 0
  %p1970 = pneg %p1969
  %1972 = shalt.err (%p1970)
  %s1973 = scalar_lea.sflag [#allocation4], 33
  %1974 = vsyncmov %s1973
  %s1975 = vpop.sfrf %1974
  %p1976 = scmp.eq.s32.totalorder %s1975, 0
  %p1977 = pneg %p1976
  %1979 = shalt.err (%p1977)
  %s1980 = scalar_lea.sflag [#allocation4], 34
  %1981 = vsyncmov %s1980
  %s1982 = vpop.sfrf %1981
  %p1983 = scmp.eq.s32.totalorder %s1982, 0
  %p1984 = pneg %p1983
  %1986 = shalt.err (%p1984)
  %s1987 = scalar_lea.sflag [#allocation4], 35
  %1988 = vsyncmov %s1987
  %s1989 = vpop.sfrf %1988
  %p1990 = scmp.eq.s32.totalorder %s1989, 0
  %p1991 = pneg %p1990
  %1993 = shalt.err (%p1991)
  %s1994 = scalar_lea.sflag [#allocation4], 36
  %1995 = vsyncmov %s1994
  %s1996 = vpop.sfrf %1995
  %p1997 = scmp.eq.s32.totalorder %s1996, 0
  %p1998 = pneg %p1997
  %2000 = shalt.err (%p1998)
  %s2001 = scalar_lea.sflag [#allocation4], 37
  %2002 = vsyncmov %s2001
  %s2003 = vpop.sfrf %2002
  %p2004 = scmp.eq.s32.totalorder %s2003, 0
  %p2005 = pneg %p2004
  %2007 = shalt.err (%p2005)
  %s2008 = scalar_lea.sflag [#allocation4], 38
  %2009 = vsyncmov %s2008
  %s2010 = vpop.sfrf %2009
  %p2011 = scmp.eq.s32.totalorder %s2010, 0
  %p2012 = pneg %p2011
  %2014 = shalt.err (%p2012)
  %s2015 = scalar_lea.sflag [#allocation4], 39
  %2016 = vsyncmov %s2015
  %s2017 = vpop.sfrf %2016
  %p2018 = scmp.eq.s32.totalorder %s2017, 0
  %p2019 = pneg %p2018
  %2021 = shalt.err (%p2019)
  %s2022 = scalar_lea.sflag [#allocation4], 40
  %2023 = vsyncmov %s2022
  %s2024 = vpop.sfrf %2023
  %p2025 = scmp.eq.s32.totalorder %s2024, 0
  %p2026 = pneg %p2025
  %2028 = shalt.err (%p2026)
  %s2029 = scalar_lea.sflag [#allocation4], 41
  %2030 = vsyncmov %s2029
  %s2031 = vpop.sfrf %2030
  %p2032 = scmp.eq.s32.totalorder %s2031, 0
  %p2033 = pneg %p2032
  %2035 = shalt.err (%p2033)
  %s2036 = scalar_lea.sflag [#allocation4], 42
  %2037 = vsyncmov %s2036
  %s2038 = vpop.sfrf %2037
  %p2039 = scmp.eq.s32.totalorder %s2038, 0
  %p2040 = pneg %p2039
  %2042 = shalt.err (%p2040)
  %s2043 = scalar_lea.sflag [#allocation4], 43
  %2044 = vsyncmov %s2043
  %s2045 = vpop.sfrf %2044
  %p2046 = scmp.eq.s32.totalorder %s2045, 0
  %p2047 = pneg %p2046
  %2049 = shalt.err (%p2047)
  %s2050 = scalar_lea.sflag [#allocation4], 44
  %2051 = vsyncmov %s2050
  %s2052 = vpop.sfrf %2051
  %p2053 = scmp.eq.s32.totalorder %s2052, 0
  %p2054 = pneg %p2053
  %2056 = shalt.err (%p2054)
  %s2057 = scalar_lea.sflag [#allocation4], 45
  %2058 = vsyncmov %s2057
  %s2059 = vpop.sfrf %2058
  %p2060 = scmp.eq.s32.totalorder %s2059, 0
  %p2061 = pneg %p2060
  %2063 = shalt.err (%p2061)
  %s2064 = scalar_lea.sflag [#allocation4], 46
  %2065 = vsyncmov %s2064
  %s2066 = vpop.sfrf %2065
  %p2067 = scmp.eq.s32.totalorder %s2066, 0
  %p2068 = pneg %p2067
  %2070 = shalt.err (%p2068)
  %s2071 = scalar_lea.sflag [#allocation4], 47
  %2072 = vsyncmov %s2071
  %s2073 = vpop.sfrf %2072
  %p2074 = scmp.eq.s32.totalorder %s2073, 0
  %p2075 = pneg %p2074
  %2077 = shalt.err (%p2075)
  %s2078 = scalar_lea.sflag [#allocation4], 48
  %2079 = vsyncmov %s2078
  %s2080 = vpop.sfrf %2079
  %p2081 = scmp.eq.s32.totalorder %s2080, 0
  %p2082 = pneg %p2081
  %2084 = shalt.err (%p2082)
  %s2085 = scalar_lea.sflag [#allocation4], 49
  %2086 = vsyncmov %s2085
  %s2087 = vpop.sfrf %2086
  %p2088 = scmp.eq.s32.totalorder %s2087, 0
  %p2089 = pneg %p2088
  %2091 = shalt.err (%p2089)
  %s2092 = scalar_lea.sflag [#allocation4], 50
  %2093 = vsyncmov %s2092
  %s2094 = vpop.sfrf %2093
  %p2095 = scmp.eq.s32.totalorder %s2094, 0
  %p2096 = pneg %p2095
  %2098 = shalt.err (%p2096)
  %s2099 = scalar_lea.sflag [#allocation4], 51
  %2100 = vsyncmov %s2099
  %s2101 = vpop.sfrf %2100
  %p2102 = scmp.eq.s32.totalorder %s2101, 0
  %p2103 = pneg %p2102
  %2105 = shalt.err (%p2103)
  %s2106 = scalar_lea.sflag [#allocation4], 52
  %2107 = vsyncmov %s2106
  %s2108 = vpop.sfrf %2107
  %p2109 = scmp.eq.s32.totalorder %s2108, 0
  %p2110 = pneg %p2109
  %2112 = shalt.err (%p2110)
  %s2113 = scalar_lea.sflag [#allocation4], 53
  %2114 = vsyncmov %s2113
  %s2115 = vpop.sfrf %2114
  %p2116 = scmp.eq.s32.totalorder %s2115, 0
  %p2117 = pneg %p2116
  %2119 = shalt.err (%p2117)
  %s2120 = scalar_lea.sflag [#allocation4], 54
  %2121 = vsyncmov %s2120
  %s2122 = vpop.sfrf %2121
  %p2123 = scmp.eq.s32.totalorder %s2122, 0
  %p2124 = pneg %p2123
  %2126 = shalt.err (%p2124)
  %s2127 = scalar_lea.sflag [#allocation4], 55
  %2128 = vsyncmov %s2127
  %s2129 = vpop.sfrf %2128
  %p2130 = scmp.eq.s32.totalorder %s2129, 0
  %p2131 = pneg %p2130
  %2133 = shalt.err (%p2131)
  %s2134 = scalar_lea.sflag [#allocation4], 56
  %2135 = vsyncmov %s2134
  %s2136 = vpop.sfrf %2135
  %p2137 = scmp.eq.s32.totalorder %s2136, 0
  %p2138 = pneg %p2137
  %2140 = shalt.err (%p2138)
  %s2141 = scalar_lea.sflag [#allocation4], 57
  %2142 = vsyncmov %s2141
  %s2143 = vpop.sfrf %2142
  %p2144 = scmp.eq.s32.totalorder %s2143, 0
  %p2145 = pneg %p2144
  %2147 = shalt.err (%p2145)
  %s2148 = scalar_lea.sflag [#allocation4], 58
  %2149 = vsyncmov %s2148
  %s2150 = vpop.sfrf %2149
  %p2151 = scmp.eq.s32.totalorder %s2150, 0
  %p2152 = pneg %p2151
  %2154 = shalt.err (%p2152)
  %s2155 = scalar_lea.sflag [#allocation4], 59
  %2156 = vsyncmov %s2155
  %s2157 = vpop.sfrf %2156
  %p2158 = scmp.eq.s32.totalorder %s2157, 0
  %p2159 = pneg %p2158
  %2161 = shalt.err (%p2159)
  %s2162 = scalar_lea.sflag [#allocation4], 60
  %2163 = vsyncmov %s2162
  %s2164 = vpop.sfrf %2163
  %p2165 = scmp.eq.s32.totalorder %s2164, 0
  %p2166 = pneg %p2165
  %2168 = shalt.err (%p2166)
  %s2169 = scalar_lea.sflag [#allocation4], 61
  %2170 = vsyncmov %s2169
  %s2171 = vpop.sfrf %2170
  %p2172 = scmp.eq.s32.totalorder %s2171, 0
  %p2173 = pneg %p2172
  %2175 = shalt.err (%p2173)
  %s2176 = scalar_lea.sflag [#allocation4], 62
  %2177 = vsyncmov %s2176
  %s2178 = vpop.sfrf %2177
  %p2179 = scmp.eq.s32.totalorder %s2178, 0
  %p2180 = pneg %p2179
  %2182 = shalt.err (%p2180)
  %s2183 = scalar_lea.sflag [#allocation4], 63
  %2184 = vsyncmov %s2183
  %s2185 = vpop.sfrf %2184
  %p2186 = scmp.eq.s32.totalorder %s2185, 0
  %p2187 = pneg %p2186
  %2189 = shalt.err (%p2187)
  %2190 = vsyncmov [#allocation5]
  %s2191 = vpop.sfrf %2190
  %p2192 = scmp.eq.s32.totalorder %s2191, 0
  %p2193 = pneg %p2192
  %2195 = shalt.err (%p2193)

</llo_original>
